<compile_context>
chip_gen: v7x
topology: tpu7x:2x2x1
jax: 0.10.0
libtpu: 0.0.40
codegen_flags: <defaults>
</compile_context>

<pallas_src>
import functools

import jax
import jax.numpy as jnp
from jax import lax
from jax.experimental import pallas as pl


# ----------------------------------------------------------------------------
# Fused forward kernel
# ----------------------------------------------------------------------------
def _layernorm(h, g, b):
    mean = jnp.mean(h, axis=-1, keepdims=True)
    var = jnp.mean((h - mean) ** 2, axis=-1, keepdims=True)
    return (h - mean) * lax.rsqrt(var + 1e-5) * g + b


def _fused_forward_kernel(
        # inputs
        text_ref, static_ref, hist_ref,
        # static_fc
        sw1_ref, sb1_ref, sw2_ref, sb2_ref, sg_ref, sbt_ref,
        # historical_fc
        hw1_ref, hb1_ref, hw2_ref, hb2_ref, hg_ref, hbt_ref,
        # fusion_fc (first Linear split over [text | static_emb | hist_emb])
        fw1t_ref, fw1s_ref, fw1h_ref, fb1_ref, fw2_ref, fb2_ref, fg_ref, fbt_ref,
        # LSTM layers 1/2 (weights pre-transposed to (in,4H)/(H,4H); b_ih+b_hh)
        wih1_ref, whh1_ref, lb1_ref, wih2_ref, whh2_ref, lb2_ref,
        # MultiheadAttention in/out projections
        wqkv_ref, bqkv_ref, wo_ref, bo_ref,
        # output_fc head (ow2 passed as (1, H//2) row; ob2 as (1,1))
        ow1_ref, ob1_ref, ow2_ref, ob2_ref,
        # output
        o_ref,
        *, forecast_steps, num_heads):
    f32 = jnp.float32
    B = text_ref.shape[0]
    H = sw1_ref.shape[1]
    T = forecast_steps
    dh = H // num_heads
    scale = 1.0 / float(dh) ** 0.5

    def mlp_tail(h, w2_ref, b2_ref, g_ref, bt_ref):
        h = jnp.dot(h, w2_ref[...], preferred_element_type=f32) + b2_ref[...]
        return jnp.maximum(_layernorm(h, g_ref[...], bt_ref[...]), 0.0)

    # ---- static_fc / historical_fc -----------------------------------------
    s_h = jnp.maximum(
        jnp.dot(static_ref[...], sw1_ref[...], preferred_element_type=f32)
        + sb1_ref[...], 0.0)
    static_emb = mlp_tail(s_h, sw2_ref, sb2_ref, sg_ref, sbt_ref)

    h_h = jnp.maximum(
        jnp.dot(hist_ref[...], hw1_ref[...], preferred_element_type=f32)
        + hb1_ref[...], 0.0)
    hist_emb = mlp_tail(h_h, hw2_ref, hb2_ref, hg_ref, hbt_ref)

    # ---- fusion_fc: concat([text, static_emb, hist_emb]) @ W1  ==  split sum
    f_h = (jnp.dot(text_ref[...], fw1t_ref[...], preferred_element_type=f32)
           + jnp.dot(static_emb, fw1s_ref[...], preferred_element_type=f32)
           + jnp.dot(hist_emb, fw1h_ref[...], preferred_element_type=f32)
           + fb1_ref[...])
    f_h = jnp.maximum(f_h, 0.0)
    fused = mlp_tail(f_h, fw2_ref, fb2_ref, fg_ref, fbt_ref)        # (B, H)

    # ---- 2-layer LSTM over T identical inputs ------------------------------
    # Layer-1 input projection is loop-invariant (input == fused at every t).
    xproj1 = jnp.dot(fused, wih1_ref[...], preferred_element_type=f32) + lb1_ref[...]
    whh1 = whh1_ref[...]
    wih2 = wih2_ref[...]
    whh2 = whh2_ref[...]
    lb2 = lb2_ref[...]

    # Gate activation on the whole (B,4H) vreg: tanh on the 'g' lanes, sigmoid
    # elsewhere (PyTorch gate order i, f, g, o).
    lane4h = lax.broadcasted_iota(jnp.int32, (B, 4 * H), 1)
    is_g_lane = (lane4h >= 2 * H) & (lane4h < 3 * H)

    def cell(gates, c):
        a = jnp.where(is_g_lane, jnp.tanh(gates), jax.nn.sigmoid(gates))
        i = a[:, 0:H]
        f = a[:, H:2 * H]
        g = a[:, 2 * H:3 * H]
        o = a[:, 3 * H:4 * H]
        c_new = f * c + i * g
        return o * jnp.tanh(c_new), c_new

    zeros = jnp.zeros_like(fused)
    h1, c1, h2, c2 = zeros, zeros, zeros, zeros
    outs = []
    for _ in range(T):                                   # unrolled, state in vregs
        g1 = xproj1 + jnp.dot(h1, whh1, preferred_element_type=f32)
        h1, c1 = cell(g1, c1)
        g2 = (jnp.dot(h1, wih2, preferred_element_type=f32) + lb2
              + jnp.dot(h2, whh2, preferred_element_type=f32))
        h2, c2 = cell(g2, c2)
        outs.append(h2)
    seq = jnp.stack(outs, axis=1)                        # (B, T, H)

    # ---- Multihead self-attention (4 heads), batched over B ----------------
    x2 = seq.reshape(B * T, H)
    qkv = jnp.dot(x2, wqkv_ref[...], preferred_element_type=f32) + bqkv_ref[...]
    q = qkv[:, 0:H].reshape(B, T, H)
    k = qkv[:, H:2 * H].reshape(B, T, H)
    v = qkv[:, 2 * H:3 * H].reshape(B, T, H)

    ctx_heads = []
    for hd in range(num_heads):
        lo, hi = hd * dh, (hd + 1) * dh
        qh = q[:, :, lo:hi] * scale                      # (B, T, dh)
        kh = k[:, :, lo:hi]
        vh = v[:, :, lo:hi]
        s = jnp.einsum('bqd,bkd->bqk', qh, kh, preferred_element_type=f32)
        s = s - jnp.max(s, axis=-1, keepdims=True)
        p = jnp.exp(s)
        p = p * pl.reciprocal(jnp.sum(p, axis=-1, keepdims=True), approx=True)
        ctx_heads.append(
            jnp.einsum('bqk,bkd->bqd', p, vh, preferred_element_type=f32))
    ctx = jnp.concatenate(ctx_heads, axis=-1).reshape(B * T, H)

    attn = jnp.dot(ctx, wo_ref[...], preferred_element_type=f32) + bo_ref[...]

    # ---- output_fc: Linear -> ReLU -> Linear(., 1), lane-dense (B, T) ------
    y = jnp.maximum(
        jnp.dot(attn, ow1_ref[...], preferred_element_type=f32) + ob1_ref[...],
        0.0)                                             # (B*T, H//2)
    hh = ow1_ref.shape[1]
    yr = y.reshape(B, T, hh)
    pred = jnp.sum(yr * ow2_ref[...][None], axis=-1) + ob2_ref[...]   # (B, T)
    o_ref[...] = pred


# ----------------------------------------------------------------------------
# Wrapper: one fused pallas_call, everything resident in VMEM
# ----------------------------------------------------------------------------
def forward(text_embedding, static_features, historical_data, params,
            forecast_steps, num_heads=4):
    # TODO(synk): frozen SentenceTransformer('all-MiniLM-L6-v2') is not
    # reimplemented; `text_embedding` stands in for its 384-d encoder output.
    B = text_embedding.shape[0]
    text_dim = text_embedding.shape[1]
    H = params["static_fc"][0].shape[1]

    sw1, sb1, sw2, sb2, sg, sbt = params["static_fc"]
    hw1, hb1, hw2, hb2, hg, hbt = params["historical_fc"]
    fw1, fb1, fw2, fb2, fg, fbt = params["fusion_fc"]
    fw1t = fw1[:text_dim]
    fw1s = fw1[text_dim:text_dim + H]
    fw1h = fw1[text_dim + H:]
    wih1, whh1, lb1, wih2, whh2, lb2 = params["lstm"]
    wqkv, bqkv, wo, bo = params["attn"]
    ow1, ob1, ow2, ob2 = params["out_fc"]

    row = lambda v: v.reshape(1, -1)

    args = (
        text_embedding, static_features, historical_data,
        sw1, row(sb1), sw2, row(sb2), row(sg), row(sbt),
        hw1, row(hb1), hw2, row(hb2), row(hg), row(hbt),
        fw1t, fw1s, fw1h, row(fb1), fw2, row(fb2), row(fg), row(fbt),
        wih1, whh1, row(lb1), wih2, whh2, row(lb2),
        wqkv, row(bqkv), wo, row(bo),
        ow1, row(ob1), row(ow2), row(ob2),
    )

    kernel = functools.partial(_fused_forward_kernel,
                               forecast_steps=forecast_steps,
                               num_heads=num_heads)
    return pl.pallas_call(
        kernel,
        out_shape=jax.ShapeDtypeStruct((B, forecast_steps), jnp.float32),
    )(*args)


# ----------------------------------------------------------------------------
# Parameter construction (deterministic, synthetic)
# ----------------------------------------------------------------------------
def _init_linear(key, din, dout, scale=0.1):
    kw, kb = jax.random.split(key)
    w = jax.random.normal(kw, (din, dout), jnp.float32) * scale
    b = jax.random.normal(kb, (dout,), jnp.float32) * scale
    return w, b


def _init_mlp_block(key, din, hidden):
    k1, k2 = jax.random.split(key)
    w1, b1 = _init_linear(k1, din, hidden)
    w2, b2 = _init_linear(k2, hidden, hidden)
    gamma = jnp.ones((hidden,), jnp.float32)
    beta = jnp.zeros((hidden,), jnp.float32)
    return (w1, b1, w2, b2, gamma, beta)


def init_params(key, static_dim, hist_dim, hidden):
    keys = jax.random.split(key, 12)
    params = {
        "static_fc": _init_mlp_block(keys[0], static_dim, hidden),
        "historical_fc": _init_mlp_block(keys[1], hist_dim, hidden),
        "fusion_fc": _init_mlp_block(keys[2], 384 + 2 * hidden, hidden),
    }
    # LSTM (2 layers). Weights stored pre-transposed: (in, 4H) and (H, 4H);
    # bias = b_ih + b_hh. Gate order i, f, g, o.
    wih1, bih1 = _init_linear(keys[3], hidden, 4 * hidden)
    whh1, bhh1 = _init_linear(keys[4], hidden, 4 * hidden)
    wih2, bih2 = _init_linear(keys[5], hidden, 4 * hidden)
    whh2, bhh2 = _init_linear(keys[6], hidden, 4 * hidden)
    params["lstm"] = (wih1, whh1, bih1 + bhh1, wih2, whh2, bih2 + bhh2)
    # MultiheadAttention: in_proj (H, 3H) pre-transposed, out_proj (H, H).
    wqkv, bqkv = _init_linear(keys[7], hidden, 3 * hidden)
    wo, bo = _init_linear(keys[8], hidden, hidden)
    params["attn"] = (wqkv, bqkv, wo, bo)
    # output_fc: Linear(H, H//2) -> ReLU -> Linear(H//2, 1)
    w1, b1 = _init_linear(keys[9], hidden, hidden // 2)
    w2, b2 = _init_linear(keys[10], hidden // 2, 1)
    params["out_fc"] = (w1, b1, w2, b2)
    return params


# ----------------------------------------------------------------------------
if __name__ == "__main__":
    B = 2
    STATIC_DIM = 6
    HIST_DIM = 10
    HIDDEN = 32
    FORECAST_STEPS = 8

    key = jax.random.PRNGKey(0)
    k_par, k_txt, k_sta, k_his = jax.random.split(key, 4)

    params = init_params(k_par, STATIC_DIM, HIST_DIM, HIDDEN)

    text_embedding = jax.random.normal(k_txt, (B, 384), jnp.float32)
    static_features = jax.random.normal(k_sta, (B, STATIC_DIM), jnp.float32)
    historical_data = jax.random.normal(k_his, (B, HIST_DIM), jnp.float32)

    preds = forward(text_embedding, static_features, historical_data, params,
                    FORECAST_STEPS)
    preds = jax.block_until_ready(preds)
    assert preds.shape == (B, FORECAST_STEPS), preds.shape
    assert bool(jnp.all(jnp.isfinite(preds)))
    print("KERNEL_OK")
</pallas_src>

<mosaic_0001>
module attributes {stable_mosaic.version = 11 : i64} {
  func.func @_fused_forward_kernel(%arg0: memref<2x384xf32, #tpu.memory_space<vmem>>, %arg1: memref<2x6xf32, #tpu.memory_space<vmem>>, %arg2: memref<2x10xf32, #tpu.memory_space<vmem>>, %arg3: memref<6x32xf32, #tpu.memory_space<vmem>>, %arg4: memref<1x32xf32, #tpu.memory_space<vmem>>, %arg5: memref<32x32xf32, #tpu.memory_space<vmem>>, %arg6: memref<1x32xf32, #tpu.memory_space<vmem>>, %arg7: memref<1x32xf32, #tpu.memory_space<vmem>>, %arg8: memref<1x32xf32, #tpu.memory_space<vmem>>, %arg9: memref<10x32xf32, #tpu.memory_space<vmem>>, %arg10: memref<1x32xf32, #tpu.memory_space<vmem>>, %arg11: memref<32x32xf32, #tpu.memory_space<vmem>>, %arg12: memref<1x32xf32, #tpu.memory_space<vmem>>, %arg13: memref<1x32xf32, #tpu.memory_space<vmem>>, %arg14: memref<1x32xf32, #tpu.memory_space<vmem>>, %arg15: memref<384x32xf32, #tpu.memory_space<vmem>>, %arg16: memref<32x32xf32, #tpu.memory_space<vmem>>, %arg17: memref<32x32xf32, #tpu.memory_space<vmem>>, %arg18: memref<1x32xf32, #tpu.memory_space<vmem>>, %arg19: memref<32x32xf32, #tpu.memory_space<vmem>>, %arg20: memref<1x32xf32, #tpu.memory_space<vmem>>, %arg21: memref<1x32xf32, #tpu.memory_space<vmem>>, %arg22: memref<1x32xf32, #tpu.memory_space<vmem>>, %arg23: memref<32x128xf32, #tpu.memory_space<vmem>>, %arg24: memref<32x128xf32, #tpu.memory_space<vmem>>, %arg25: memref<1x128xf32, #tpu.memory_space<vmem>>, %arg26: memref<32x128xf32, #tpu.memory_space<vmem>>, %arg27: memref<32x128xf32, #tpu.memory_space<vmem>>, %arg28: memref<1x128xf32, #tpu.memory_space<vmem>>, %arg29: memref<32x96xf32, #tpu.memory_space<vmem>>, %arg30: memref<1x96xf32, #tpu.memory_space<vmem>>, %arg31: memref<32x32xf32, #tpu.memory_space<vmem>>, %arg32: memref<1x32xf32, #tpu.memory_space<vmem>>, %arg33: memref<32x16xf32, #tpu.memory_space<vmem>>, %arg34: memref<1x16xf32, #tpu.memory_space<vmem>>, %arg35: memref<1x16xf32, #tpu.memory_space<vmem>>, %arg36: memref<1x1xf32, #tpu.memory_space<vmem>>, %arg37: memref<2x8xf32, #tpu.memory_space<vmem>>) attributes {dimension_semantics = [], scalar_prefetch = 0 : i64, scratch_operands = 0 : i64, tpu.core_type = #tpu.core_type<tc>} {
    %c0 = arith.constant 0 : index
    %c0_0 = arith.constant 0 : index
    %0 = vector.load %arg1[%c0, %c0_0] : memref<2x6xf32, #tpu.memory_space<vmem>>, vector<2x6xf32>
    %c0_1 = arith.constant 0 : index
    %c0_2 = arith.constant 0 : index
    %1 = vector.load %arg3[%c0_1, %c0_2] : memref<6x32xf32, #tpu.memory_space<vmem>>, vector<6x32xf32>
    %cst = arith.constant dense<0.000000e+00> : vector<2x32xf32>
    %2 = tpu.matmul %0, %1, %cst {dimension_numbers = #tpu.dot_dimension_numbers<[1], [0], [0], [1], [0, 0, 1, 1], [], []>} : vector<2x6xf32>, vector<6x32xf32>, vector<2x32xf32> -> vector<2x32xf32>
    %c0_3 = arith.constant 0 : index
    %c0_4 = arith.constant 0 : index
    %3 = vector.load %arg4[%c0_3, %c0_4] : memref<1x32xf32, #tpu.memory_space<vmem>>, vector<1x32xf32>
    %4 = vector.broadcast %3 : vector<1x32xf32> to vector<2x32xf32>
    %5 = arith.addf %2, %4 : vector<2x32xf32>
    %cst_5 = arith.constant 0.000000e+00 : f32
    %6 = vector.broadcast %cst_5 : f32 to vector<2x32xf32>
    %7 = arith.maximumf %5, %6 : vector<2x32xf32>
    %c0_6 = arith.constant 0 : index
    %c0_7 = arith.constant 0 : index
    %8 = vector.load %arg5[%c0_6, %c0_7] : memref<32x32xf32, #tpu.memory_space<vmem>>, vector<32x32xf32>
    %cst_8 = arith.constant dense<0.000000e+00> : vector<2x32xf32>
    %9 = tpu.matmul %7, %8, %cst_8 {dimension_numbers = #tpu.dot_dimension_numbers<[1], [0], [0], [1], [0, 0, 1, 1], [], []>} : vector<2x32xf32>, vector<32x32xf32>, vector<2x32xf32> -> vector<2x32xf32>
    %c0_9 = arith.constant 0 : index
    %c0_10 = arith.constant 0 : index
    %10 = vector.load %arg6[%c0_9, %c0_10] : memref<1x32xf32, #tpu.memory_space<vmem>>, vector<1x32xf32>
    %11 = vector.broadcast %10 : vector<1x32xf32> to vector<2x32xf32>
    %12 = arith.addf %9, %11 : vector<2x32xf32>
    %c0_11 = arith.constant 0 : index
    %c0_12 = arith.constant 0 : index
    %13 = vector.load %arg7[%c0_11, %c0_12] : memref<1x32xf32, #tpu.memory_space<vmem>>, vector<1x32xf32>
    %c0_13 = arith.constant 0 : index
    %c0_14 = arith.constant 0 : index
    %14 = vector.load %arg8[%c0_13, %c0_14] : memref<1x32xf32, #tpu.memory_space<vmem>>, vector<1x32xf32>
    %cst_15 = arith.constant dense<0.000000e+00> : vector<2xf32>
    %15 = vector.multi_reduction <add>, %12, %cst_15 [1] : vector<2x32xf32> to vector<2xf32>
    %16 = vector.shape_cast %15 : vector<2xf32> to vector<2x1xf32>
    %cst_16 = arith.constant 3.200000e+01 : f32
    %17 = vector.broadcast %cst_16 : f32 to vector<2x1xf32>
    %18 = arith.divf %16, %17 : vector<2x1xf32>
    %19 = vector.broadcast %18 : vector<2x1xf32> to vector<2x32xf32>
    %20 = arith.subf %12, %19 : vector<2x32xf32>
    %21 = arith.mulf %20, %20 : vector<2x32xf32>
    %cst_17 = arith.constant dense<0.000000e+00> : vector<2xf32>
    %22 = vector.multi_reduction <add>, %21, %cst_17 [1] : vector<2x32xf32> to vector<2xf32>
    %23 = vector.shape_cast %22 : vector<2xf32> to vector<2x1xf32>
    %cst_18 = arith.constant 3.200000e+01 : f32
    %24 = vector.broadcast %cst_18 : f32 to vector<2x1xf32>
    %25 = arith.divf %23, %24 : vector<2x1xf32>
    %26 = vector.broadcast %18 : vector<2x1xf32> to vector<2x32xf32>
    %27 = arith.subf %12, %26 : vector<2x32xf32>
    %cst_19 = arith.constant 9.99999974E-6 : f32
    %28 = vector.broadcast %cst_19 : f32 to vector<2x1xf32>
    %29 = arith.addf %25, %28 : vector<2x1xf32>
    %30 = math.rsqrt %29 : vector<2x1xf32>
    %31 = vector.broadcast %30 : vector<2x1xf32> to vector<2x32xf32>
    %32 = arith.mulf %27, %31 : vector<2x32xf32>
    %33 = vector.broadcast %13 : vector<1x32xf32> to vector<2x32xf32>
    %34 = arith.mulf %32, %33 : vector<2x32xf32>
    %35 = vector.broadcast %14 : vector<1x32xf32> to vector<2x32xf32>
    %36 = arith.addf %34, %35 : vector<2x32xf32>
    %cst_20 = arith.constant 0.000000e+00 : f32
    %37 = vector.broadcast %cst_20 : f32 to vector<2x32xf32>
    %38 = arith.maximumf %36, %37 : vector<2x32xf32>
    %c0_21 = arith.constant 0 : index
    %c0_22 = arith.constant 0 : index
    %39 = vector.load %arg2[%c0_21, %c0_22] : memref<2x10xf32, #tpu.memory_space<vmem>>, vector<2x10xf32>
    %c0_23 = arith.constant 0 : index
    %c0_24 = arith.constant 0 : index
    %40 = vector.load %arg9[%c0_23, %c0_24] : memref<10x32xf32, #tpu.memory_space<vmem>>, vector<10x32xf32>
    %cst_25 = arith.constant dense<0.000000e+00> : vector<2x32xf32>
    %41 = tpu.matmul %39, %40, %cst_25 {dimension_numbers = #tpu.dot_dimension_numbers<[1], [0], [0], [1], [0, 0, 1, 1], [], []>} : vector<2x10xf32>, vector<10x32xf32>, vector<2x32xf32> -> vector<2x32xf32>
    %c0_26 = arith.constant 0 : index
    %c0_27 = arith.constant 0 : index
    %42 = vector.load %arg10[%c0_26, %c0_27] : memref<1x32xf32, #tpu.memory_space<vmem>>, vector<1x32xf32>
    %43 = vector.broadcast %42 : vector<1x32xf32> to vector<2x32xf32>
    %44 = arith.addf %41, %43 : vector<2x32xf32>
    %cst_28 = arith.constant 0.000000e+00 : f32
    %45 = vector.broadcast %cst_28 : f32 to vector<2x32xf32>
    %46 = arith.maximumf %44, %45 : vector<2x32xf32>
    %c0_29 = arith.constant 0 : index
    %c0_30 = arith.constant 0 : index
    %47 = vector.load %arg11[%c0_29, %c0_30] : memref<32x32xf32, #tpu.memory_space<vmem>>, vector<32x32xf32>
    %cst_31 = arith.constant dense<0.000000e+00> : vector<2x32xf32>
    %48 = tpu.matmul %46, %47, %cst_31 {dimension_numbers = #tpu.dot_dimension_numbers<[1], [0], [0], [1], [0, 0, 1, 1], [], []>} : vector<2x32xf32>, vector<32x32xf32>, vector<2x32xf32> -> vector<2x32xf32>
    %c0_32 = arith.constant 0 : index
    %c0_33 = arith.constant 0 : index
    %49 = vector.load %arg12[%c0_32, %c0_33] : memref<1x32xf32, #tpu.memory_space<vmem>>, vector<1x32xf32>
    %50 = vector.broadcast %49 : vector<1x32xf32> to vector<2x32xf32>
    %51 = arith.addf %48, %50 : vector<2x32xf32>
    %c0_34 = arith.constant 0 : index
    %c0_35 = arith.constant 0 : index
    %52 = vector.load %arg13[%c0_34, %c0_35] : memref<1x32xf32, #tpu.memory_space<vmem>>, vector<1x32xf32>
    %c0_36 = arith.constant 0 : index
    %c0_37 = arith.constant 0 : index
    %53 = vector.load %arg14[%c0_36, %c0_37] : memref<1x32xf32, #tpu.memory_space<vmem>>, vector<1x32xf32>
    %cst_38 = arith.constant dense<0.000000e+00> : vector<2xf32>
    %54 = vector.multi_reduction <add>, %51, %cst_38 [1] : vector<2x32xf32> to vector<2xf32>
    %55 = vector.shape_cast %54 : vector<2xf32> to vector<2x1xf32>
    %cst_39 = arith.constant 3.200000e+01 : f32
    %56 = vector.broadcast %cst_39 : f32 to vector<2x1xf32>
    %57 = arith.divf %55, %56 : vector<2x1xf32>
    %58 = vector.broadcast %57 : vector<2x1xf32> to vector<2x32xf32>
    %59 = arith.subf %51, %58 : vector<2x32xf32>
    %60 = arith.mulf %59, %59 : vector<2x32xf32>
    %cst_40 = arith.constant dense<0.000000e+00> : vector<2xf32>
    %61 = vector.multi_reduction <add>, %60, %cst_40 [1] : vector<2x32xf32> to vector<2xf32>
    %62 = vector.shape_cast %61 : vector<2xf32> to vector<2x1xf32>
    %cst_41 = arith.constant 3.200000e+01 : f32
    %63 = vector.broadcast %cst_41 : f32 to vector<2x1xf32>
    %64 = arith.divf %62, %63 : vector<2x1xf32>
    %65 = vector.broadcast %57 : vector<2x1xf32> to vector<2x32xf32>
    %66 = arith.subf %51, %65 : vector<2x32xf32>
    %cst_42 = arith.constant 9.99999974E-6 : f32
    %67 = vector.broadcast %cst_42 : f32 to vector<2x1xf32>
    %68 = arith.addf %64, %67 : vector<2x1xf32>
    %69 = math.rsqrt %68 : vector<2x1xf32>
    %70 = vector.broadcast %69 : vector<2x1xf32> to vector<2x32xf32>
    %71 = arith.mulf %66, %70 : vector<2x32xf32>
    %72 = vector.broadcast %52 : vector<1x32xf32> to vector<2x32xf32>
    %73 = arith.mulf %71, %72 : vector<2x32xf32>
    %74 = vector.broadcast %53 : vector<1x32xf32> to vector<2x32xf32>
    %75 = arith.addf %73, %74 : vector<2x32xf32>
    %cst_43 = arith.constant 0.000000e+00 : f32
    %76 = vector.broadcast %cst_43 : f32 to vector<2x32xf32>
    %77 = arith.maximumf %75, %76 : vector<2x32xf32>
    %c0_44 = arith.constant 0 : index
    %c0_45 = arith.constant 0 : index
    %78 = vector.load %arg0[%c0_44, %c0_45] : memref<2x384xf32, #tpu.memory_space<vmem>>, vector<2x384xf32>
    %c0_46 = arith.constant 0 : index
    %c0_47 = arith.constant 0 : index
    %79 = vector.load %arg15[%c0_46, %c0_47] : memref<384x32xf32, #tpu.memory_space<vmem>>, vector<384x32xf32>
    %cst_48 = arith.constant dense<0.000000e+00> : vector<2x32xf32>
    %80 = tpu.matmul %78, %79, %cst_48 {dimension_numbers = #tpu.dot_dimension_numbers<[1], [0], [0], [1], [0, 0, 1, 1], [], []>} : vector<2x384xf32>, vector<384x32xf32>, vector<2x32xf32> -> vector<2x32xf32>
    %c0_49 = arith.constant 0 : index
    %c0_50 = arith.constant 0 : index
    %81 = vector.load %arg16[%c0_49, %c0_50] : memref<32x32xf32, #tpu.memory_space<vmem>>, vector<32x32xf32>
    %cst_51 = arith.constant dense<0.000000e+00> : vector<2x32xf32>
    %82 = tpu.matmul %38, %81, %cst_51 {dimension_numbers = #tpu.dot_dimension_numbers<[1], [0], [0], [1], [0, 0, 1, 1], [], []>} : vector<2x32xf32>, vector<32x32xf32>, vector<2x32xf32> -> vector<2x32xf32>
    %83 = arith.addf %80, %82 : vector<2x32xf32>
    %c0_52 = arith.constant 0 : index
    %c0_53 = arith.constant 0 : index
    %84 = vector.load %arg17[%c0_52, %c0_53] : memref<32x32xf32, #tpu.memory_space<vmem>>, vector<32x32xf32>
    %cst_54 = arith.constant dense<0.000000e+00> : vector<2x32xf32>
    %85 = tpu.matmul %77, %84, %cst_54 {dimension_numbers = #tpu.dot_dimension_numbers<[1], [0], [0], [1], [0, 0, 1, 1], [], []>} : vector<2x32xf32>, vector<32x32xf32>, vector<2x32xf32> -> vector<2x32xf32>
    %86 = arith.addf %83, %85 : vector<2x32xf32>
    %c0_55 = arith.constant 0 : index
    %c0_56 = arith.constant 0 : index
    %87 = vector.load %arg18[%c0_55, %c0_56] : memref<1x32xf32, #tpu.memory_space<vmem>>, vector<1x32xf32>
    %88 = vector.broadcast %87 : vector<1x32xf32> to vector<2x32xf32>
    %89 = arith.addf %86, %88 : vector<2x32xf32>
    %cst_57 = arith.constant 0.000000e+00 : f32
    %90 = vector.broadcast %cst_57 : f32 to vector<2x32xf32>
    %91 = arith.maximumf %89, %90 : vector<2x32xf32>
    %c0_58 = arith.constant 0 : index
    %c0_59 = arith.constant 0 : index
    %92 = vector.load %arg19[%c0_58, %c0_59] : memref<32x32xf32, #tpu.memory_space<vmem>>, vector<32x32xf32>
    %cst_60 = arith.constant dense<0.000000e+00> : vector<2x32xf32>
    %93 = tpu.matmul %91, %92, %cst_60 {dimension_numbers = #tpu.dot_dimension_numbers<[1], [0], [0], [1], [0, 0, 1, 1], [], []>} : vector<2x32xf32>, vector<32x32xf32>, vector<2x32xf32> -> vector<2x32xf32>
    %c0_61 = arith.constant 0 : index
    %c0_62 = arith.constant 0 : index
    %94 = vector.load %arg20[%c0_61, %c0_62] : memref<1x32xf32, #tpu.memory_space<vmem>>, vector<1x32xf32>
    %95 = vector.broadcast %94 : vector<1x32xf32> to vector<2x32xf32>
    %96 = arith.addf %93, %95 : vector<2x32xf32>
    %c0_63 = arith.constant 0 : index
    %c0_64 = arith.constant 0 : index
    %97 = vector.load %arg21[%c0_63, %c0_64] : memref<1x32xf32, #tpu.memory_space<vmem>>, vector<1x32xf32>
    %c0_65 = arith.constant 0 : index
    %c0_66 = arith.constant 0 : index
    %98 = vector.load %arg22[%c0_65, %c0_66] : memref<1x32xf32, #tpu.memory_space<vmem>>, vector<1x32xf32>
    %cst_67 = arith.constant dense<0.000000e+00> : vector<2xf32>
    %99 = vector.multi_reduction <add>, %96, %cst_67 [1] : vector<2x32xf32> to vector<2xf32>
    %100 = vector.shape_cast %99 : vector<2xf32> to vector<2x1xf32>
    %cst_68 = arith.constant 3.200000e+01 : f32
    %101 = vector.broadcast %cst_68 : f32 to vector<2x1xf32>
    %102 = arith.divf %100, %101 : vector<2x1xf32>
    %103 = vector.broadcast %102 : vector<2x1xf32> to vector<2x32xf32>
    %104 = arith.subf %96, %103 : vector<2x32xf32>
    %105 = arith.mulf %104, %104 : vector<2x32xf32>
    %cst_69 = arith.constant dense<0.000000e+00> : vector<2xf32>
    %106 = vector.multi_reduction <add>, %105, %cst_69 [1] : vector<2x32xf32> to vector<2xf32>
    %107 = vector.shape_cast %106 : vector<2xf32> to vector<2x1xf32>
    %cst_70 = arith.constant 3.200000e+01 : f32
    %108 = vector.broadcast %cst_70 : f32 to vector<2x1xf32>
    %109 = arith.divf %107, %108 : vector<2x1xf32>
    %110 = vector.broadcast %102 : vector<2x1xf32> to vector<2x32xf32>
    %111 = arith.subf %96, %110 : vector<2x32xf32>
    %cst_71 = arith.constant 9.99999974E-6 : f32
    %112 = vector.broadcast %cst_71 : f32 to vector<2x1xf32>
    %113 = arith.addf %109, %112 : vector<2x1xf32>
    %114 = math.rsqrt %113 : vector<2x1xf32>
    %115 = vector.broadcast %114 : vector<2x1xf32> to vector<2x32xf32>
    %116 = arith.mulf %111, %115 : vector<2x32xf32>
    %117 = vector.broadcast %97 : vector<1x32xf32> to vector<2x32xf32>
    %118 = arith.mulf %116, %117 : vector<2x32xf32>
    %119 = vector.broadcast %98 : vector<1x32xf32> to vector<2x32xf32>
    %120 = arith.addf %118, %119 : vector<2x32xf32>
    %cst_72 = arith.constant 0.000000e+00 : f32
    %121 = vector.broadcast %cst_72 : f32 to vector<2x32xf32>
    %122 = arith.maximumf %120, %121 : vector<2x32xf32>
    %c0_73 = arith.constant 0 : index
    %c0_74 = arith.constant 0 : index
    %123 = vector.load %arg23[%c0_73, %c0_74] : memref<32x128xf32, #tpu.memory_space<vmem>>, vector<32x128xf32>
    %cst_75 = arith.constant dense<0.000000e+00> : vector<2x128xf32>
    %124 = tpu.matmul %122, %123, %cst_75 {dimension_numbers = #tpu.dot_dimension_numbers<[1], [0], [0], [1], [0, 0, 1, 1], [], []>} : vector<2x32xf32>, vector<32x128xf32>, vector<2x128xf32> -> vector<2x128xf32>
    %c0_76 = arith.constant 0 : index
    %c0_77 = arith.constant 0 : index
    %125 = vector.load %arg25[%c0_76, %c0_77] : memref<1x128xf32, #tpu.memory_space<vmem>>, vector<1x128xf32>
    %126 = vector.broadcast %125 : vector<1x128xf32> to vector<2x128xf32>
    %127 = arith.addf %124, %126 : vector<2x128xf32>
    %c0_78 = arith.constant 0 : index
    %c0_79 = arith.constant 0 : index
    %128 = vector.load %arg24[%c0_78, %c0_79] : memref<32x128xf32, #tpu.memory_space<vmem>>, vector<32x128xf32>
    %c0_80 = arith.constant 0 : index
    %c0_81 = arith.constant 0 : index
    %129 = vector.load %arg26[%c0_80, %c0_81] : memref<32x128xf32, #tpu.memory_space<vmem>>, vector<32x128xf32>
    %c0_82 = arith.constant 0 : index
    %c0_83 = arith.constant 0 : index
    %130 = vector.load %arg27[%c0_82, %c0_83] : memref<32x128xf32, #tpu.memory_space<vmem>>, vector<32x128xf32>
    %c0_84 = arith.constant 0 : index
    %c0_85 = arith.constant 0 : index
    %131 = vector.load %arg28[%c0_84, %c0_85] : memref<1x128xf32, #tpu.memory_space<vmem>>, vector<1x128xf32>
    %132 = tpu.iota {dimensions = array<i32: 1>} : vector<2x128xi32>
    %c64_i32 = arith.constant 64 : i32
    %133 = vector.broadcast %c64_i32 : i32 to vector<2x128xi32>
    %134 = arith.cmpi sge, %132, %133 : vector<2x128xi32>
    %c96_i32 = arith.constant 96 : i32
    %135 = vector.broadcast %c96_i32 : i32 to vector<2x128xi32>
    %136 = arith.cmpi slt, %132, %135 : vector<2x128xi32>
    %137 = arith.andi %134, %136 : vector<2x128xi1>
    %cst_86 = arith.constant 0.000000e+00 : f32
    %138 = vector.broadcast %cst_86 : f32 to vector<2x32xf32>
    %cst_87 = arith.constant dense<0.000000e+00> : vector<2x128xf32>
    %139 = tpu.matmul %138, %128, %cst_87 {dimension_numbers = #tpu.dot_dimension_numbers<[1], [0], [0], [1], [0, 0, 1, 1], [], []>} : vector<2x32xf32>, vector<32x128xf32>, vector<2x128xf32> -> vector<2x128xf32>
    %140 = arith.addf %127, %139 : vector<2x128xf32>
    %141 = math.tanh %140 : vector<2x128xf32>
    %142 = arith.negf %140 : vector<2x128xf32>
    %143 = math.exp %142 : vector<2x128xf32>
    %cst_88 = arith.constant 1.000000e+00 : f32
    %144 = vector.broadcast %cst_88 : f32 to vector<2x128xf32>
    %145 = arith.addf %144, %143 : vector<2x128xf32>
    %146 = arith.divf %144, %145 : vector<2x128xf32>
    %147 = arith.select %137, %141, %146 : vector<2x128xi1>, vector<2x128xf32>
    %148 = vector.extract_strided_slice %147 {offsets = [0, 0], sizes = [2, 32], strides = [1, 1]} : vector<2x128xf32> to vector<2x32xf32>
    %149 = vector.extract_strided_slice %147 {offsets = [0, 32], sizes = [2, 32], strides = [1, 1]} : vector<2x128xf32> to vector<2x32xf32>
    %150 = vector.extract_strided_slice %147 {offsets = [0, 64], sizes = [2, 32], strides = [1, 1]} : vector<2x128xf32> to vector<2x32xf32>
    %151 = vector.extract_strided_slice %147 {offsets = [0, 96], sizes = [2, 32], strides = [1, 1]} : vector<2x128xf32> to vector<2x32xf32>
    %152 = arith.mulf %149, %138 : vector<2x32xf32>
    %153 = arith.mulf %148, %150 : vector<2x32xf32>
    %154 = arith.addf %152, %153 : vector<2x32xf32>
    %155 = math.tanh %154 : vector<2x32xf32>
    %156 = arith.mulf %151, %155 : vector<2x32xf32>
    %cst_89 = arith.constant dense<0.000000e+00> : vector<2x128xf32>
    %157 = tpu.matmul %156, %129, %cst_89 {dimension_numbers = #tpu.dot_dimension_numbers<[1], [0], [0], [1], [0, 0, 1, 1], [], []>} : vector<2x32xf32>, vector<32x128xf32>, vector<2x128xf32> -> vector<2x128xf32>
    %158 = vector.broadcast %131 : vector<1x128xf32> to vector<2x128xf32>
    %159 = arith.addf %157, %158 : vector<2x128xf32>
    %cst_90 = arith.constant dense<0.000000e+00> : vector<2x128xf32>
    %160 = tpu.matmul %138, %130, %cst_90 {dimension_numbers = #tpu.dot_dimension_numbers<[1], [0], [0], [1], [0, 0, 1, 1], [], []>} : vector<2x32xf32>, vector<32x128xf32>, vector<2x128xf32> -> vector<2x128xf32>
    %161 = arith.addf %159, %160 : vector<2x128xf32>
    %162 = math.tanh %161 : vector<2x128xf32>
    %163 = arith.negf %161 : vector<2x128xf32>
    %164 = math.exp %163 : vector<2x128xf32>
    %cst_91 = arith.constant 1.000000e+00 : f32
    %165 = vector.broadcast %cst_91 : f32 to vector<2x128xf32>
    %166 = arith.addf %165, %164 : vector<2x128xf32>
    %167 = arith.divf %165, %166 : vector<2x128xf32>
    %168 = arith.select %137, %162, %167 : vector<2x128xi1>, vector<2x128xf32>
    %169 = vector.extract_strided_slice %168 {offsets = [0, 0], sizes = [2, 32], strides = [1, 1]} : vector<2x128xf32> to vector<2x32xf32>
    %170 = vector.extract_strided_slice %168 {offsets = [0, 32], sizes = [2, 32], strides = [1, 1]} : vector<2x128xf32> to vector<2x32xf32>
    %171 = vector.extract_strided_slice %168 {offsets = [0, 64], sizes = [2, 32], strides = [1, 1]} : vector<2x128xf32> to vector<2x32xf32>
    %172 = vector.extract_strided_slice %168 {offsets = [0, 96], sizes = [2, 32], strides = [1, 1]} : vector<2x128xf32> to vector<2x32xf32>
    %173 = arith.mulf %170, %138 : vector<2x32xf32>
    %174 = arith.mulf %169, %171 : vector<2x32xf32>
    %175 = arith.addf %173, %174 : vector<2x32xf32>
    %176 = math.tanh %175 : vector<2x32xf32>
    %177 = arith.mulf %172, %176 : vector<2x32xf32>
    %cst_92 = arith.constant dense<0.000000e+00> : vector<2x128xf32>
    %178 = tpu.matmul %156, %128, %cst_92 {dimension_numbers = #tpu.dot_dimension_numbers<[1], [0], [0], [1], [0, 0, 1, 1], [], []>} : vector<2x32xf32>, vector<32x128xf32>, vector<2x128xf32> -> vector<2x128xf32>
    %179 = arith.addf %127, %178 : vector<2x128xf32>
    %180 = math.tanh %179 : vector<2x128xf32>
    %181 = arith.negf %179 : vector<2x128xf32>
    %182 = math.exp %181 : vector<2x128xf32>
    %cst_93 = arith.constant 1.000000e+00 : f32
    %183 = vector.broadcast %cst_93 : f32 to vector<2x128xf32>
    %184 = arith.addf %183, %182 : vector<2x128xf32>
    %185 = arith.divf %183, %184 : vector<2x128xf32>
    %186 = arith.select %137, %180, %185 : vector<2x128xi1>, vector<2x128xf32>
    %187 = vector.extract_strided_slice %186 {offsets = [0, 0], sizes = [2, 32], strides = [1, 1]} : vector<2x128xf32> to vector<2x32xf32>
    %188 = vector.extract_strided_slice %186 {offsets = [0, 32], sizes = [2, 32], strides = [1, 1]} : vector<2x128xf32> to vector<2x32xf32>
    %189 = vector.extract_strided_slice %186 {offsets = [0, 64], sizes = [2, 32], strides = [1, 1]} : vector<2x128xf32> to vector<2x32xf32>
    %190 = vector.extract_strided_slice %186 {offsets = [0, 96], sizes = [2, 32], strides = [1, 1]} : vector<2x128xf32> to vector<2x32xf32>
    %191 = arith.mulf %188, %154 : vector<2x32xf32>
    %192 = arith.mulf %187, %189 : vector<2x32xf32>
    %193 = arith.addf %191, %192 : vector<2x32xf32>
    %194 = math.tanh %193 : vector<2x32xf32>
    %195 = arith.mulf %190, %194 : vector<2x32xf32>
    %cst_94 = arith.constant dense<0.000000e+00> : vector<2x128xf32>
    %196 = tpu.matmul %195, %129, %cst_94 {dimension_numbers = #tpu.dot_dimension_numbers<[1], [0], [0], [1], [0, 0, 1, 1], [], []>} : vector<2x32xf32>, vector<32x128xf32>, vector<2x128xf32> -> vector<2x128xf32>
    %197 = vector.broadcast %131 : vector<1x128xf32> to vector<2x128xf32>
    %198 = arith.addf %196, %197 : vector<2x128xf32>
    %cst_95 = arith.constant dense<0.000000e+00> : vector<2x128xf32>
    %199 = tpu.matmul %177, %130, %cst_95 {dimension_numbers = #tpu.dot_dimension_numbers<[1], [0], [0], [1], [0, 0, 1, 1], [], []>} : vector<2x32xf32>, vector<32x128xf32>, vector<2x128xf32> -> vector<2x128xf32>
    %200 = arith.addf %198, %199 : vector<2x128xf32>
    %201 = math.tanh %200 : vector<2x128xf32>
    %202 = arith.negf %200 : vector<2x128xf32>
    %203 = math.exp %202 : vector<2x128xf32>
    %cst_96 = arith.constant 1.000000e+00 : f32
    %204 = vector.broadcast %cst_96 : f32 to vector<2x128xf32>
    %205 = arith.addf %204, %203 : vector<2x128xf32>
    %206 = arith.divf %204, %205 : vector<2x128xf32>
    %207 = arith.select %137, %201, %206 : vector<2x128xi1>, vector<2x128xf32>
    %208 = vector.extract_strided_slice %207 {offsets = [0, 0], sizes = [2, 32], strides = [1, 1]} : vector<2x128xf32> to vector<2x32xf32>
    %209 = vector.extract_strided_slice %207 {offsets = [0, 32], sizes = [2, 32], strides = [1, 1]} : vector<2x128xf32> to vector<2x32xf32>
    %210 = vector.extract_strided_slice %207 {offsets = [0, 64], sizes = [2, 32], strides = [1, 1]} : vector<2x128xf32> to vector<2x32xf32>
    %211 = vector.extract_strided_slice %207 {offsets = [0, 96], sizes = [2, 32], strides = [1, 1]} : vector<2x128xf32> to vector<2x32xf32>
    %212 = arith.mulf %209, %175 : vector<2x32xf32>
    %213 = arith.mulf %208, %210 : vector<2x32xf32>
    %214 = arith.addf %212, %213 : vector<2x32xf32>
    %215 = math.tanh %214 : vector<2x32xf32>
    %216 = arith.mulf %211, %215 : vector<2x32xf32>
    %cst_97 = arith.constant dense<0.000000e+00> : vector<2x128xf32>
    %217 = tpu.matmul %195, %128, %cst_97 {dimension_numbers = #tpu.dot_dimension_numbers<[1], [0], [0], [1], [0, 0, 1, 1], [], []>} : vector<2x32xf32>, vector<32x128xf32>, vector<2x128xf32> -> vector<2x128xf32>
    %218 = arith.addf %127, %217 : vector<2x128xf32>
    %219 = math.tanh %218 : vector<2x128xf32>
    %220 = arith.negf %218 : vector<2x128xf32>
    %221 = math.exp %220 : vector<2x128xf32>
    %cst_98 = arith.constant 1.000000e+00 : f32
    %222 = vector.broadcast %cst_98 : f32 to vector<2x128xf32>
    %223 = arith.addf %222, %221 : vector<2x128xf32>
    %224 = arith.divf %222, %223 : vector<2x128xf32>
    %225 = arith.select %137, %219, %224 : vector<2x128xi1>, vector<2x128xf32>
    %226 = vector.extract_strided_slice %225 {offsets = [0, 0], sizes = [2, 32], strides = [1, 1]} : vector<2x128xf32> to vector<2x32xf32>
    %227 = vector.extract_strided_slice %225 {offsets = [0, 32], sizes = [2, 32], strides = [1, 1]} : vector<2x128xf32> to vector<2x32xf32>
    %228 = vector.extract_strided_slice %225 {offsets = [0, 64], sizes = [2, 32], strides = [1, 1]} : vector<2x128xf32> to vector<2x32xf32>
    %229 = vector.extract_strided_slice %225 {offsets = [0, 96], sizes = [2, 32], strides = [1, 1]} : vector<2x128xf32> to vector<2x32xf32>
    %230 = arith.mulf %227, %193 : vector<2x32xf32>
    %231 = arith.mulf %226, %228 : vector<2x32xf32>
    %232 = arith.addf %230, %231 : vector<2x32xf32>
    %233 = math.tanh %232 : vector<2x32xf32>
    %234 = arith.mulf %229, %233 : vector<2x32xf32>
    %cst_99 = arith.constant dense<0.000000e+00> : vector<2x128xf32>
    %235 = tpu.matmul %234, %129, %cst_99 {dimension_numbers = #tpu.dot_dimension_numbers<[1], [0], [0], [1], [0, 0, 1, 1], [], []>} : vector<2x32xf32>, vector<32x128xf32>, vector<2x128xf32> -> vector<2x128xf32>
    %236 = vector.broadcast %131 : vector<1x128xf32> to vector<2x128xf32>
    %237 = arith.addf %235, %236 : vector<2x128xf32>
    %cst_100 = arith.constant dense<0.000000e+00> : vector<2x128xf32>
    %238 = tpu.matmul %216, %130, %cst_100 {dimension_numbers = #tpu.dot_dimension_numbers<[1], [0], [0], [1], [0, 0, 1, 1], [], []>} : vector<2x32xf32>, vector<32x128xf32>, vector<2x128xf32> -> vector<2x128xf32>
    %239 = arith.addf %237, %238 : vector<2x128xf32>
    %240 = math.tanh %239 : vector<2x128xf32>
    %241 = arith.negf %239 : vector<2x128xf32>
    %242 = math.exp %241 : vector<2x128xf32>
    %cst_101 = arith.constant 1.000000e+00 : f32
    %243 = vector.broadcast %cst_101 : f32 to vector<2x128xf32>
    %244 = arith.addf %243, %242 : vector<2x128xf32>
    %245 = arith.divf %243, %244 : vector<2x128xf32>
    %246 = arith.select %137, %240, %245 : vector<2x128xi1>, vector<2x128xf32>
    %247 = vector.extract_strided_slice %246 {offsets = [0, 0], sizes = [2, 32], strides = [1, 1]} : vector<2x128xf32> to vector<2x32xf32>
    %248 = vector.extract_strided_slice %246 {offsets = [0, 32], sizes = [2, 32], strides = [1, 1]} : vector<2x128xf32> to vector<2x32xf32>
    %249 = vector.extract_strided_slice %246 {offsets = [0, 64], sizes = [2, 32], strides = [1, 1]} : vector<2x128xf32> to vector<2x32xf32>
    %250 = vector.extract_strided_slice %246 {offsets = [0, 96], sizes = [2, 32], strides = [1, 1]} : vector<2x128xf32> to vector<2x32xf32>
    %251 = arith.mulf %248, %214 : vector<2x32xf32>
    %252 = arith.mulf %247, %249 : vector<2x32xf32>
    %253 = arith.addf %251, %252 : vector<2x32xf32>
    %254 = math.tanh %253 : vector<2x32xf32>
    %255 = arith.mulf %250, %254 : vector<2x32xf32>
    %cst_102 = arith.constant dense<0.000000e+00> : vector<2x128xf32>
    %256 = tpu.matmul %234, %128, %cst_102 {dimension_numbers = #tpu.dot_dimension_numbers<[1], [0], [0], [1], [0, 0, 1, 1], [], []>} : vector<2x32xf32>, vector<32x128xf32>, vector<2x128xf32> -> vector<2x128xf32>
    %257 = arith.addf %127, %256 : vector<2x128xf32>
    %258 = math.tanh %257 : vector<2x128xf32>
    %259 = arith.negf %257 : vector<2x128xf32>
    %260 = math.exp %259 : vector<2x128xf32>
    %cst_103 = arith.constant 1.000000e+00 : f32
    %261 = vector.broadcast %cst_103 : f32 to vector<2x128xf32>
    %262 = arith.addf %261, %260 : vector<2x128xf32>
    %263 = arith.divf %261, %262 : vector<2x128xf32>
    %264 = arith.select %137, %258, %263 : vector<2x128xi1>, vector<2x128xf32>
    %265 = vector.extract_strided_slice %264 {offsets = [0, 0], sizes = [2, 32], strides = [1, 1]} : vector<2x128xf32> to vector<2x32xf32>
    %266 = vector.extract_strided_slice %264 {offsets = [0, 32], sizes = [2, 32], strides = [1, 1]} : vector<2x128xf32> to vector<2x32xf32>
    %267 = vector.extract_strided_slice %264 {offsets = [0, 64], sizes = [2, 32], strides = [1, 1]} : vector<2x128xf32> to vector<2x32xf32>
    %268 = vector.extract_strided_slice %264 {offsets = [0, 96], sizes = [2, 32], strides = [1, 1]} : vector<2x128xf32> to vector<2x32xf32>
    %269 = arith.mulf %266, %232 : vector<2x32xf32>
    %270 = arith.mulf %265, %267 : vector<2x32xf32>
    %271 = arith.addf %269, %270 : vector<2x32xf32>
    %272 = math.tanh %271 : vector<2x32xf32>
    %273 = arith.mulf %268, %272 : vector<2x32xf32>
    %cst_104 = arith.constant dense<0.000000e+00> : vector<2x128xf32>
    %274 = tpu.matmul %273, %129, %cst_104 {dimension_numbers = #tpu.dot_dimension_numbers<[1], [0], [0], [1], [0, 0, 1, 1], [], []>} : vector<2x32xf32>, vector<32x128xf32>, vector<2x128xf32> -> vector<2x128xf32>
    %275 = vector.broadcast %131 : vector<1x128xf32> to vector<2x128xf32>
    %276 = arith.addf %274, %275 : vector<2x128xf32>
    %cst_105 = arith.constant dense<0.000000e+00> : vector<2x128xf32>
    %277 = tpu.matmul %255, %130, %cst_105 {dimension_numbers = #tpu.dot_dimension_numbers<[1], [0], [0], [1], [0, 0, 1, 1], [], []>} : vector<2x32xf32>, vector<32x128xf32>, vector<2x128xf32> -> vector<2x128xf32>
    %278 = arith.addf %276, %277 : vector<2x128xf32>
    %279 = math.tanh %278 : vector<2x128xf32>
    %280 = arith.negf %278 : vector<2x128xf32>
    %281 = math.exp %280 : vector<2x128xf32>
    %cst_106 = arith.constant 1.000000e+00 : f32
    %282 = vector.broadcast %cst_106 : f32 to vector<2x128xf32>
    %283 = arith.addf %282, %281 : vector<2x128xf32>
    %284 = arith.divf %282, %283 : vector<2x128xf32>
    %285 = arith.select %137, %279, %284 : vector<2x128xi1>, vector<2x128xf32>
    %286 = vector.extract_strided_slice %285 {offsets = [0, 0], sizes = [2, 32], strides = [1, 1]} : vector<2x128xf32> to vector<2x32xf32>
    %287 = vector.extract_strided_slice %285 {offsets = [0, 32], sizes = [2, 32], strides = [1, 1]} : vector<2x128xf32> to vector<2x32xf32>
    %288 = vector.extract_strided_slice %285 {offsets = [0, 64], sizes = [2, 32], strides = [1, 1]} : vector<2x128xf32> to vector<2x32xf32>
    %289 = vector.extract_strided_slice %285 {offsets = [0, 96], sizes = [2, 32], strides = [1, 1]} : vector<2x128xf32> to vector<2x32xf32>
    %290 = arith.mulf %287, %253 : vector<2x32xf32>
    %291 = arith.mulf %286, %288 : vector<2x32xf32>
    %292 = arith.addf %290, %291 : vector<2x32xf32>
    %293 = math.tanh %292 : vector<2x32xf32>
    %294 = arith.mulf %289, %293 : vector<2x32xf32>
    %cst_107 = arith.constant dense<0.000000e+00> : vector<2x128xf32>
    %295 = tpu.matmul %273, %128, %cst_107 {dimension_numbers = #tpu.dot_dimension_numbers<[1], [0], [0], [1], [0, 0, 1, 1], [], []>} : vector<2x32xf32>, vector<32x128xf32>, vector<2x128xf32> -> vector<2x128xf32>
    %296 = arith.addf %127, %295 : vector<2x128xf32>
    %297 = math.tanh %296 : vector<2x128xf32>
    %298 = arith.negf %296 : vector<2x128xf32>
    %299 = math.exp %298 : vector<2x128xf32>
    %cst_108 = arith.constant 1.000000e+00 : f32
    %300 = vector.broadcast %cst_108 : f32 to vector<2x128xf32>
    %301 = arith.addf %300, %299 : vector<2x128xf32>
    %302 = arith.divf %300, %301 : vector<2x128xf32>
    %303 = arith.select %137, %297, %302 : vector<2x128xi1>, vector<2x128xf32>
    %304 = vector.extract_strided_slice %303 {offsets = [0, 0], sizes = [2, 32], strides = [1, 1]} : vector<2x128xf32> to vector<2x32xf32>
    %305 = vector.extract_strided_slice %303 {offsets = [0, 32], sizes = [2, 32], strides = [1, 1]} : vector<2x128xf32> to vector<2x32xf32>
    %306 = vector.extract_strided_slice %303 {offsets = [0, 64], sizes = [2, 32], strides = [1, 1]} : vector<2x128xf32> to vector<2x32xf32>
    %307 = vector.extract_strided_slice %303 {offsets = [0, 96], sizes = [2, 32], strides = [1, 1]} : vector<2x128xf32> to vector<2x32xf32>
    %308 = arith.mulf %305, %271 : vector<2x32xf32>
    %309 = arith.mulf %304, %306 : vector<2x32xf32>
    %310 = arith.addf %308, %309 : vector<2x32xf32>
    %311 = math.tanh %310 : vector<2x32xf32>
    %312 = arith.mulf %307, %311 : vector<2x32xf32>
    %cst_109 = arith.constant dense<0.000000e+00> : vector<2x128xf32>
    %313 = tpu.matmul %312, %129, %cst_109 {dimension_numbers = #tpu.dot_dimension_numbers<[1], [0], [0], [1], [0, 0, 1, 1], [], []>} : vector<2x32xf32>, vector<32x128xf32>, vector<2x128xf32> -> vector<2x128xf32>
    %314 = vector.broadcast %131 : vector<1x128xf32> to vector<2x128xf32>
    %315 = arith.addf %313, %314 : vector<2x128xf32>
    %cst_110 = arith.constant dense<0.000000e+00> : vector<2x128xf32>
    %316 = tpu.matmul %294, %130, %cst_110 {dimension_numbers = #tpu.dot_dimension_numbers<[1], [0], [0], [1], [0, 0, 1, 1], [], []>} : vector<2x32xf32>, vector<32x128xf32>, vector<2x128xf32> -> vector<2x128xf32>
    %317 = arith.addf %315, %316 : vector<2x128xf32>
    %318 = math.tanh %317 : vector<2x128xf32>
    %319 = arith.negf %317 : vector<2x128xf32>
    %320 = math.exp %319 : vector<2x128xf32>
    %cst_111 = arith.constant 1.000000e+00 : f32
    %321 = vector.broadcast %cst_111 : f32 to vector<2x128xf32>
    %322 = arith.addf %321, %320 : vector<2x128xf32>
    %323 = arith.divf %321, %322 : vector<2x128xf32>
    %324 = arith.select %137, %318, %323 : vector<2x128xi1>, vector<2x128xf32>
    %325 = vector.extract_strided_slice %324 {offsets = [0, 0], sizes = [2, 32], strides = [1, 1]} : vector<2x128xf32> to vector<2x32xf32>
    %326 = vector.extract_strided_slice %324 {offsets = [0, 32], sizes = [2, 32], strides = [1, 1]} : vector<2x128xf32> to vector<2x32xf32>
    %327 = vector.extract_strided_slice %324 {offsets = [0, 64], sizes = [2, 32], strides = [1, 1]} : vector<2x128xf32> to vector<2x32xf32>
    %328 = vector.extract_strided_slice %324 {offsets = [0, 96], sizes = [2, 32], strides = [1, 1]} : vector<2x128xf32> to vector<2x32xf32>
    %329 = arith.mulf %326, %292 : vector<2x32xf32>
    %330 = arith.mulf %325, %327 : vector<2x32xf32>
    %331 = arith.addf %329, %330 : vector<2x32xf32>
    %332 = math.tanh %331 : vector<2x32xf32>
    %333 = arith.mulf %328, %332 : vector<2x32xf32>
    %cst_112 = arith.constant dense<0.000000e+00> : vector<2x128xf32>
    %334 = tpu.matmul %312, %128, %cst_112 {dimension_numbers = #tpu.dot_dimension_numbers<[1], [0], [0], [1], [0, 0, 1, 1], [], []>} : vector<2x32xf32>, vector<32x128xf32>, vector<2x128xf32> -> vector<2x128xf32>
    %335 = arith.addf %127, %334 : vector<2x128xf32>
    %336 = math.tanh %335 : vector<2x128xf32>
    %337 = arith.negf %335 : vector<2x128xf32>
    %338 = math.exp %337 : vector<2x128xf32>
    %cst_113 = arith.constant 1.000000e+00 : f32
    %339 = vector.broadcast %cst_113 : f32 to vector<2x128xf32>
    %340 = arith.addf %339, %338 : vector<2x128xf32>
    %341 = arith.divf %339, %340 : vector<2x128xf32>
    %342 = arith.select %137, %336, %341 : vector<2x128xi1>, vector<2x128xf32>
    %343 = vector.extract_strided_slice %342 {offsets = [0, 0], sizes = [2, 32], strides = [1, 1]} : vector<2x128xf32> to vector<2x32xf32>
    %344 = vector.extract_strided_slice %342 {offsets = [0, 32], sizes = [2, 32], strides = [1, 1]} : vector<2x128xf32> to vector<2x32xf32>
    %345 = vector.extract_strided_slice %342 {offsets = [0, 64], sizes = [2, 32], strides = [1, 1]} : vector<2x128xf32> to vector<2x32xf32>
    %346 = vector.extract_strided_slice %342 {offsets = [0, 96], sizes = [2, 32], strides = [1, 1]} : vector<2x128xf32> to vector<2x32xf32>
    %347 = arith.mulf %344, %310 : vector<2x32xf32>
    %348 = arith.mulf %343, %345 : vector<2x32xf32>
    %349 = arith.addf %347, %348 : vector<2x32xf32>
    %350 = math.tanh %349 : vector<2x32xf32>
    %351 = arith.mulf %346, %350 : vector<2x32xf32>
    %cst_114 = arith.constant dense<0.000000e+00> : vector<2x128xf32>
    %352 = tpu.matmul %351, %129, %cst_114 {dimension_numbers = #tpu.dot_dimension_numbers<[1], [0], [0], [1], [0, 0, 1, 1], [], []>} : vector<2x32xf32>, vector<32x128xf32>, vector<2x128xf32> -> vector<2x128xf32>
    %353 = vector.broadcast %131 : vector<1x128xf32> to vector<2x128xf32>
    %354 = arith.addf %352, %353 : vector<2x128xf32>
    %cst_115 = arith.constant dense<0.000000e+00> : vector<2x128xf32>
    %355 = tpu.matmul %333, %130, %cst_115 {dimension_numbers = #tpu.dot_dimension_numbers<[1], [0], [0], [1], [0, 0, 1, 1], [], []>} : vector<2x32xf32>, vector<32x128xf32>, vector<2x128xf32> -> vector<2x128xf32>
    %356 = arith.addf %354, %355 : vector<2x128xf32>
    %357 = math.tanh %356 : vector<2x128xf32>
    %358 = arith.negf %356 : vector<2x128xf32>
    %359 = math.exp %358 : vector<2x128xf32>
    %cst_116 = arith.constant 1.000000e+00 : f32
    %360 = vector.broadcast %cst_116 : f32 to vector<2x128xf32>
    %361 = arith.addf %360, %359 : vector<2x128xf32>
    %362 = arith.divf %360, %361 : vector<2x128xf32>
    %363 = arith.select %137, %357, %362 : vector<2x128xi1>, vector<2x128xf32>
    %364 = vector.extract_strided_slice %363 {offsets = [0, 0], sizes = [2, 32], strides = [1, 1]} : vector<2x128xf32> to vector<2x32xf32>
    %365 = vector.extract_strided_slice %363 {offsets = [0, 32], sizes = [2, 32], strides = [1, 1]} : vector<2x128xf32> to vector<2x32xf32>
    %366 = vector.extract_strided_slice %363 {offsets = [0, 64], sizes = [2, 32], strides = [1, 1]} : vector<2x128xf32> to vector<2x32xf32>
    %367 = vector.extract_strided_slice %363 {offsets = [0, 96], sizes = [2, 32], strides = [1, 1]} : vector<2x128xf32> to vector<2x32xf32>
    %368 = arith.mulf %365, %331 : vector<2x32xf32>
    %369 = arith.mulf %364, %366 : vector<2x32xf32>
    %370 = arith.addf %368, %369 : vector<2x32xf32>
    %371 = math.tanh %370 : vector<2x32xf32>
    %372 = arith.mulf %367, %371 : vector<2x32xf32>
    %cst_117 = arith.constant dense<0.000000e+00> : vector<2x128xf32>
    %373 = tpu.matmul %351, %128, %cst_117 {dimension_numbers = #tpu.dot_dimension_numbers<[1], [0], [0], [1], [0, 0, 1, 1], [], []>} : vector<2x32xf32>, vector<32x128xf32>, vector<2x128xf32> -> vector<2x128xf32>
    %374 = arith.addf %127, %373 : vector<2x128xf32>
    %375 = math.tanh %374 : vector<2x128xf32>
    %376 = arith.negf %374 : vector<2x128xf32>
    %377 = math.exp %376 : vector<2x128xf32>
    %cst_118 = arith.constant 1.000000e+00 : f32
    %378 = vector.broadcast %cst_118 : f32 to vector<2x128xf32>
    %379 = arith.addf %378, %377 : vector<2x128xf32>
    %380 = arith.divf %378, %379 : vector<2x128xf32>
    %381 = arith.select %137, %375, %380 : vector<2x128xi1>, vector<2x128xf32>
    %382 = vector.extract_strided_slice %381 {offsets = [0, 0], sizes = [2, 32], strides = [1, 1]} : vector<2x128xf32> to vector<2x32xf32>
    %383 = vector.extract_strided_slice %381 {offsets = [0, 32], sizes = [2, 32], strides = [1, 1]} : vector<2x128xf32> to vector<2x32xf32>
    %384 = vector.extract_strided_slice %381 {offsets = [0, 64], sizes = [2, 32], strides = [1, 1]} : vector<2x128xf32> to vector<2x32xf32>
    %385 = vector.extract_strided_slice %381 {offsets = [0, 96], sizes = [2, 32], strides = [1, 1]} : vector<2x128xf32> to vector<2x32xf32>
    %386 = arith.mulf %383, %349 : vector<2x32xf32>
    %387 = arith.mulf %382, %384 : vector<2x32xf32>
    %388 = arith.addf %386, %387 : vector<2x32xf32>
    %389 = math.tanh %388 : vector<2x32xf32>
    %390 = arith.mulf %385, %389 : vector<2x32xf32>
    %cst_119 = arith.constant dense<0.000000e+00> : vector<2x128xf32>
    %391 = tpu.matmul %390, %129, %cst_119 {dimension_numbers = #tpu.dot_dimension_numbers<[1], [0], [0], [1], [0, 0, 1, 1], [], []>} : vector<2x32xf32>, vector<32x128xf32>, vector<2x128xf32> -> vector<2x128xf32>
    %392 = vector.broadcast %131 : vector<1x128xf32> to vector<2x128xf32>
    %393 = arith.addf %391, %392 : vector<2x128xf32>
    %cst_120 = arith.constant dense<0.000000e+00> : vector<2x128xf32>
    %394 = tpu.matmul %372, %130, %cst_120 {dimension_numbers = #tpu.dot_dimension_numbers<[1], [0], [0], [1], [0, 0, 1, 1], [], []>} : vector<2x32xf32>, vector<32x128xf32>, vector<2x128xf32> -> vector<2x128xf32>
    %395 = arith.addf %393, %394 : vector<2x128xf32>
    %396 = math.tanh %395 : vector<2x128xf32>
    %397 = arith.negf %395 : vector<2x128xf32>
    %398 = math.exp %397 : vector<2x128xf32>
    %cst_121 = arith.constant 1.000000e+00 : f32
    %399 = vector.broadcast %cst_121 : f32 to vector<2x128xf32>
    %400 = arith.addf %399, %398 : vector<2x128xf32>
    %401 = arith.divf %399, %400 : vector<2x128xf32>
    %402 = arith.select %137, %396, %401 : vector<2x128xi1>, vector<2x128xf32>
    %403 = vector.extract_strided_slice %402 {offsets = [0, 0], sizes = [2, 32], strides = [1, 1]} : vector<2x128xf32> to vector<2x32xf32>
    %404 = vector.extract_strided_slice %402 {offsets = [0, 32], sizes = [2, 32], strides = [1, 1]} : vector<2x128xf32> to vector<2x32xf32>
    %405 = vector.extract_strided_slice %402 {offsets = [0, 64], sizes = [2, 32], strides = [1, 1]} : vector<2x128xf32> to vector<2x32xf32>
    %406 = vector.extract_strided_slice %402 {offsets = [0, 96], sizes = [2, 32], strides = [1, 1]} : vector<2x128xf32> to vector<2x32xf32>
    %407 = arith.mulf %404, %370 : vector<2x32xf32>
    %408 = arith.mulf %403, %405 : vector<2x32xf32>
    %409 = arith.addf %407, %408 : vector<2x32xf32>
    %410 = math.tanh %409 : vector<2x32xf32>
    %411 = arith.mulf %406, %410 : vector<2x32xf32>
    %cst_122 = arith.constant dense<0.000000e+00> : vector<2x128xf32>
    %412 = tpu.matmul %390, %128, %cst_122 {dimension_numbers = #tpu.dot_dimension_numbers<[1], [0], [0], [1], [0, 0, 1, 1], [], []>} : vector<2x32xf32>, vector<32x128xf32>, vector<2x128xf32> -> vector<2x128xf32>
    %413 = arith.addf %127, %412 : vector<2x128xf32>
    %414 = math.tanh %413 : vector<2x128xf32>
    %415 = arith.negf %413 : vector<2x128xf32>
    %416 = math.exp %415 : vector<2x128xf32>
    %cst_123 = arith.constant 1.000000e+00 : f32
    %417 = vector.broadcast %cst_123 : f32 to vector<2x128xf32>
    %418 = arith.addf %417, %416 : vector<2x128xf32>
    %419 = arith.divf %417, %418 : vector<2x128xf32>
    %420 = arith.select %137, %414, %419 : vector<2x128xi1>, vector<2x128xf32>
    %421 = vector.extract_strided_slice %420 {offsets = [0, 0], sizes = [2, 32], strides = [1, 1]} : vector<2x128xf32> to vector<2x32xf32>
    %422 = vector.extract_strided_slice %420 {offsets = [0, 32], sizes = [2, 32], strides = [1, 1]} : vector<2x128xf32> to vector<2x32xf32>
    %423 = vector.extract_strided_slice %420 {offsets = [0, 64], sizes = [2, 32], strides = [1, 1]} : vector<2x128xf32> to vector<2x32xf32>
    %424 = vector.extract_strided_slice %420 {offsets = [0, 96], sizes = [2, 32], strides = [1, 1]} : vector<2x128xf32> to vector<2x32xf32>
    %425 = arith.mulf %422, %388 : vector<2x32xf32>
    %426 = arith.mulf %421, %423 : vector<2x32xf32>
    %427 = arith.addf %425, %426 : vector<2x32xf32>
    %428 = math.tanh %427 : vector<2x32xf32>
    %429 = arith.mulf %424, %428 : vector<2x32xf32>
    %cst_124 = arith.constant dense<0.000000e+00> : vector<2x128xf32>
    %430 = tpu.matmul %429, %129, %cst_124 {dimension_numbers = #tpu.dot_dimension_numbers<[1], [0], [0], [1], [0, 0, 1, 1], [], []>} : vector<2x32xf32>, vector<32x128xf32>, vector<2x128xf32> -> vector<2x128xf32>
    %431 = vector.broadcast %131 : vector<1x128xf32> to vector<2x128xf32>
    %432 = arith.addf %430, %431 : vector<2x128xf32>
    %cst_125 = arith.constant dense<0.000000e+00> : vector<2x128xf32>
    %433 = tpu.matmul %411, %130, %cst_125 {dimension_numbers = #tpu.dot_dimension_numbers<[1], [0], [0], [1], [0, 0, 1, 1], [], []>} : vector<2x32xf32>, vector<32x128xf32>, vector<2x128xf32> -> vector<2x128xf32>
    %434 = arith.addf %432, %433 : vector<2x128xf32>
    %435 = math.tanh %434 : vector<2x128xf32>
    %436 = arith.negf %434 : vector<2x128xf32>
    %437 = math.exp %436 : vector<2x128xf32>
    %cst_126 = arith.constant 1.000000e+00 : f32
    %438 = vector.broadcast %cst_126 : f32 to vector<2x128xf32>
    %439 = arith.addf %438, %437 : vector<2x128xf32>
    %440 = arith.divf %438, %439 : vector<2x128xf32>
    %441 = arith.select %137, %435, %440 : vector<2x128xi1>, vector<2x128xf32>
    %442 = vector.extract_strided_slice %441 {offsets = [0, 0], sizes = [2, 32], strides = [1, 1]} : vector<2x128xf32> to vector<2x32xf32>
    %443 = vector.extract_strided_slice %441 {offsets = [0, 32], sizes = [2, 32], strides = [1, 1]} : vector<2x128xf32> to vector<2x32xf32>
    %444 = vector.extract_strided_slice %441 {offsets = [0, 64], sizes = [2, 32], strides = [1, 1]} : vector<2x128xf32> to vector<2x32xf32>
    %445 = vector.extract_strided_slice %441 {offsets = [0, 96], sizes = [2, 32], strides = [1, 1]} : vector<2x128xf32> to vector<2x32xf32>
    %446 = arith.mulf %443, %409 : vector<2x32xf32>
    %447 = arith.mulf %442, %444 : vector<2x32xf32>
    %448 = arith.addf %446, %447 : vector<2x32xf32>
    %449 = math.tanh %448 : vector<2x32xf32>
    %450 = arith.mulf %445, %449 : vector<2x32xf32>
    %451 = vector.shape_cast %177 : vector<2x32xf32> to vector<2x1x32xf32>
    %452 = vector.shape_cast %216 : vector<2x32xf32> to vector<2x1x32xf32>
    %453 = vector.shape_cast %255 : vector<2x32xf32> to vector<2x1x32xf32>
    %454 = vector.shape_cast %294 : vector<2x32xf32> to vector<2x1x32xf32>
    %455 = vector.shape_cast %333 : vector<2x32xf32> to vector<2x1x32xf32>
    %456 = vector.shape_cast %372 : vector<2x32xf32> to vector<2x1x32xf32>
    %457 = vector.shape_cast %411 : vector<2x32xf32> to vector<2x1x32xf32>
    %458 = vector.shape_cast %450 : vector<2x32xf32> to vector<2x1x32xf32>
    %459 = tpu.concatenate %451, %452, %453, %454, %455, %456, %457, %458 in 1 : vector<2x1x32xf32>, vector<2x1x32xf32>, vector<2x1x32xf32>, vector<2x1x32xf32>, vector<2x1x32xf32>, vector<2x1x32xf32>, vector<2x1x32xf32>, vector<2x1x32xf32> -> vector<2x8x32xf32>
    %460 = vector.shape_cast %459 : vector<2x8x32xf32> to vector<16x32xf32>
    %c0_127 = arith.constant 0 : index
    %c0_128 = arith.constant 0 : index
    %461 = vector.load %arg29[%c0_127, %c0_128] : memref<32x96xf32, #tpu.memory_space<vmem>>, vector<32x96xf32>
    %cst_129 = arith.constant dense<0.000000e+00> : vector<16x96xf32>
    %462 = tpu.matmul %460, %461, %cst_129 {dimension_numbers = #tpu.dot_dimension_numbers<[1], [0], [0], [1], [0, 0, 1, 1], [], []>} : vector<16x32xf32>, vector<32x96xf32>, vector<16x96xf32> -> vector<16x96xf32>
    %c0_130 = arith.constant 0 : index
    %c0_131 = arith.constant 0 : index
    %463 = vector.load %arg30[%c0_130, %c0_131] : memref<1x96xf32, #tpu.memory_space<vmem>>, vector<1x96xf32>
    %464 = vector.broadcast %463 : vector<1x96xf32> to vector<16x96xf32>
    %465 = arith.addf %462, %464 : vector<16x96xf32>
    %466 = vector.extract_strided_slice %465 {offsets = [0, 0], sizes = [16, 32], strides = [1, 1]} : vector<16x96xf32> to vector<16x32xf32>
    %467 = vector.shape_cast %466 : vector<16x32xf32> to vector<2x8x32xf32>
    %468 = vector.extract_strided_slice %465 {offsets = [0, 32], sizes = [16, 32], strides = [1, 1]} : vector<16x96xf32> to vector<16x32xf32>
    %469 = vector.shape_cast %468 : vector<16x32xf32> to vector<2x8x32xf32>
    %470 = vector.extract_strided_slice %465 {offsets = [0, 64], sizes = [16, 32], strides = [1, 1]} : vector<16x96xf32> to vector<16x32xf32>
    %471 = vector.shape_cast %470 : vector<16x32xf32> to vector<2x8x32xf32>
    %472 = vector.extract_strided_slice %467 {offsets = [0, 0, 0], sizes = [2, 8, 8], strides = [1, 1, 1]} : vector<2x8x32xf32> to vector<2x8x8xf32>
    %cst_132 = arith.constant 0.353553385 : f32
    %473 = vector.broadcast %cst_132 : f32 to vector<2x8x8xf32>
    %474 = arith.mulf %472, %473 : vector<2x8x8xf32>
    %475 = vector.extract_strided_slice %469 {offsets = [0, 0, 0], sizes = [2, 8, 8], strides = [1, 1, 1]} : vector<2x8x32xf32> to vector<2x8x8xf32>
    %476 = vector.extract_strided_slice %471 {offsets = [0, 0, 0], sizes = [2, 8, 8], strides = [1, 1, 1]} : vector<2x8x32xf32> to vector<2x8x8xf32>
    "tpu.trace_start"() <{level = 10 : i32, message = "bqd,bkd->bqk"}> : () -> ()
    %cst_133 = arith.constant dense<0.000000e+00> : vector<2x8x8xf32>
    %477 = tpu.matmul %474, %475, %cst_133 {dimension_numbers = #tpu.dot_dimension_numbers<[2], [2], [1], [1], [0, 0, 0, 1, 1, 1], [0], [0]>} : vector<2x8x8xf32>, vector<2x8x8xf32>, vector<2x8x8xf32> -> vector<2x8x8xf32>
    "tpu.trace_stop"() : () -> ()
    %cst_134 = arith.constant dense<0xFF800000> : vector<2x8xf32>
    %478 = vector.multi_reduction <maximumf>, %477, %cst_134 [2] : vector<2x8x8xf32> to vector<2x8xf32>
    %479 = vector.shape_cast %478 : vector<2x8xf32> to vector<2x8x1xf32>
    %480 = vector.broadcast %479 : vector<2x8x1xf32> to vector<2x8x8xf32>
    %481 = arith.subf %477, %480 : vector<2x8x8xf32>
    %482 = math.exp %481 : vector<2x8x8xf32>
    %cst_135 = arith.constant dense<0.000000e+00> : vector<2x8xf32>
    %483 = vector.multi_reduction <add>, %482, %cst_135 [2] : vector<2x8x8xf32> to vector<2x8xf32>
    %484 = vector.shape_cast %483 : vector<2x8xf32> to vector<2x8x1xf32>
    %485 = tpu.reciprocal %484 {approx = true} : vector<2x8x1xf32> -> vector<2x8x1xf32>
    %486 = vector.broadcast %485 : vector<2x8x1xf32> to vector<2x8x8xf32>
    %487 = arith.mulf %482, %486 : vector<2x8x8xf32>
    "tpu.trace_start"() <{level = 10 : i32, message = "bqk,bkd->bqd"}> : () -> ()
    %cst_136 = arith.constant dense<0.000000e+00> : vector<2x8x8xf32>
    %488 = tpu.matmul %487, %476, %cst_136 {dimension_numbers = #tpu.dot_dimension_numbers<[2], [1], [1], [2], [0, 0, 0, 1, 1, 2], [0], [0]>} : vector<2x8x8xf32>, vector<2x8x8xf32>, vector<2x8x8xf32> -> vector<2x8x8xf32>
    "tpu.trace_stop"() : () -> ()
    %489 = vector.extract_strided_slice %467 {offsets = [0, 0, 8], sizes = [2, 8, 8], strides = [1, 1, 1]} : vector<2x8x32xf32> to vector<2x8x8xf32>
    %cst_137 = arith.constant 0.353553385 : f32
    %490 = vector.broadcast %cst_137 : f32 to vector<2x8x8xf32>
    %491 = arith.mulf %489, %490 : vector<2x8x8xf32>
    %492 = vector.extract_strided_slice %469 {offsets = [0, 0, 8], sizes = [2, 8, 8], strides = [1, 1, 1]} : vector<2x8x32xf32> to vector<2x8x8xf32>
    %493 = vector.extract_strided_slice %471 {offsets = [0, 0, 8], sizes = [2, 8, 8], strides = [1, 1, 1]} : vector<2x8x32xf32> to vector<2x8x8xf32>
    "tpu.trace_start"() <{level = 10 : i32, message = "bqd,bkd->bqk"}> : () -> ()
    %cst_138 = arith.constant dense<0.000000e+00> : vector<2x8x8xf32>
    %494 = tpu.matmul %491, %492, %cst_138 {dimension_numbers = #tpu.dot_dimension_numbers<[2], [2], [1], [1], [0, 0, 0, 1, 1, 1], [0], [0]>} : vector<2x8x8xf32>, vector<2x8x8xf32>, vector<2x8x8xf32> -> vector<2x8x8xf32>
    "tpu.trace_stop"() : () -> ()
    %cst_139 = arith.constant dense<0xFF800000> : vector<2x8xf32>
    %495 = vector.multi_reduction <maximumf>, %494, %cst_139 [2] : vector<2x8x8xf32> to vector<2x8xf32>
    %496 = vector.shape_cast %495 : vector<2x8xf32> to vector<2x8x1xf32>
    %497 = vector.broadcast %496 : vector<2x8x1xf32> to vector<2x8x8xf32>
    %498 = arith.subf %494, %497 : vector<2x8x8xf32>
    %499 = math.exp %498 : vector<2x8x8xf32>
    %cst_140 = arith.constant dense<0.000000e+00> : vector<2x8xf32>
    %500 = vector.multi_reduction <add>, %499, %cst_140 [2] : vector<2x8x8xf32> to vector<2x8xf32>
    %501 = vector.shape_cast %500 : vector<2x8xf32> to vector<2x8x1xf32>
    %502 = tpu.reciprocal %501 {approx = true} : vector<2x8x1xf32> -> vector<2x8x1xf32>
    %503 = vector.broadcast %502 : vector<2x8x1xf32> to vector<2x8x8xf32>
    %504 = arith.mulf %499, %503 : vector<2x8x8xf32>
    "tpu.trace_start"() <{level = 10 : i32, message = "bqk,bkd->bqd"}> : () -> ()
    %cst_141 = arith.constant dense<0.000000e+00> : vector<2x8x8xf32>
    %505 = tpu.matmul %504, %493, %cst_141 {dimension_numbers = #tpu.dot_dimension_numbers<[2], [1], [1], [2], [0, 0, 0, 1, 1, 2], [0], [0]>} : vector<2x8x8xf32>, vector<2x8x8xf32>, vector<2x8x8xf32> -> vector<2x8x8xf32>
    "tpu.trace_stop"() : () -> ()
    %506 = vector.extract_strided_slice %467 {offsets = [0, 0, 16], sizes = [2, 8, 8], strides = [1, 1, 1]} : vector<2x8x32xf32> to vector<2x8x8xf32>
    %cst_142 = arith.constant 0.353553385 : f32
    %507 = vector.broadcast %cst_142 : f32 to vector<2x8x8xf32>
    %508 = arith.mulf %506, %507 : vector<2x8x8xf32>
    %509 = vector.extract_strided_slice %469 {offsets = [0, 0, 16], sizes = [2, 8, 8], strides = [1, 1, 1]} : vector<2x8x32xf32> to vector<2x8x8xf32>
    %510 = vector.extract_strided_slice %471 {offsets = [0, 0, 16], sizes = [2, 8, 8], strides = [1, 1, 1]} : vector<2x8x32xf32> to vector<2x8x8xf32>
    "tpu.trace_start"() <{level = 10 : i32, message = "bqd,bkd->bqk"}> : () -> ()
    %cst_143 = arith.constant dense<0.000000e+00> : vector<2x8x8xf32>
    %511 = tpu.matmul %508, %509, %cst_143 {dimension_numbers = #tpu.dot_dimension_numbers<[2], [2], [1], [1], [0, 0, 0, 1, 1, 1], [0], [0]>} : vector<2x8x8xf32>, vector<2x8x8xf32>, vector<2x8x8xf32> -> vector<2x8x8xf32>
    "tpu.trace_stop"() : () -> ()
    %cst_144 = arith.constant dense<0xFF800000> : vector<2x8xf32>
    %512 = vector.multi_reduction <maximumf>, %511, %cst_144 [2] : vector<2x8x8xf32> to vector<2x8xf32>
    %513 = vector.shape_cast %512 : vector<2x8xf32> to vector<2x8x1xf32>
    %514 = vector.broadcast %513 : vector<2x8x1xf32> to vector<2x8x8xf32>
    %515 = arith.subf %511, %514 : vector<2x8x8xf32>
    %516 = math.exp %515 : vector<2x8x8xf32>
    %cst_145 = arith.constant dense<0.000000e+00> : vector<2x8xf32>
    %517 = vector.multi_reduction <add>, %516, %cst_145 [2] : vector<2x8x8xf32> to vector<2x8xf32>
    %518 = vector.shape_cast %517 : vector<2x8xf32> to vector<2x8x1xf32>
    %519 = tpu.reciprocal %518 {approx = true} : vector<2x8x1xf32> -> vector<2x8x1xf32>
    %520 = vector.broadcast %519 : vector<2x8x1xf32> to vector<2x8x8xf32>
    %521 = arith.mulf %516, %520 : vector<2x8x8xf32>
    "tpu.trace_start"() <{level = 10 : i32, message = "bqk,bkd->bqd"}> : () -> ()
    %cst_146 = arith.constant dense<0.000000e+00> : vector<2x8x8xf32>
    %522 = tpu.matmul %521, %510, %cst_146 {dimension_numbers = #tpu.dot_dimension_numbers<[2], [1], [1], [2], [0, 0, 0, 1, 1, 2], [0], [0]>} : vector<2x8x8xf32>, vector<2x8x8xf32>, vector<2x8x8xf32> -> vector<2x8x8xf32>
    "tpu.trace_stop"() : () -> ()
    %523 = vector.extract_strided_slice %467 {offsets = [0, 0, 24], sizes = [2, 8, 8], strides = [1, 1, 1]} : vector<2x8x32xf32> to vector<2x8x8xf32>
    %cst_147 = arith.constant 0.353553385 : f32
    %524 = vector.broadcast %cst_147 : f32 to vector<2x8x8xf32>
    %525 = arith.mulf %523, %524 : vector<2x8x8xf32>
    %526 = vector.extract_strided_slice %469 {offsets = [0, 0, 24], sizes = [2, 8, 8], strides = [1, 1, 1]} : vector<2x8x32xf32> to vector<2x8x8xf32>
    %527 = vector.extract_strided_slice %471 {offsets = [0, 0, 24], sizes = [2, 8, 8], strides = [1, 1, 1]} : vector<2x8x32xf32> to vector<2x8x8xf32>
    "tpu.trace_start"() <{level = 10 : i32, message = "bqd,bkd->bqk"}> : () -> ()
    %cst_148 = arith.constant dense<0.000000e+00> : vector<2x8x8xf32>
    %528 = tpu.matmul %525, %526, %cst_148 {dimension_numbers = #tpu.dot_dimension_numbers<[2], [2], [1], [1], [0, 0, 0, 1, 1, 1], [0], [0]>} : vector<2x8x8xf32>, vector<2x8x8xf32>, vector<2x8x8xf32> -> vector<2x8x8xf32>
    "tpu.trace_stop"() : () -> ()
    %cst_149 = arith.constant dense<0xFF800000> : vector<2x8xf32>
    %529 = vector.multi_reduction <maximumf>, %528, %cst_149 [2] : vector<2x8x8xf32> to vector<2x8xf32>
    %530 = vector.shape_cast %529 : vector<2x8xf32> to vector<2x8x1xf32>
    %531 = vector.broadcast %530 : vector<2x8x1xf32> to vector<2x8x8xf32>
    %532 = arith.subf %528, %531 : vector<2x8x8xf32>
    %533 = math.exp %532 : vector<2x8x8xf32>
    %cst_150 = arith.constant dense<0.000000e+00> : vector<2x8xf32>
    %534 = vector.multi_reduction <add>, %533, %cst_150 [2] : vector<2x8x8xf32> to vector<2x8xf32>
    %535 = vector.shape_cast %534 : vector<2x8xf32> to vector<2x8x1xf32>
    %536 = tpu.reciprocal %535 {approx = true} : vector<2x8x1xf32> -> vector<2x8x1xf32>
    %537 = vector.broadcast %536 : vector<2x8x1xf32> to vector<2x8x8xf32>
    %538 = arith.mulf %533, %537 : vector<2x8x8xf32>
    "tpu.trace_start"() <{level = 10 : i32, message = "bqk,bkd->bqd"}> : () -> ()
    %cst_151 = arith.constant dense<0.000000e+00> : vector<2x8x8xf32>
    %539 = tpu.matmul %538, %527, %cst_151 {dimension_numbers = #tpu.dot_dimension_numbers<[2], [1], [1], [2], [0, 0, 0, 1, 1, 2], [0], [0]>} : vector<2x8x8xf32>, vector<2x8x8xf32>, vector<2x8x8xf32> -> vector<2x8x8xf32>
    "tpu.trace_stop"() : () -> ()
    %540 = tpu.concatenate %488, %505, %522, %539 in 2 : vector<2x8x8xf32>, vector<2x8x8xf32>, vector<2x8x8xf32>, vector<2x8x8xf32> -> vector<2x8x32xf32>
    %541 = vector.shape_cast %540 : vector<2x8x32xf32> to vector<16x32xf32>
    %c0_152 = arith.constant 0 : index
    %c0_153 = arith.constant 0 : index
    %542 = vector.load %arg31[%c0_152, %c0_153] : memref<32x32xf32, #tpu.memory_space<vmem>>, vector<32x32xf32>
    %cst_154 = arith.constant dense<0.000000e+00> : vector<16x32xf32>
    %543 = tpu.matmul %541, %542, %cst_154 {dimension_numbers = #tpu.dot_dimension_numbers<[1], [0], [0], [1], [0, 0, 1, 1], [], []>} : vector<16x32xf32>, vector<32x32xf32>, vector<16x32xf32> -> vector<16x32xf32>
    %c0_155 = arith.constant 0 : index
    %c0_156 = arith.constant 0 : index
    %544 = vector.load %arg32[%c0_155, %c0_156] : memref<1x32xf32, #tpu.memory_space<vmem>>, vector<1x32xf32>
    %545 = vector.broadcast %544 : vector<1x32xf32> to vector<16x32xf32>
    %546 = arith.addf %543, %545 : vector<16x32xf32>
    %c0_157 = arith.constant 0 : index
    %c0_158 = arith.constant 0 : index
    %547 = vector.load %arg33[%c0_157, %c0_158] : memref<32x16xf32, #tpu.memory_space<vmem>>, vector<32x16xf32>
    %cst_159 = arith.constant dense<0.000000e+00> : vector<16x16xf32>
    %548 = tpu.matmul %546, %547, %cst_159 {dimension_numbers = #tpu.dot_dimension_numbers<[1], [0], [0], [1], [0, 0, 1, 1], [], []>} : vector<16x32xf32>, vector<32x16xf32>, vector<16x16xf32> -> vector<16x16xf32>
    %c0_160 = arith.constant 0 : index
    %c0_161 = arith.constant 0 : index
    %549 = vector.load %arg34[%c0_160, %c0_161] : memref<1x16xf32, #tpu.memory_space<vmem>>, vector<1x16xf32>
    %550 = vector.broadcast %549 : vector<1x16xf32> to vector<16x16xf32>
    %551 = arith.addf %548, %550 : vector<16x16xf32>
    %cst_162 = arith.constant 0.000000e+00 : f32
    %552 = vector.broadcast %cst_162 : f32 to vector<16x16xf32>
    %553 = arith.maximumf %551, %552 : vector<16x16xf32>
    %554 = vector.shape_cast %553 : vector<16x16xf32> to vector<2x8x16xf32>
    %c0_163 = arith.constant 0 : index
    %c0_164 = arith.constant 0 : index
    %555 = vector.load %arg35[%c0_163, %c0_164] : memref<1x16xf32, #tpu.memory_space<vmem>>, vector<1x16xf32>
    %556 = vector.shape_cast %555 : vector<1x16xf32> to vector<1x1x16xf32>
    %557 = vector.broadcast %556 : vector<1x1x16xf32> to vector<2x8x16xf32>
    %558 = arith.mulf %554, %557 : vector<2x8x16xf32>
    %cst_165 = arith.constant dense<0.000000e+00> : vector<2x8xf32>
    %559 = vector.multi_reduction <add>, %558, %cst_165 [2] : vector<2x8x16xf32> to vector<2x8xf32>
    %c0_166 = arith.constant 0 : index
    %c0_167 = arith.constant 0 : index
    %560 = vector.load %arg36[%c0_166, %c0_167] : memref<1x1xf32, #tpu.memory_space<vmem>>, vector<1x1xf32>
    %561 = vector.broadcast %560 : vector<1x1xf32> to vector<2x8xf32>
    %562 = arith.addf %559, %561 : vector<2x8xf32>
    %c0_168 = arith.constant 0 : index
    %c0_169 = arith.constant 0 : index
    %563 = vector.load %arg37[%c0_168, %c0_169] : memref<2x8xf32, #tpu.memory_space<vmem>>, vector<2x8xf32>
    tpu.vector_store %arg37[%c0_168, %c0_169], %562 {strides = array<i32>} : memref<2x8xf32, #tpu.memory_space<vmem>>, vector<2x8xf32>,
    return
  }
}

</mosaic_0001>

<llo_original>
// kernel: tpu_custom_call.1
$region0: #{tpu_custom_call.1}
  #allocation0 [shape = 'u32[]', space=smem, size = 0x4, offset = 0x4, fixed_abs, tag = 'smem constant byte address 0x4 - core index']
  #allocation1 [shape = 'u32[144,128]{1,0:T(1,128)}', space=vmem, size = 0x12000, scoped, tag = 'internal scratch']
  #allocation2 [shape = 'f32[1,1]{1,0:T(1,128)S(1)}', space=vmem, size = 0x200, scoped, tag = 'scoped memory for tpu_custom_call.1']
  %s0 = inlined_call_operand.smem [shape: u32[38], index: -1, kind: input, shape index: {}]
  %s1 = sld [smem:[%s0]]
  %s2 = scalar_lea.smem %s0, 1
  %s3 = sld [smem:[%s2]]
  %s4 = scalar_lea.smem %s0, 2
  %s5 = sld [smem:[%s4]]
  %s6 = scalar_lea.smem %s0, 3
  %s7 = sld [smem:[%s6]]
  %s8 = scalar_lea.smem %s0, 4
  %s9 = sld [smem:[%s8]]
  %s10 = scalar_lea.smem %s0, 5
  %s11 = sld [smem:[%s10]]
  %s12 = scalar_lea.smem %s0, 6
  %s13 = sld [smem:[%s12]]
  %s14 = scalar_lea.smem %s0, 7
  %s15 = sld [smem:[%s14]]
  %s16 = scalar_lea.smem %s0, 8
  %s17 = sld [smem:[%s16]]
  %s18 = scalar_lea.smem %s0, 9
  %s19 = sld [smem:[%s18]]
  %s20 = scalar_lea.smem %s0, 10
  %s21 = sld [smem:[%s20]]
  %s22 = scalar_lea.smem %s0, 11
  %s23 = sld [smem:[%s22]]
  %s24 = scalar_lea.smem %s0, 12
  %s25 = sld [smem:[%s24]]
  %s26 = scalar_lea.smem %s0, 13
  %s27 = sld [smem:[%s26]]
  %s28 = scalar_lea.smem %s0, 14
  %s29 = sld [smem:[%s28]]
  %s30 = scalar_lea.smem %s0, 15
  %s31 = sld [smem:[%s30]]
  %s32 = scalar_lea.smem %s0, 16
  %s33 = sld [smem:[%s32]]
  %s34 = scalar_lea.smem %s0, 17
  %s35 = sld [smem:[%s34]]
  %s36 = scalar_lea.smem %s0, 18
  %s37 = sld [smem:[%s36]]
  %s38 = scalar_lea.smem %s0, 19
  %s39 = sld [smem:[%s38]]
  %s40 = scalar_lea.smem %s0, 20
  %s41 = sld [smem:[%s40]]
  %s42 = scalar_lea.smem %s0, 21
  %s43 = sld [smem:[%s42]]
  %s44 = scalar_lea.smem %s0, 22
  %s45 = sld [smem:[%s44]]
  %s46 = scalar_lea.smem %s0, 23
  %s47 = sld [smem:[%s46]]
  %s48 = scalar_lea.smem %s0, 24
  %s49 = sld [smem:[%s48]]
  %s50 = scalar_lea.smem %s0, 25
  %s51 = sld [smem:[%s50]]
  %s52 = scalar_lea.smem %s0, 26
  %s53 = sld [smem:[%s52]]
  %s54 = scalar_lea.smem %s0, 27
  %s55 = sld [smem:[%s54]]
  %s56 = scalar_lea.smem %s0, 28
  %s57 = sld [smem:[%s56]]
  %s58 = scalar_lea.smem %s0, 29
  %s59 = sld [smem:[%s58]]
  %s60 = scalar_lea.smem %s0, 30
  %s61 = sld [smem:[%s60]]
  %s62 = scalar_lea.smem %s0, 31
  %s63 = sld [smem:[%s62]]
  %s64 = scalar_lea.smem %s0, 32
  %s65 = sld [smem:[%s64]]
  %s66 = scalar_lea.smem %s0, 33
  %s67 = sld [smem:[%s66]]
  %s68 = scalar_lea.smem %s0, 34
  %s69 = sld [smem:[%s68]]
  %s70 = scalar_lea.smem %s0, 35
  %s71 = sld [smem:[%s70]]
  %s72 = scalar_lea.smem %s0, 36
  %s73 = sld [smem:[%s72]]
  %s74 = scalar_lea.smem %s0, 37
  %s75 = sld [smem:[%s74]]
  %s76 = sld [smem:[#allocation0]]
  $region158: #{tpu_custom_call.1} parent=0
    _
  %s78 = ssub.s32 1, %s76
  %s79 = scalar_select 0, %s78, %s76
  %v80 = vstv %s73
  %81 = vst [vmem:[#allocation2] sm:$0x1] %v80
  $region1: #{tpu_custom_call.1} parent=0
    #allocation3 [shape = 'u8[1024]{0}', space=vmem, size = 0x400, scoped, tag = 'output window, operand 0, single buffered']
    #allocation4 [shape = 's32[1]{0}', space=sflag, size = 0x4, scoped, tag = 'scoped memory for tpu_custom_call.1']
    %82 = vsyncpa [#allocation4], 0
    // Predicated region
    $region2: #{tpu_custom_call.1} parent=1 // pred_check
      _
    $region3: #{tpu_custom_call.1} parent=1 // pred_check_branch
      %84 = sbr.rel (0) target = $region5
    $region4: #{tpu_custom_call.1} parent=1 // pred_region
      _
    $region5: #{tpu_custom_call.1} parent=1 // pred_fallthru
      _
    // Predicated region
    $region6: #{tpu_custom_call.1} parent=1 // pred_check
      _
    $region7: #{tpu_custom_call.1} parent=1 // pred_check_branch
      %86 = sbr.rel (0) target = $region9
    $region8: #{tpu_custom_call.1} parent=1 // pred_region
      _
    $region9: #{tpu_custom_call.1} parent=1 // pred_fallthru
      _
    // Predicated region
    $region10: #{tpu_custom_call.1} parent=1 // pred_check
      _
    $region11: #{tpu_custom_call.1} parent=1 // pred_check_branch
      %88 = sbr.rel (0) target = $region13
    $region12: #{tpu_custom_call.1} parent=1 // pred_region
      _
    $region13: #{tpu_custom_call.1} parent=1 // pred_fallthru
      _
    // Predicated region
    $region14: #{tpu_custom_call.1} parent=1 // pred_check
      _
    $region15: #{tpu_custom_call.1} parent=1 // pred_check_branch
      %90 = sbr.rel (0) target = $region17
    $region16: #{tpu_custom_call.1} parent=1 // pred_region
      _
    $region17: #{tpu_custom_call.1} parent=1 // pred_fallthru
      _
    // Predicated region
    $region18: #{tpu_custom_call.1} parent=1 // pred_check
      _
    $region19: #{tpu_custom_call.1} parent=1 // pred_check_branch
      %92 = sbr.rel (0) target = $region21
    $region20: #{tpu_custom_call.1} parent=1 // pred_region
      _
    $region21: #{tpu_custom_call.1} parent=1 // pred_fallthru
      _
    // Predicated region
    $region22: #{tpu_custom_call.1} parent=1 // pred_check
      _
    $region23: #{tpu_custom_call.1} parent=1 // pred_check_branch
      %94 = sbr.rel (0) target = $region25
    $region24: #{tpu_custom_call.1} parent=1 // pred_region
      _
    $region25: #{tpu_custom_call.1} parent=1 // pred_fallthru
      _
    // Predicated region
    $region26: #{tpu_custom_call.1} parent=1 // pred_check
      _
    $region27: #{tpu_custom_call.1} parent=1 // pred_check_branch
      %96 = sbr.rel (0) target = $region29
    $region28: #{tpu_custom_call.1} parent=1 // pred_region
      _
    $region29: #{tpu_custom_call.1} parent=1 // pred_fallthru
      _
    // Predicated region
    $region30: #{tpu_custom_call.1} parent=1 // pred_check
      _
    $region31: #{tpu_custom_call.1} parent=1 // pred_check_branch
      %98 = sbr.rel (0) target = $region33
    $region32: #{tpu_custom_call.1} parent=1 // pred_region
      _
    $region33: #{tpu_custom_call.1} parent=1 // pred_fallthru
      _
    // Predicated region
    $region34: #{tpu_custom_call.1} parent=1 // pred_check
      _
    $region35: #{tpu_custom_call.1} parent=1 // pred_check_branch
      %100 = sbr.rel (0) target = $region37
    $region36: #{tpu_custom_call.1} parent=1 // pred_region
      _
    $region37: #{tpu_custom_call.1} parent=1 // pred_fallthru
      _
    // Predicated region
    $region38: #{tpu_custom_call.1} parent=1 // pred_check
      _
    $region39: #{tpu_custom_call.1} parent=1 // pred_check_branch
      %102 = sbr.rel (0) target = $region41
    $region40: #{tpu_custom_call.1} parent=1 // pred_region
      _
    $region41: #{tpu_custom_call.1} parent=1 // pred_fallthru
      _
    // Predicated region
    $region42: #{tpu_custom_call.1} parent=1 // pred_check
      _
    $region43: #{tpu_custom_call.1} parent=1 // pred_check_branch
      %104 = sbr.rel (0) target = $region45
    $region44: #{tpu_custom_call.1} parent=1 // pred_region
      _
    $region45: #{tpu_custom_call.1} parent=1 // pred_fallthru
      _
    // Predicated region
    $region46: #{tpu_custom_call.1} parent=1 // pred_check
      _
    $region47: #{tpu_custom_call.1} parent=1 // pred_check_branch
      %106 = sbr.rel (0) target = $region49
    $region48: #{tpu_custom_call.1} parent=1 // pred_region
      _
    $region49: #{tpu_custom_call.1} parent=1 // pred_fallthru
      _
    // Predicated region
    $region50: #{tpu_custom_call.1} parent=1 // pred_check
      _
    $region51: #{tpu_custom_call.1} parent=1 // pred_check_branch
      %108 = sbr.rel (0) target = $region53
    $region52: #{tpu_custom_call.1} parent=1 // pred_region
      _
    $region53: #{tpu_custom_call.1} parent=1 // pred_fallthru
      _
    // Predicated region
    $region54: #{tpu_custom_call.1} parent=1 // pred_check
      _
    $region55: #{tpu_custom_call.1} parent=1 // pred_check_branch
      %110 = sbr.rel (0) target = $region57
    $region56: #{tpu_custom_call.1} parent=1 // pred_region
      _
    $region57: #{tpu_custom_call.1} parent=1 // pred_fallthru
      _
    // Predicated region
    $region58: #{tpu_custom_call.1} parent=1 // pred_check
      _
    $region59: #{tpu_custom_call.1} parent=1 // pred_check_branch
      %112 = sbr.rel (0) target = $region61
    $region60: #{tpu_custom_call.1} parent=1 // pred_region
      _
    $region61: #{tpu_custom_call.1} parent=1 // pred_fallthru
      _
    // Predicated region
    $region62: #{tpu_custom_call.1} parent=1 // pred_check
      _
    $region63: #{tpu_custom_call.1} parent=1 // pred_check_branch
      %114 = sbr.rel (0) target = $region65
    $region64: #{tpu_custom_call.1} parent=1 // pred_region
      _
    $region65: #{tpu_custom_call.1} parent=1 // pred_fallthru
      _
    // Predicated region
    $region66: #{tpu_custom_call.1} parent=1 // pred_check
      _
    $region67: #{tpu_custom_call.1} parent=1 // pred_check_branch
      %116 = sbr.rel (0) target = $region69
    $region68: #{tpu_custom_call.1} parent=1 // pred_region
      _
    $region69: #{tpu_custom_call.1} parent=1 // pred_fallthru
      _
    // Predicated region
    $region70: #{tpu_custom_call.1} parent=1 // pred_check
      _
    $region71: #{tpu_custom_call.1} parent=1 // pred_check_branch
      %118 = sbr.rel (0) target = $region73
    $region72: #{tpu_custom_call.1} parent=1 // pred_region
      _
    $region73: #{tpu_custom_call.1} parent=1 // pred_fallthru
      _
    // Predicated region
    $region74: #{tpu_custom_call.1} parent=1 // pred_check
      _
    $region75: #{tpu_custom_call.1} parent=1 // pred_check_branch
      %120 = sbr.rel (0) target = $region77
    $region76: #{tpu_custom_call.1} parent=1 // pred_region
      _
    $region77: #{tpu_custom_call.1} parent=1 // pred_fallthru
      _
    // Predicated region
    $region78: #{tpu_custom_call.1} parent=1 // pred_check
      _
    $region79: #{tpu_custom_call.1} parent=1 // pred_check_branch
      %122 = sbr.rel (0) target = $region81
    $region80: #{tpu_custom_call.1} parent=1 // pred_region
      _
    $region81: #{tpu_custom_call.1} parent=1 // pred_fallthru
      _
    // Predicated region
    $region82: #{tpu_custom_call.1} parent=1 // pred_check
      _
    $region83: #{tpu_custom_call.1} parent=1 // pred_check_branch
      %124 = sbr.rel (0) target = $region85
    $region84: #{tpu_custom_call.1} parent=1 // pred_region
      _
    $region85: #{tpu_custom_call.1} parent=1 // pred_fallthru
      _
    // Predicated region
    $region86: #{tpu_custom_call.1} parent=1 // pred_check
      _
    $region87: #{tpu_custom_call.1} parent=1 // pred_check_branch
      %126 = sbr.rel (0) target = $region89
    $region88: #{tpu_custom_call.1} parent=1 // pred_region
      _
    $region89: #{tpu_custom_call.1} parent=1 // pred_fallthru
      _
    // Predicated region
    $region90: #{tpu_custom_call.1} parent=1 // pred_check
      _
    $region91: #{tpu_custom_call.1} parent=1 // pred_check_branch
      %128 = sbr.rel (0) target = $region93
    $region92: #{tpu_custom_call.1} parent=1 // pred_region
      _
    $region93: #{tpu_custom_call.1} parent=1 // pred_fallthru
      _
    // Predicated region
    $region94: #{tpu_custom_call.1} parent=1 // pred_check
      _
    $region95: #{tpu_custom_call.1} parent=1 // pred_check_branch
      %130 = sbr.rel (0) target = $region97
    $region96: #{tpu_custom_call.1} parent=1 // pred_region
      _
    $region97: #{tpu_custom_call.1} parent=1 // pred_fallthru
      _
    // Predicated region
    $region98: #{tpu_custom_call.1} parent=1 // pred_check
      _
    $region99: #{tpu_custom_call.1} parent=1 // pred_check_branch
      %132 = sbr.rel (0) target = $region101
    $region100: #{tpu_custom_call.1} parent=1 // pred_region
      _
    $region101: #{tpu_custom_call.1} parent=1 // pred_fallthru
      _
    // Predicated region
    $region102: #{tpu_custom_call.1} parent=1 // pred_check
      _
    $region103: #{tpu_custom_call.1} parent=1 // pred_check_branch
      %134 = sbr.rel (0) target = $region105
    $region104: #{tpu_custom_call.1} parent=1 // pred_region
      _
    $region105: #{tpu_custom_call.1} parent=1 // pred_fallthru
      _
    // Predicated region
    $region106: #{tpu_custom_call.1} parent=1 // pred_check
      _
    $region107: #{tpu_custom_call.1} parent=1 // pred_check_branch
      %136 = sbr.rel (0) target = $region109
    $region108: #{tpu_custom_call.1} parent=1 // pred_region
      _
    $region109: #{tpu_custom_call.1} parent=1 // pred_fallthru
      _
    // Predicated region
    $region110: #{tpu_custom_call.1} parent=1 // pred_check
      _
    $region111: #{tpu_custom_call.1} parent=1 // pred_check_branch
      %138 = sbr.rel (0) target = $region113
    $region112: #{tpu_custom_call.1} parent=1 // pred_region
      _
    $region113: #{tpu_custom_call.1} parent=1 // pred_fallthru
      _
    // Predicated region
    $region114: #{tpu_custom_call.1} parent=1 // pred_check
      _
    $region115: #{tpu_custom_call.1} parent=1 // pred_check_branch
      %140 = sbr.rel (0) target = $region117
    $region116: #{tpu_custom_call.1} parent=1 // pred_region
      _
    $region117: #{tpu_custom_call.1} parent=1 // pred_fallthru
      _
    // Predicated region
    $region118: #{tpu_custom_call.1} parent=1 // pred_check
      _
    $region119: #{tpu_custom_call.1} parent=1 // pred_check_branch
      %142 = sbr.rel (0) target = $region121
    $region120: #{tpu_custom_call.1} parent=1 // pred_region
      _
    $region121: #{tpu_custom_call.1} parent=1 // pred_fallthru
      _
    // Predicated region
    $region122: #{tpu_custom_call.1} parent=1 // pred_check
      _
    $region123: #{tpu_custom_call.1} parent=1 // pred_check_branch
      %144 = sbr.rel (0) target = $region125
    $region124: #{tpu_custom_call.1} parent=1 // pred_region
      _
    $region125: #{tpu_custom_call.1} parent=1 // pred_fallthru
      _
    // Predicated region
    $region126: #{tpu_custom_call.1} parent=1 // pred_check
      _
    $region127: #{tpu_custom_call.1} parent=1 // pred_check_branch
      %146 = sbr.rel (0) target = $region129
    $region128: #{tpu_custom_call.1} parent=1 // pred_region
      _
    $region129: #{tpu_custom_call.1} parent=1 // pred_fallthru
      _
    // Predicated region
    $region130: #{tpu_custom_call.1} parent=1 // pred_check
      _
    $region131: #{tpu_custom_call.1} parent=1 // pred_check_branch
      %148 = sbr.rel (0) target = $region133
    $region132: #{tpu_custom_call.1} parent=1 // pred_region
      _
    $region133: #{tpu_custom_call.1} parent=1 // pred_fallthru
      _
    // Predicated region
    $region134: #{tpu_custom_call.1} parent=1 // pred_check
      _
    $region135: #{tpu_custom_call.1} parent=1 // pred_check_branch
      %150 = sbr.rel (0) target = $region137
    $region136: #{tpu_custom_call.1} parent=1 // pred_region
      _
    $region137: #{tpu_custom_call.1} parent=1 // pred_fallthru
      _
    // Predicated region
    $region138: #{tpu_custom_call.1} parent=1 // pred_check
      _
    $region139: #{tpu_custom_call.1} parent=1 // pred_check_branch
      %152 = sbr.rel (0) target = $region141
    $region140: #{tpu_custom_call.1} parent=1 // pred_region
      _
    $region141: #{tpu_custom_call.1} parent=1 // pred_fallthru
      _
    // Predicated region
    $region142: #{tpu_custom_call.1} parent=1 // pred_check
      _
    $region143: #{tpu_custom_call.1} parent=1 // pred_check_branch
      %154 = sbr.rel (0) target = $region145
    $region144: #{tpu_custom_call.1} parent=1 // pred_region
      _
    $region145: #{tpu_custom_call.1} parent=1 // pred_fallthru
      _
    // Predicated region
    $region146: #{tpu_custom_call.1} parent=1 // pred_check
      _
    $region147: #{tpu_custom_call.1} parent=1 // pred_check_branch
      %156 = sbr.rel (0) target = $region149
    $region148: #{tpu_custom_call.1} parent=1 // pred_region
      _
    $region149: #{tpu_custom_call.1} parent=1 // pred_fallthru
      _
    %v157 = vld [vmem:[%s3] sm:$0x3]
    %v158 = vld [vmem:[%s7] sm:$0x3f]
    %v159 = vld [vmem:[%s9] sm:$0x1]
    %v161 = vlaneseq
    %v162 = vshrl.u32 %v161, 7
    %v163 = vsub.s32 0, %v162
    %v164 = vrot.slane %v159, %v163
    %vm166 = vcmask 48128
    %v168 = vsel %vm166, %v157, 0
    %vm170 = vcmask 1045504
    %v172 = vsel %vm170, %v158, 0
    %174 = vmatprep.subr.mxu0 0.0
    %175 = vmatpush1.msra.mxu0 %v172
    %176 = vmatprep.subr.mxu0 0.0
    %177 = vmatpush1.msra.mxu0 0.0
    %178 = vmatprep.subr.mxu0 0.0
    %179 = vmatpush1.msra.mxu0 0.0
    %180 = vmatprep.subr.mxu0 0.0
    %181 = vmatpush1.msra.mxu0 0.0
    %182 = vmatprep.subr.mxu0 0.0
    %183 = vmatpush1.msra.mxu0 0.0
    %184 = vmatprep.subr.mxu0 0.0
    %185 = vmatpush1.msra.mxu0 0.0
    %186 = vmatprep.subr.mxu0 0.0
    %187 = vmatpush1.msra.mxu0 0.0
    %188 = vmatprep.subr.mxu0 0.0
    %189 = vmatpush1.msra.mxu0 0.0
    %190 = vmatprep.subr.mxu0 0.0
    %191 = vmatpush1.msra.mxu0 0.0
    %192 = vmatprep.subr.mxu0 0.0
    %193 = vmatpush1.msra.mxu0 0.0
    %194 = vmatprep.subr.mxu0 0.0
    %195 = vmatpush1.msra.mxu0 0.0
    %196 = vmatprep.subr.mxu0 0.0
    %197 = vmatpush1.msra.mxu0 0.0
    %198 = vmatprep.subr.mxu0 0.0
    %199 = vmatpush1.msra.mxu0 0.0
    %200 = vmatprep.subr.mxu0 0.0
    %201 = vmatpush1.msra.mxu0 0.0
    %202 = vmatprep.subr.mxu0 0.0
    %203 = vmatpush1.msra.mxu0 0.0
    %204 = vmatprep.subr.mxu0 0.0
    %205 = vmatpush1.msra.mxu0 0.0
    %206 = vmatprep.subr.mxu0 0.0
    %207 = vmatpush1.msra.mxu0 0.0
    %208 = vmatprep.subr.mxu0 0.0
    %209 = vmatpush1.msra.mxu0 0.0
    %210 = vmatprep.subr.mxu0 0.0
    %211 = vmatpush1.msra.mxu0 0.0
    %212 = vmatprep.subr.mxu0 0.0
    %213 = vmatpush1.msra.mxu0 0.0
    %214 = vmatprep.subr.mxu0 0.0
    %215 = vmatpush1.msra.mxu0 0.0
    %216 = vmatprep.subr.mxu0 0.0
    %217 = vmatpush1.msra.mxu0 0.0
    %218 = vmatprep.subr.mxu0 0.0
    %219 = vmatpush1.msra.mxu0 0.0
    %220 = vmatprep.subr.mxu0 0.0
    %221 = vmatpush1.msra.mxu0 0.0
    %222 = vmatprep.subr.mxu0 0.0
    %223 = vmatpush1.msra.mxu0 0.0
    %224 = vmatprep.subr.mxu0 0.0
    %225 = vmatpush1.msra.mxu0 0.0
    %226 = vmatprep.subr.mxu0 0.0
    %227 = vmatpush1.msra.mxu0 0.0
    %228 = vmatprep.subr.mxu0 0.0
    %229 = vmatpush1.msra.mxu0 0.0
    %230 = vmatprep.subr.mxu0 0.0
    %231 = vmatpush1.msra.mxu0 0.0
    %232 = vmatprep.subr.mxu0 0.0
    %233 = vmatpush1.msra.mxu0 0.0
    %234 = vmatprep.subr.mxu0 0.0
    %235 = vmatpush1.msra.mxu0 0.0
    %236 = vmatprep.subr.mxu0 0.0
    %237 = vmatpush1.msra.mxu0 0.0
    %238 = vmatprep.mubr.f32.mxu0 0.0
    %239 = vmatmul.mubr.f32.gmra.mrb[0].mxu0 %v168
    %v240 = vpop.f32.mrb[0].mxu0
    %v241 = vadd.f32 %v164, %v240
    %v242 = vpop.f32.mrb[0].mxu0
    %243 = vdwg.mxu0
    %v244 = vmax.f32 %v241, 0.0
    %v245 = vld [vmem:[%s11] sm:$0xff]
    %v246 = vld [vmem:[%s11 + $0x8] sm:$0xff]
    %v247 = vld [vmem:[%s11 + $0x10] sm:$0xff]
    %v248 = vld [vmem:[%s11 + $0x18] sm:$0xff]
    %v249 = vld [vmem:[%s13] sm:$0x1]
    %v251 = vlaneseq
    %v252 = vshrl.u32 %v251, 7
    %v253 = vsub.s32 0, %v252
    %v254 = vrot.slane %v249, %v253
    %vm256 = vcmask 261120
    %v258 = vsel %vm256, %v244, 0
    %260 = vmatprep.subr.mxu0 0.0
    %261 = vmatpush1.msra.mxu0 %v245
    %262 = vmatprep.subr.mxu0 0.0
    %263 = vmatpush1.msra.mxu0 %v246
    %264 = vmatprep.subr.mxu0 0.0
    %265 = vmatpush1.msra.mxu0 %v247
    %266 = vmatprep.subr.mxu0 0.0
    %267 = vmatpush1.msra.mxu0 %v248
    %268 = vmatprep.subr.mxu0 0.0
    %269 = vmatpush1.msra.mxu0 0.0
    %270 = vmatprep.subr.mxu0 0.0
    %271 = vmatpush1.msra.mxu0 0.0
    %272 = vmatprep.subr.mxu0 0.0
    %273 = vmatpush1.msra.mxu0 0.0
    %274 = vmatprep.subr.mxu0 0.0
    %275 = vmatpush1.msra.mxu0 0.0
    %276 = vmatprep.subr.mxu0 0.0
    %277 = vmatpush1.msra.mxu0 0.0
    %278 = vmatprep.subr.mxu0 0.0
    %279 = vmatpush1.msra.mxu0 0.0
    %280 = vmatprep.subr.mxu0 0.0
    %281 = vmatpush1.msra.mxu0 0.0
    %282 = vmatprep.subr.mxu0 0.0
    %283 = vmatpush1.msra.mxu0 0.0
    %284 = vmatprep.subr.mxu0 0.0
    %285 = vmatpush1.msra.mxu0 0.0
    %286 = vmatprep.subr.mxu0 0.0
    %287 = vmatpush1.msra.mxu0 0.0
    %288 = vmatprep.subr.mxu0 0.0
    %289 = vmatpush1.msra.mxu0 0.0
    %290 = vmatprep.subr.mxu0 0.0
    %291 = vmatpush1.msra.mxu0 0.0
    %292 = vmatprep.subr.mxu0 0.0
    %293 = vmatpush1.msra.mxu0 0.0
    %294 = vmatprep.subr.mxu0 0.0
    %295 = vmatpush1.msra.mxu0 0.0
    %296 = vmatprep.subr.mxu0 0.0
    %297 = vmatpush1.msra.mxu0 0.0
    %298 = vmatprep.subr.mxu0 0.0
    %299 = vmatpush1.msra.mxu0 0.0
    %300 = vmatprep.subr.mxu0 0.0
    %301 = vmatpush1.msra.mxu0 0.0
    %302 = vmatprep.subr.mxu0 0.0
    %303 = vmatpush1.msra.mxu0 0.0
    %304 = vmatprep.subr.mxu0 0.0
    %305 = vmatpush1.msra.mxu0 0.0
    %306 = vmatprep.subr.mxu0 0.0
    %307 = vmatpush1.msra.mxu0 0.0
    %308 = vmatprep.subr.mxu0 0.0
    %309 = vmatpush1.msra.mxu0 0.0
    %310 = vmatprep.subr.mxu0 0.0
    %311 = vmatpush1.msra.mxu0 0.0
    %312 = vmatprep.subr.mxu0 0.0
    %313 = vmatpush1.msra.mxu0 0.0
    %314 = vmatprep.subr.mxu0 0.0
    %315 = vmatpush1.msra.mxu0 0.0
    %316 = vmatprep.subr.mxu0 0.0
    %317 = vmatpush1.msra.mxu0 0.0
    %318 = vmatprep.subr.mxu0 0.0
    %319 = vmatpush1.msra.mxu0 0.0
    %320 = vmatprep.subr.mxu0 0.0
    %321 = vmatpush1.msra.mxu0 0.0
    %322 = vmatprep.subr.mxu0 0.0
    %323 = vmatpush1.msra.mxu0 0.0
    %324 = vmatprep.mubr.f32.mxu0 0.0
    %325 = vmatmul.mubr.f32.gmra.mrb[0].mxu0 %v258
    %v326 = vpop.f32.mrb[0].mxu0
    %v327 = vadd.f32 %v254, %v326
    %v328 = vpop.f32.mrb[0].mxu0
    %329 = vdwg.mxu0
    %v330 = vld [vmem:[%s15] sm:$0x1]
    %v331 = vld [vmem:[%s17] sm:$0x1]
    %vm332 = vcmask 254976
    %v333 = vsel %vm332, %v327, 0.0
    %334 = vadd.xlane.f32.xlu0 %v333
    %v335 = vpop.xlane.xlu0 %334
    %v336 = vrcp.pop 32.0
    %v337 = vmul.f32 %v335, %v336
    %v338 = vsub.f32 %v327, %v337
    %v339 = vmul.f32 %v338, %v338
    %v340 = vsel %vm332, %v339, 0.0
    %341 = vadd.xlane.f32.xlu0 %v340
    %v342 = vpop.xlane.xlu0 %341
    %v343 = vmul.f32 %v342, %v336
    %v344 = vadd.f32 %v343, 1e-05
    %v345 = vrsqrt.pop %v344
    %v346 = vmul.f32 %v338, %v345
    %v348 = vlaneseq
    %v349 = vshrl.u32 %v348, 7
    %v350 = vsub.s32 0, %v349
    %v351 = vrot.slane %v330, %v350
    %v353 = vmul.f32 %v346, %v351
    %v355 = vlaneseq
    %v356 = vshrl.u32 %v355, 7
    %v357 = vsub.s32 0, %v356
    %v358 = vrot.slane %v331, %v357
    %v360 = vadd.f32 %v353, %v358
    %v361 = vmax.f32 %v360, 0.0
    %v362 = vld [vmem:[%s5] sm:$0x3]
    %v363 = vld [vmem:[%s19] sm:$0xff]
    %v364 = vld [vmem:[%s19 + $0x8] sm:$0x3]
    %v365 = vld [vmem:[%s21] sm:$0x1]
    %v367 = vlaneseq
    %v368 = vshrl.u32 %v367, 7
    %v369 = vsub.s32 0, %v368
    %v370 = vrot.slane %v365, %v369
    %vm372 = vcmask 80896
    %v374 = vsel %vm372, %v362, 0
    %vm376 = vcmask 1041408
    %v378 = vsel %vm376, %v364, 0
    %380 = vmatprep.subr.mxu0 0.0
    %381 = vmatpush1.msra.mxu0 %v363
    %382 = vmatprep.subr.mxu0 0.0
    %383 = vmatpush1.msra.mxu0 %v378
    %384 = vmatprep.subr.mxu0 0.0
    %385 = vmatpush1.msra.mxu0 0.0
    %386 = vmatprep.subr.mxu0 0.0
    %387 = vmatpush1.msra.mxu0 0.0
    %388 = vmatprep.subr.mxu0 0.0
    %389 = vmatpush1.msra.mxu0 0.0
    %390 = vmatprep.subr.mxu0 0.0
    %391 = vmatpush1.msra.mxu0 0.0
    %392 = vmatprep.subr.mxu0 0.0
    %393 = vmatpush1.msra.mxu0 0.0
    %394 = vmatprep.subr.mxu0 0.0
    %395 = vmatpush1.msra.mxu0 0.0
    %396 = vmatprep.subr.mxu0 0.0
    %397 = vmatpush1.msra.mxu0 0.0
    %398 = vmatprep.subr.mxu0 0.0
    %399 = vmatpush1.msra.mxu0 0.0
    %400 = vmatprep.subr.mxu0 0.0
    %401 = vmatpush1.msra.mxu0 0.0
    %402 = vmatprep.subr.mxu0 0.0
    %403 = vmatpush1.msra.mxu0 0.0
    %404 = vmatprep.subr.mxu0 0.0
    %405 = vmatpush1.msra.mxu0 0.0
    %406 = vmatprep.subr.mxu0 0.0
    %407 = vmatpush1.msra.mxu0 0.0
    %408 = vmatprep.subr.mxu0 0.0
    %409 = vmatpush1.msra.mxu0 0.0
    %410 = vmatprep.subr.mxu0 0.0
    %411 = vmatpush1.msra.mxu0 0.0
    %412 = vmatprep.subr.mxu0 0.0
    %413 = vmatpush1.msra.mxu0 0.0
    %414 = vmatprep.subr.mxu0 0.0
    %415 = vmatpush1.msra.mxu0 0.0
    %416 = vmatprep.subr.mxu0 0.0
    %417 = vmatpush1.msra.mxu0 0.0
    %418 = vmatprep.subr.mxu0 0.0
    %419 = vmatpush1.msra.mxu0 0.0
    %420 = vmatprep.subr.mxu0 0.0
    %421 = vmatpush1.msra.mxu0 0.0
    %422 = vmatprep.subr.mxu0 0.0
    %423 = vmatpush1.msra.mxu0 0.0
    %424 = vmatprep.subr.mxu0 0.0
    %425 = vmatpush1.msra.mxu0 0.0
    %426 = vmatprep.subr.mxu0 0.0
    %427 = vmatpush1.msra.mxu0 0.0
    %428 = vmatprep.subr.mxu0 0.0
    %429 = vmatpush1.msra.mxu0 0.0
    %430 = vmatprep.subr.mxu0 0.0
    %431 = vmatpush1.msra.mxu0 0.0
    %432 = vmatprep.subr.mxu0 0.0
    %433 = vmatpush1.msra.mxu0 0.0
    %434 = vmatprep.subr.mxu0 0.0
    %435 = vmatpush1.msra.mxu0 0.0
    %436 = vmatprep.subr.mxu0 0.0
    %437 = vmatpush1.msra.mxu0 0.0
    %438 = vmatprep.subr.mxu0 0.0
    %439 = vmatpush1.msra.mxu0 0.0
    %440 = vmatprep.subr.mxu0 0.0
    %441 = vmatpush1.msra.mxu0 0.0
    %442 = vmatprep.subr.mxu0 0.0
    %443 = vmatpush1.msra.mxu0 0.0
    %444 = vmatprep.mubr.f32.mxu0 0.0
    %445 = vmatmul.mubr.f32.gmra.mrb[0].mxu0 %v374
    %v446 = vpop.f32.mrb[0].mxu0
    %v447 = vadd.f32 %v370, %v446
    %v448 = vpop.f32.mrb[0].mxu0
    %449 = vdwg.mxu0
    %v450 = vmax.f32 %v447, 0.0
    %v451 = vld [vmem:[%s23] sm:$0xff]
    %v452 = vld [vmem:[%s23 + $0x8] sm:$0xff]
    %v453 = vld [vmem:[%s23 + $0x10] sm:$0xff]
    %v454 = vld [vmem:[%s23 + $0x18] sm:$0xff]
    %v455 = vld [vmem:[%s25] sm:$0x1]
    %v457 = vlaneseq
    %v458 = vshrl.u32 %v457, 7
    %v459 = vsub.s32 0, %v458
    %v460 = vrot.slane %v455, %v459
    %v463 = vsel %vm256, %v450, 0
    %465 = vmatprep.subr.mxu0 0.0
    %466 = vmatpush1.msra.mxu0 %v451
    %467 = vmatprep.subr.mxu0 0.0
    %468 = vmatpush1.msra.mxu0 %v452
    %469 = vmatprep.subr.mxu0 0.0
    %470 = vmatpush1.msra.mxu0 %v453
    %471 = vmatprep.subr.mxu0 0.0
    %472 = vmatpush1.msra.mxu0 %v454
    %473 = vmatprep.subr.mxu0 0.0
    %474 = vmatpush1.msra.mxu0 0.0
    %475 = vmatprep.subr.mxu0 0.0
    %476 = vmatpush1.msra.mxu0 0.0
    %477 = vmatprep.subr.mxu0 0.0
    %478 = vmatpush1.msra.mxu0 0.0
    %479 = vmatprep.subr.mxu0 0.0
    %480 = vmatpush1.msra.mxu0 0.0
    %481 = vmatprep.subr.mxu0 0.0
    %482 = vmatpush1.msra.mxu0 0.0
    %483 = vmatprep.subr.mxu0 0.0
    %484 = vmatpush1.msra.mxu0 0.0
    %485 = vmatprep.subr.mxu0 0.0
    %486 = vmatpush1.msra.mxu0 0.0
    %487 = vmatprep.subr.mxu0 0.0
    %488 = vmatpush1.msra.mxu0 0.0
    %489 = vmatprep.subr.mxu0 0.0
    %490 = vmatpush1.msra.mxu0 0.0
    %491 = vmatprep.subr.mxu0 0.0
    %492 = vmatpush1.msra.mxu0 0.0
    %493 = vmatprep.subr.mxu0 0.0
    %494 = vmatpush1.msra.mxu0 0.0
    %495 = vmatprep.subr.mxu0 0.0
    %496 = vmatpush1.msra.mxu0 0.0
    %497 = vmatprep.subr.mxu0 0.0
    %498 = vmatpush1.msra.mxu0 0.0
    %499 = vmatprep.subr.mxu0 0.0
    %500 = vmatpush1.msra.mxu0 0.0
    %501 = vmatprep.subr.mxu0 0.0
    %502 = vmatpush1.msra.mxu0 0.0
    %503 = vmatprep.subr.mxu0 0.0
    %504 = vmatpush1.msra.mxu0 0.0
    %505 = vmatprep.subr.mxu0 0.0
    %506 = vmatpush1.msra.mxu0 0.0
    %507 = vmatprep.subr.mxu0 0.0
    %508 = vmatpush1.msra.mxu0 0.0
    %509 = vmatprep.subr.mxu0 0.0
    %510 = vmatpush1.msra.mxu0 0.0
    %511 = vmatprep.subr.mxu0 0.0
    %512 = vmatpush1.msra.mxu0 0.0
    %513 = vmatprep.subr.mxu0 0.0
    %514 = vmatpush1.msra.mxu0 0.0
    %515 = vmatprep.subr.mxu0 0.0
    %516 = vmatpush1.msra.mxu0 0.0
    %517 = vmatprep.subr.mxu0 0.0
    %518 = vmatpush1.msra.mxu0 0.0
    %519 = vmatprep.subr.mxu0 0.0
    %520 = vmatpush1.msra.mxu0 0.0
    %521 = vmatprep.subr.mxu0 0.0
    %522 = vmatpush1.msra.mxu0 0.0
    %523 = vmatprep.subr.mxu0 0.0
    %524 = vmatpush1.msra.mxu0 0.0
    %525 = vmatprep.subr.mxu0 0.0
    %526 = vmatpush1.msra.mxu0 0.0
    %527 = vmatprep.subr.mxu0 0.0
    %528 = vmatpush1.msra.mxu0 0.0
    %529 = vmatprep.mubr.f32.mxu0 0.0
    %530 = vmatmul.mubr.f32.gmra.mrb[0].mxu0 %v463
    %v531 = vpop.f32.mrb[0].mxu0
    %v532 = vadd.f32 %v460, %v531
    %v533 = vpop.f32.mrb[0].mxu0
    %534 = vdwg.mxu0
    %v535 = vld [vmem:[%s27] sm:$0x1]
    %v536 = vld [vmem:[%s29] sm:$0x1]
    %v537 = vsel %vm332, %v532, 0.0
    %538 = vadd.xlane.f32.xlu0 %v537
    %v539 = vpop.xlane.xlu0 %538
    %v540 = vmul.f32 %v539, %v336
    %v541 = vsub.f32 %v532, %v540
    %v542 = vmul.f32 %v541, %v541
    %v543 = vsel %vm332, %v542, 0.0
    %544 = vadd.xlane.f32.xlu0 %v543
    %v545 = vpop.xlane.xlu0 %544
    %v546 = vmul.f32 %v545, %v336
    %v547 = vadd.f32 %v546, 1e-05
    %v548 = vrsqrt.pop %v547
    %v549 = vmul.f32 %v541, %v548
    %v551 = vlaneseq
    %v552 = vshrl.u32 %v551, 7
    %v553 = vsub.s32 0, %v552
    %v554 = vrot.slane %v535, %v553
    %v556 = vmul.f32 %v549, %v554
    %v558 = vlaneseq
    %v559 = vshrl.u32 %v558, 7
    %v560 = vsub.s32 0, %v559
    %v561 = vrot.slane %v536, %v560
    %v563 = vadd.f32 %v556, %v561
    %v564 = vmax.f32 %v563, 0.0
    %v565 = vld [vmem:[%s1] sm:$0x3f]
    %v566 = vld [vmem:[%s31] sm:$0xff]
    %v567 = vld [vmem:[%s31 + $0x8] sm:$0xff]
    %v568 = vld [vmem:[%s31 + $0x10] sm:$0xff]
    %v569 = vld [vmem:[%s31 + $0x18] sm:$0xff]
    %v570 = vld [vmem:[%s31 + $0x20] sm:$0xff]
    %v571 = vld [vmem:[%s31 + $0x28] sm:$0xff]
    %v572 = vld [vmem:[%s31 + $0x30] sm:$0xff]
    %v573 = vld [vmem:[%s31 + $0x38] sm:$0xff]
    %v574 = vld [vmem:[%s31 + $0x40] sm:$0xff]
    %v575 = vld [vmem:[%s31 + $0x48] sm:$0xff]
    %v576 = vld [vmem:[%s31 + $0x50] sm:$0xff]
    %v577 = vld [vmem:[%s31 + $0x58] sm:$0xff]
    %v578 = vld [vmem:[%s31 + $0x60] sm:$0xff]
    %v579 = vld [vmem:[%s31 + $0x68] sm:$0xff]
    %v580 = vld [vmem:[%s31 + $0x70] sm:$0xff]
    %v581 = vld [vmem:[%s31 + $0x78] sm:$0xff]
    %v582 = vld [vmem:[%s31 + $0x80] sm:$0xff]
    %v583 = vld [vmem:[%s31 + $0x88] sm:$0xff]
    %v584 = vld [vmem:[%s31 + $0x90] sm:$0xff]
    %v585 = vld [vmem:[%s31 + $0x98] sm:$0xff]
    %v586 = vld [vmem:[%s31 + $0xa0] sm:$0xff]
    %v587 = vld [vmem:[%s31 + $0xa8] sm:$0xff]
    %v588 = vld [vmem:[%s31 + $0xb0] sm:$0xff]
    %v589 = vld [vmem:[%s31 + $0xb8] sm:$0xff]
    %v590 = vld [vmem:[%s31 + $0xc0] sm:$0xff]
    %v591 = vld [vmem:[%s31 + $0xc8] sm:$0xff]
    %v592 = vld [vmem:[%s31 + $0xd0] sm:$0xff]
    %v593 = vld [vmem:[%s31 + $0xd8] sm:$0xff]
    %v594 = vld [vmem:[%s31 + $0xe0] sm:$0xff]
    %v595 = vld [vmem:[%s31 + $0xe8] sm:$0xff]
    %v596 = vld [vmem:[%s31 + $0xf0] sm:$0xff]
    %v597 = vld [vmem:[%s31 + $0xf8] sm:$0xff]
    %v598 = vld [vmem:[%s31 + $0x100] sm:$0xff]
    %v599 = vld [vmem:[%s31 + $0x108] sm:$0xff]
    %v600 = vld [vmem:[%s31 + $0x110] sm:$0xff]
    %v601 = vld [vmem:[%s31 + $0x118] sm:$0xff]
    %v602 = vld [vmem:[%s31 + $0x120] sm:$0xff]
    %v603 = vld [vmem:[%s31 + $0x128] sm:$0xff]
    %v604 = vld [vmem:[%s31 + $0x130] sm:$0xff]
    %v605 = vld [vmem:[%s31 + $0x138] sm:$0xff]
    %v606 = vld [vmem:[%s31 + $0x140] sm:$0xff]
    %v607 = vld [vmem:[%s31 + $0x148] sm:$0xff]
    %v608 = vld [vmem:[%s31 + $0x150] sm:$0xff]
    %v609 = vld [vmem:[%s31 + $0x158] sm:$0xff]
    %v610 = vld [vmem:[%s31 + $0x160] sm:$0xff]
    %v611 = vld [vmem:[%s31 + $0x168] sm:$0xff]
    %v612 = vld [vmem:[%s31 + $0x170] sm:$0xff]
    %v613 = vld [vmem:[%s31 + $0x178] sm:$0xff]
    %v614 = vld [vmem:[%s33] sm:$0xff]
    %v615 = vld [vmem:[%s33 + $0x8] sm:$0xff]
    %v616 = vld [vmem:[%s33 + $0x10] sm:$0xff]
    %v617 = vld [vmem:[%s33 + $0x18] sm:$0xff]
    %v619 = vsel %vm256, %v361, 0
    %621 = vmatprep.subr.mxu0 0.0
    %622 = vmatpush1.msra.mxu0 %v614
    %623 = vmatprep.subr.mxu0 0.0
    %624 = vmatpush1.msra.mxu0 %v615
    %625 = vmatprep.subr.mxu0 0.0
    %626 = vmatpush1.msra.mxu0 %v616
    %627 = vmatprep.subr.mxu0 0.0
    %628 = vmatpush1.msra.mxu0 %v617
    %629 = vmatprep.subr.mxu0 0.0
    %630 = vmatpush1.msra.mxu0 0.0
    %631 = vmatprep.subr.mxu0 0.0
    %632 = vmatpush1.msra.mxu0 0.0
    %633 = vmatprep.subr.mxu0 0.0
    %634 = vmatpush1.msra.mxu0 0.0
    %635 = vmatprep.subr.mxu0 0.0
    %636 = vmatpush1.msra.mxu0 0.0
    %637 = vmatprep.subr.mxu0 0.0
    %638 = vmatpush1.msra.mxu0 0.0
    %639 = vmatprep.subr.mxu0 0.0
    %640 = vmatpush1.msra.mxu0 0.0
    %641 = vmatprep.subr.mxu0 0.0
    %642 = vmatpush1.msra.mxu0 0.0
    %643 = vmatprep.subr.mxu0 0.0
    %644 = vmatpush1.msra.mxu0 0.0
    %645 = vmatprep.subr.mxu0 0.0
    %646 = vmatpush1.msra.mxu0 0.0
    %647 = vmatprep.subr.mxu0 0.0
    %648 = vmatpush1.msra.mxu0 0.0
    %649 = vmatprep.subr.mxu0 0.0
    %650 = vmatpush1.msra.mxu0 0.0
    %651 = vmatprep.subr.mxu0 0.0
    %652 = vmatpush1.msra.mxu0 0.0
    %653 = vmatprep.subr.mxu0 0.0
    %654 = vmatpush1.msra.mxu0 0.0
    %655 = vmatprep.subr.mxu0 0.0
    %656 = vmatpush1.msra.mxu0 0.0
    %657 = vmatprep.subr.mxu0 0.0
    %658 = vmatpush1.msra.mxu0 0.0
    %659 = vmatprep.subr.mxu0 0.0
    %660 = vmatpush1.msra.mxu0 0.0
    %661 = vmatprep.subr.mxu0 0.0
    %662 = vmatpush1.msra.mxu0 0.0
    %663 = vmatprep.subr.mxu0 0.0
    %664 = vmatpush1.msra.mxu0 0.0
    %665 = vmatprep.subr.mxu0 0.0
    %666 = vmatpush1.msra.mxu0 0.0
    %667 = vmatprep.subr.mxu0 0.0
    %668 = vmatpush1.msra.mxu0 0.0
    %669 = vmatprep.subr.mxu0 0.0
    %670 = vmatpush1.msra.mxu0 0.0
    %671 = vmatprep.subr.mxu0 0.0
    %672 = vmatpush1.msra.mxu0 0.0
    %673 = vmatprep.subr.mxu0 0.0
    %674 = vmatpush1.msra.mxu0 0.0
    %675 = vmatprep.subr.mxu0 0.0
    %676 = vmatpush1.msra.mxu0 0.0
    %677 = vmatprep.subr.mxu0 0.0
    %678 = vmatpush1.msra.mxu0 0.0
    %679 = vmatprep.subr.mxu0 0.0
    %680 = vmatpush1.msra.mxu0 0.0
    %681 = vmatprep.subr.mxu0 0.0
    %682 = vmatpush1.msra.mxu0 0.0
    %683 = vmatprep.subr.mxu0 0.0
    %684 = vmatpush1.msra.mxu0 0.0
    %685 = vmatprep.mubr.f32.mxu0 0.0
    %686 = vmatmul.mubr.f32.gmra.mrb[0].mxu0 %v619
    %v687 = vpop.f32.mrb[0].mxu0
    %v688 = vadd.f32 0.0, %v687
    %v689 = vpop.f32.mrb[0].mxu0
    %690 = vdwg.mxu0
    %v692 = vcombine.high %v565, %v565
    %v694 = vunpack.c.l.s4 1983009808
    %v695 = vunpack.c.0.s8 %v694
    %v696 = vlaneseq
    %v697 = vshrl.u32 %v696, 7
    %v698 = vsub.s32 %v695, %v697
    %v699 = vrot.slane %v565, %v698
    %v701 = vunpack.c.l.s4 1983009808
    %v702 = vunpack.c.0.s8 %v701
    %v703 = vlaneseq
    %v704 = vshrl.u32 %v703, 7
    %v705 = vsub.s32 %v702, %v704
    %v706 = vrot.slane %v692, %v705
    %v707 = vcombine.high %v699, %v699
    %711 = vmatprep.subr.mxu0 0.0
    %712 = vmatpush1.msra.mxu0 %v566
    %713 = vmatprep.subr.mxu0 0.0
    %714 = vmatpush1.msra.mxu0 %v567
    %715 = vmatprep.subr.mxu0 0.0
    %716 = vmatpush1.msra.mxu0 %v568
    %717 = vmatprep.subr.mxu0 0.0
    %718 = vmatpush1.msra.mxu0 %v569
    %719 = vmatprep.subr.mxu0 0.0
    %720 = vmatpush1.msra.mxu0 %v570
    %721 = vmatprep.subr.mxu0 0.0
    %722 = vmatpush1.msra.mxu0 %v571
    %723 = vmatprep.subr.mxu0 0.0
    %724 = vmatpush1.msra.mxu0 %v572
    %725 = vmatprep.subr.mxu0 0.0
    %726 = vmatpush1.msra.mxu0 %v573
    %727 = vmatprep.subr.mxu0 0.0
    %728 = vmatpush1.msra.mxu0 %v574
    %729 = vmatprep.subr.mxu0 0.0
    %730 = vmatpush1.msra.mxu0 %v575
    %731 = vmatprep.subr.mxu0 0.0
    %732 = vmatpush1.msra.mxu0 %v576
    %733 = vmatprep.subr.mxu0 0.0
    %734 = vmatpush1.msra.mxu0 %v577
    %735 = vmatprep.subr.mxu0 0.0
    %736 = vmatpush1.msra.mxu0 %v578
    %737 = vmatprep.subr.mxu0 0.0
    %738 = vmatpush1.msra.mxu0 %v579
    %739 = vmatprep.subr.mxu0 0.0
    %740 = vmatpush1.msra.mxu0 %v580
    %741 = vmatprep.subr.mxu0 0.0
    %742 = vmatpush1.msra.mxu0 %v581
    %743 = vmatprep.subr.mxu0 0.0
    %744 = vmatpush1.msra.mxu0 %v582
    %745 = vmatprep.subr.mxu0 0.0
    %746 = vmatpush1.msra.mxu0 %v583
    %747 = vmatprep.subr.mxu0 0.0
    %748 = vmatpush1.msra.mxu0 %v584
    %749 = vmatprep.subr.mxu0 0.0
    %750 = vmatpush1.msra.mxu0 %v585
    %751 = vmatprep.subr.mxu0 0.0
    %752 = vmatpush1.msra.mxu0 %v586
    %753 = vmatprep.subr.mxu0 0.0
    %754 = vmatpush1.msra.mxu0 %v587
    %755 = vmatprep.subr.mxu0 0.0
    %756 = vmatpush1.msra.mxu0 %v588
    %757 = vmatprep.subr.mxu0 0.0
    %758 = vmatpush1.msra.mxu0 %v589
    %759 = vmatprep.subr.mxu0 0.0
    %760 = vmatpush1.msra.mxu0 %v590
    %761 = vmatprep.subr.mxu0 0.0
    %762 = vmatpush1.msra.mxu0 %v591
    %763 = vmatprep.subr.mxu0 0.0
    %764 = vmatpush1.msra.mxu0 %v592
    %765 = vmatprep.subr.mxu0 0.0
    %766 = vmatpush1.msra.mxu0 %v593
    %767 = vmatprep.subr.mxu0 0.0
    %768 = vmatpush1.msra.mxu0 %v594
    %769 = vmatprep.subr.mxu0 0.0
    %770 = vmatpush1.msra.mxu0 %v595
    %771 = vmatprep.subr.mxu0 0.0
    %772 = vmatpush1.msra.mxu0 %v596
    %773 = vmatprep.subr.mxu0 0.0
    %774 = vmatpush1.msra.mxu0 %v597
    %775 = vmatprep.mubr.f32.mxu0 %v707
    %776 = vmatmul.mubr.f32.gmra.mrb[0].mxu0 %v699
    %v777 = vpop.f32.mrb[0].mxu0
    %v778 = vadd.f32 %v688, %v777
    %v779 = vpop.f32.mrb[0].mxu0
    %780 = vdwg.mxu0
    %781 = vmatprep.subr.mxu0 0.0
    %782 = vmatpush1.msra.mxu0 %v598
    %783 = vmatprep.subr.mxu0 0.0
    %784 = vmatpush1.msra.mxu0 %v599
    %785 = vmatprep.subr.mxu0 0.0
    %786 = vmatpush1.msra.mxu0 %v600
    %787 = vmatprep.subr.mxu0 0.0
    %788 = vmatpush1.msra.mxu0 %v601
    %789 = vmatprep.subr.mxu0 0.0
    %790 = vmatpush1.msra.mxu0 %v602
    %791 = vmatprep.subr.mxu0 0.0
    %792 = vmatpush1.msra.mxu0 %v603
    %793 = vmatprep.subr.mxu0 0.0
    %794 = vmatpush1.msra.mxu0 %v604
    %795 = vmatprep.subr.mxu0 0.0
    %796 = vmatpush1.msra.mxu0 %v605
    %797 = vmatprep.subr.mxu0 0.0
    %798 = vmatpush1.msra.mxu0 %v606
    %799 = vmatprep.subr.mxu0 0.0
    %800 = vmatpush1.msra.mxu0 %v607
    %801 = vmatprep.subr.mxu0 0.0
    %802 = vmatpush1.msra.mxu0 %v608
    %803 = vmatprep.subr.mxu0 0.0
    %804 = vmatpush1.msra.mxu0 %v609
    %805 = vmatprep.subr.mxu0 0.0
    %806 = vmatpush1.msra.mxu0 %v610
    %807 = vmatprep.subr.mxu0 0.0
    %808 = vmatpush1.msra.mxu0 %v611
    %809 = vmatprep.subr.mxu0 0.0
    %810 = vmatpush1.msra.mxu0 %v612
    %811 = vmatprep.subr.mxu0 0.0
    %812 = vmatpush1.msra.mxu0 %v613
    %813 = vmatprep.subr.mxu0 0.0
    %814 = vmatpush1.msra.mxu0 0.0
    %815 = vmatprep.subr.mxu0 0.0
    %816 = vmatpush1.msra.mxu0 0.0
    %817 = vmatprep.subr.mxu0 0.0
    %818 = vmatpush1.msra.mxu0 0.0
    %819 = vmatprep.subr.mxu0 0.0
    %820 = vmatpush1.msra.mxu0 0.0
    %821 = vmatprep.subr.mxu0 0.0
    %822 = vmatpush1.msra.mxu0 0.0
    %823 = vmatprep.subr.mxu0 0.0
    %824 = vmatpush1.msra.mxu0 0.0
    %825 = vmatprep.subr.mxu0 0.0
    %826 = vmatpush1.msra.mxu0 0.0
    %827 = vmatprep.subr.mxu0 0.0
    %828 = vmatpush1.msra.mxu0 0.0
    %829 = vmatprep.subr.mxu0 0.0
    %830 = vmatpush1.msra.mxu0 0.0
    %831 = vmatprep.subr.mxu0 0.0
    %832 = vmatpush1.msra.mxu0 0.0
    %833 = vmatprep.subr.mxu0 0.0
    %834 = vmatpush1.msra.mxu0 0.0
    %835 = vmatprep.subr.mxu0 0.0
    %836 = vmatpush1.msra.mxu0 0.0
    %837 = vmatprep.subr.mxu0 0.0
    %838 = vmatpush1.msra.mxu0 0.0
    %839 = vmatprep.subr.mxu0 0.0
    %840 = vmatpush1.msra.mxu0 0.0
    %841 = vmatprep.subr.mxu0 0.0
    %842 = vmatpush1.msra.mxu0 0.0
    %843 = vmatprep.subr.mxu0 0.0
    %844 = vmatpush1.msra.mxu0 0.0
    %845 = vmatprep.mubr.f32.mxu0 0.0
    %846 = vmatmul.mubr.f32.gmra.mrb[0].mxu0 %v706
    %v847 = vpop.f32.mrb[0].mxu0
    %v848 = vadd.f32 %v778, %v847
    %v849 = vpop.f32.mrb[0].mxu0
    %850 = vdwg.mxu0
    %v851 = vld [vmem:[%s35] sm:$0xff]
    %v852 = vld [vmem:[%s35 + $0x8] sm:$0xff]
    %v853 = vld [vmem:[%s35 + $0x10] sm:$0xff]
    %v854 = vld [vmem:[%s35 + $0x18] sm:$0xff]
    %v856 = vsel %vm256, %v564, 0
    %858 = vmatprep.subr.mxu0 0.0
    %859 = vmatpush1.msra.mxu0 %v851
    %860 = vmatprep.subr.mxu0 0.0
    %861 = vmatpush1.msra.mxu0 %v852
    %862 = vmatprep.subr.mxu0 0.0
    %863 = vmatpush1.msra.mxu0 %v853
    %864 = vmatprep.subr.mxu0 0.0
    %865 = vmatpush1.msra.mxu0 %v854
    %866 = vmatprep.subr.mxu0 0.0
    %867 = vmatpush1.msra.mxu0 0.0
    %868 = vmatprep.subr.mxu0 0.0
    %869 = vmatpush1.msra.mxu0 0.0
    %870 = vmatprep.subr.mxu0 0.0
    %871 = vmatpush1.msra.mxu0 0.0
    %872 = vmatprep.subr.mxu0 0.0
    %873 = vmatpush1.msra.mxu0 0.0
    %874 = vmatprep.subr.mxu0 0.0
    %875 = vmatpush1.msra.mxu0 0.0
    %876 = vmatprep.subr.mxu0 0.0
    %877 = vmatpush1.msra.mxu0 0.0
    %878 = vmatprep.subr.mxu0 0.0
    %879 = vmatpush1.msra.mxu0 0.0
    %880 = vmatprep.subr.mxu0 0.0
    %881 = vmatpush1.msra.mxu0 0.0
    %882 = vmatprep.subr.mxu0 0.0
    %883 = vmatpush1.msra.mxu0 0.0
    %884 = vmatprep.subr.mxu0 0.0
    %885 = vmatpush1.msra.mxu0 0.0
    %886 = vmatprep.subr.mxu0 0.0
    %887 = vmatpush1.msra.mxu0 0.0
    %888 = vmatprep.subr.mxu0 0.0
    %889 = vmatpush1.msra.mxu0 0.0
    %890 = vmatprep.subr.mxu0 0.0
    %891 = vmatpush1.msra.mxu0 0.0
    %892 = vmatprep.subr.mxu0 0.0
    %893 = vmatpush1.msra.mxu0 0.0
    %894 = vmatprep.subr.mxu0 0.0
    %895 = vmatpush1.msra.mxu0 0.0
    %896 = vmatprep.subr.mxu0 0.0
    %897 = vmatpush1.msra.mxu0 0.0
    %898 = vmatprep.subr.mxu0 0.0
    %899 = vmatpush1.msra.mxu0 0.0
    %900 = vmatprep.subr.mxu0 0.0
    %901 = vmatpush1.msra.mxu0 0.0
    %902 = vmatprep.subr.mxu0 0.0
    %903 = vmatpush1.msra.mxu0 0.0
    %904 = vmatprep.subr.mxu0 0.0
    %905 = vmatpush1.msra.mxu0 0.0
    %906 = vmatprep.subr.mxu0 0.0
    %907 = vmatpush1.msra.mxu0 0.0
    %908 = vmatprep.subr.mxu0 0.0
    %909 = vmatpush1.msra.mxu0 0.0
    %910 = vmatprep.subr.mxu0 0.0
    %911 = vmatpush1.msra.mxu0 0.0
    %912 = vmatprep.subr.mxu0 0.0
    %913 = vmatpush1.msra.mxu0 0.0
    %914 = vmatprep.subr.mxu0 0.0
    %915 = vmatpush1.msra.mxu0 0.0
    %916 = vmatprep.subr.mxu0 0.0
    %917 = vmatpush1.msra.mxu0 0.0
    %918 = vmatprep.subr.mxu0 0.0
    %919 = vmatpush1.msra.mxu0 0.0
    %920 = vmatprep.subr.mxu0 0.0
    %921 = vmatpush1.msra.mxu0 0.0
    %922 = vmatprep.mubr.f32.mxu0 0.0
    %923 = vmatmul.mubr.f32.gmra.mrb[0].mxu0 %v856
    %v924 = vpop.f32.mrb[0].mxu0
    %v925 = vadd.f32 0.0, %v924
    %v926 = vpop.f32.mrb[0].mxu0
    %927 = vdwg.mxu0
    %v928 = vadd.f32 %v848, %v925
    %v929 = vld [vmem:[%s37] sm:$0x1]
    %v931 = vlaneseq
    %v932 = vshrl.u32 %v931, 7
    %v933 = vsub.s32 0, %v932
    %v934 = vrot.slane %v929, %v933
    %v936 = vadd.f32 %v928, %v934
    %v937 = vmax.f32 %v936, 0.0
    %v938 = vld [vmem:[%s39] sm:$0xff]
    %v939 = vld [vmem:[%s39 + $0x8] sm:$0xff]
    %v940 = vld [vmem:[%s39 + $0x10] sm:$0xff]
    %v941 = vld [vmem:[%s39 + $0x18] sm:$0xff]
    %v942 = vld [vmem:[%s41] sm:$0x1]
    %v944 = vlaneseq
    %v945 = vshrl.u32 %v944, 7
    %v946 = vsub.s32 0, %v945
    %v947 = vrot.slane %v942, %v946
    %v950 = vsel %vm256, %v937, 0
    %952 = vmatprep.subr.mxu0 0.0
    %953 = vmatpush1.msra.mxu0 %v938
    %954 = vmatprep.subr.mxu0 0.0
    %955 = vmatpush1.msra.mxu0 %v939
    %956 = vmatprep.subr.mxu0 0.0
    %957 = vmatpush1.msra.mxu0 %v940
    %958 = vmatprep.subr.mxu0 0.0
    %959 = vmatpush1.msra.mxu0 %v941
    %960 = vmatprep.subr.mxu0 0.0
    %961 = vmatpush1.msra.mxu0 0.0
    %962 = vmatprep.subr.mxu0 0.0
    %963 = vmatpush1.msra.mxu0 0.0
    %964 = vmatprep.subr.mxu0 0.0
    %965 = vmatpush1.msra.mxu0 0.0
    %966 = vmatprep.subr.mxu0 0.0
    %967 = vmatpush1.msra.mxu0 0.0
    %968 = vmatprep.subr.mxu0 0.0
    %969 = vmatpush1.msra.mxu0 0.0
    %970 = vmatprep.subr.mxu0 0.0
    %971 = vmatpush1.msra.mxu0 0.0
    %972 = vmatprep.subr.mxu0 0.0
    %973 = vmatpush1.msra.mxu0 0.0
    %974 = vmatprep.subr.mxu0 0.0
    %975 = vmatpush1.msra.mxu0 0.0
    %976 = vmatprep.subr.mxu0 0.0
    %977 = vmatpush1.msra.mxu0 0.0
    %978 = vmatprep.subr.mxu0 0.0
    %979 = vmatpush1.msra.mxu0 0.0
    %980 = vmatprep.subr.mxu0 0.0
    %981 = vmatpush1.msra.mxu0 0.0
    %982 = vmatprep.subr.mxu0 0.0
    %983 = vmatpush1.msra.mxu0 0.0
    %984 = vmatprep.subr.mxu0 0.0
    %985 = vmatpush1.msra.mxu0 0.0
    %986 = vmatprep.subr.mxu0 0.0
    %987 = vmatpush1.msra.mxu0 0.0
    %988 = vmatprep.subr.mxu0 0.0
    %989 = vmatpush1.msra.mxu0 0.0
    %990 = vmatprep.subr.mxu0 0.0
    %991 = vmatpush1.msra.mxu0 0.0
    %992 = vmatprep.subr.mxu0 0.0
    %993 = vmatpush1.msra.mxu0 0.0
    %994 = vmatprep.subr.mxu0 0.0
    %995 = vmatpush1.msra.mxu0 0.0
    %996 = vmatprep.subr.mxu0 0.0
    %997 = vmatpush1.msra.mxu0 0.0
    %998 = vmatprep.subr.mxu0 0.0
    %999 = vmatpush1.msra.mxu0 0.0
    %1000 = vmatprep.subr.mxu0 0.0
    %1001 = vmatpush1.msra.mxu0 0.0
    %1002 = vmatprep.subr.mxu0 0.0
    %1003 = vmatpush1.msra.mxu0 0.0
    %1004 = vmatprep.subr.mxu0 0.0
    %1005 = vmatpush1.msra.mxu0 0.0
    %1006 = vmatprep.subr.mxu0 0.0
    %1007 = vmatpush1.msra.mxu0 0.0
    %1008 = vmatprep.subr.mxu0 0.0
    %1009 = vmatpush1.msra.mxu0 0.0
    %1010 = vmatprep.subr.mxu0 0.0
    %1011 = vmatpush1.msra.mxu0 0.0
    %1012 = vmatprep.subr.mxu0 0.0
    %1013 = vmatpush1.msra.mxu0 0.0
    %1014 = vmatprep.subr.mxu0 0.0
    %1015 = vmatpush1.msra.mxu0 0.0
    %1016 = vmatprep.mubr.f32.mxu0 0.0
    %1017 = vmatmul.mubr.f32.gmra.mrb[0].mxu0 %v950
    %v1018 = vpop.f32.mrb[0].mxu0
    %v1019 = vadd.f32 %v947, %v1018
    %v1020 = vpop.f32.mrb[0].mxu0
    %1021 = vdwg.mxu0
    %v1022 = vld [vmem:[%s43] sm:$0x1]
    %v1023 = vld [vmem:[%s45] sm:$0x1]
    %v1024 = vsel %vm332, %v1019, 0.0
    %1025 = vadd.xlane.f32.xlu0 %v1024
    %v1026 = vpop.xlane.xlu0 %1025
    %v1027 = vmul.f32 %v1026, %v336
    %v1028 = vsub.f32 %v1019, %v1027
    %v1029 = vmul.f32 %v1028, %v1028
    %v1030 = vsel %vm332, %v1029, 0.0
    %1031 = vadd.xlane.f32.xlu0 %v1030
    %v1032 = vpop.xlane.xlu0 %1031
    %v1033 = vmul.f32 %v1032, %v336
    %v1034 = vadd.f32 %v1033, 1e-05
    %v1035 = vrsqrt.pop %v1034
    %v1036 = vmul.f32 %v1028, %v1035
    %v1038 = vlaneseq
    %v1039 = vshrl.u32 %v1038, 7
    %v1040 = vsub.s32 0, %v1039
    %v1041 = vrot.slane %v1022, %v1040
    %v1043 = vmul.f32 %v1036, %v1041
    %v1045 = vlaneseq
    %v1046 = vshrl.u32 %v1045, 7
    %v1047 = vsub.s32 0, %v1046
    %v1048 = vrot.slane %v1023, %v1047
    %v1050 = vadd.f32 %v1043, %v1048
    %v1051 = vmax.f32 %v1050, 0.0
    %v1052 = vld [vmem:[%s47] sm:$0xff]
    %v1053 = vld [vmem:[%s47 + $0x8] sm:$0xff]
    %v1054 = vld [vmem:[%s47 + $0x10] sm:$0xff]
    %v1055 = vld [vmem:[%s47 + $0x18] sm:$0xff]
    %v1056 = vld [vmem:[%s51] sm:$0x1]
    %v1058 = vlaneseq
    %v1059 = vshrl.u32 %v1058, 7
    %v1060 = vsub.s32 0, %v1059
    %v1061 = vrot.slane %v1056, %v1060
    %v1064 = vsel %vm256, %v1051, 0
    %1066 = vmatprep.subr.mxu0 0.0
    %1067 = vmatpush1.msra.mxu0 %v1052
    %1068 = vmatprep.subr.mxu0 0.0
    %1069 = vmatpush1.msra.mxu0 %v1053
    %1070 = vmatprep.subr.mxu0 0.0
    %1071 = vmatpush1.msra.mxu0 %v1054
    %1072 = vmatprep.subr.mxu0 0.0
    %1073 = vmatpush1.msra.mxu0 %v1055
    %1074 = vmatprep.subr.mxu0 0.0
    %1075 = vmatpush1.msra.mxu0 0.0
    %1076 = vmatprep.subr.mxu0 0.0
    %1077 = vmatpush1.msra.mxu0 0.0
    %1078 = vmatprep.subr.mxu0 0.0
    %1079 = vmatpush1.msra.mxu0 0.0
    %1080 = vmatprep.subr.mxu0 0.0
    %1081 = vmatpush1.msra.mxu0 0.0
    %1082 = vmatprep.subr.mxu0 0.0
    %1083 = vmatpush1.msra.mxu0 0.0
    %1084 = vmatprep.subr.mxu0 0.0
    %1085 = vmatpush1.msra.mxu0 0.0
    %1086 = vmatprep.subr.mxu0 0.0
    %1087 = vmatpush1.msra.mxu0 0.0
    %1088 = vmatprep.subr.mxu0 0.0
    %1089 = vmatpush1.msra.mxu0 0.0
    %1090 = vmatprep.subr.mxu0 0.0
    %1091 = vmatpush1.msra.mxu0 0.0
    %1092 = vmatprep.subr.mxu0 0.0
    %1093 = vmatpush1.msra.mxu0 0.0
    %1094 = vmatprep.subr.mxu0 0.0
    %1095 = vmatpush1.msra.mxu0 0.0
    %1096 = vmatprep.subr.mxu0 0.0
    %1097 = vmatpush1.msra.mxu0 0.0
    %1098 = vmatprep.subr.mxu0 0.0
    %1099 = vmatpush1.msra.mxu0 0.0
    %1100 = vmatprep.subr.mxu0 0.0
    %1101 = vmatpush1.msra.mxu0 0.0
    %1102 = vmatprep.subr.mxu0 0.0
    %1103 = vmatpush1.msra.mxu0 0.0
    %1104 = vmatprep.subr.mxu0 0.0
    %1105 = vmatpush1.msra.mxu0 0.0
    %1106 = vmatprep.subr.mxu0 0.0
    %1107 = vmatpush1.msra.mxu0 0.0
    %1108 = vmatprep.subr.mxu0 0.0
    %1109 = vmatpush1.msra.mxu0 0.0
    %1110 = vmatprep.subr.mxu0 0.0
    %1111 = vmatpush1.msra.mxu0 0.0
    %1112 = vmatprep.subr.mxu0 0.0
    %1113 = vmatpush1.msra.mxu0 0.0
    %1114 = vmatprep.subr.mxu0 0.0
    %1115 = vmatpush1.msra.mxu0 0.0
    %1116 = vmatprep.subr.mxu0 0.0
    %1117 = vmatpush1.msra.mxu0 0.0
    %1118 = vmatprep.subr.mxu0 0.0
    %1119 = vmatpush1.msra.mxu0 0.0
    %1120 = vmatprep.subr.mxu0 0.0
    %1121 = vmatpush1.msra.mxu0 0.0
    %1122 = vmatprep.subr.mxu0 0.0
    %1123 = vmatpush1.msra.mxu0 0.0
    %1124 = vmatprep.subr.mxu0 0.0
    %1125 = vmatpush1.msra.mxu0 0.0
    %1126 = vmatprep.subr.mxu0 0.0
    %1127 = vmatpush1.msra.mxu0 0.0
    %1128 = vmatprep.subr.mxu0 0.0
    %1129 = vmatpush1.msra.mxu0 0.0
    %1130 = vmatprep.mubr.f32.mxu0 0.0
    %1131 = vmatmul.mubr.f32.gmra.mrb[0].mxu0 %v1064
    %v1132 = vpop.f32.mrb[0].mxu0
    %v1133 = vadd.f32 %v1061, %v1132
    %v1134 = vpop.f32.mrb[0].mxu0
    %1135 = vdwg.mxu0
    %v1136 = vld [vmem:[%s49] sm:$0xff]
    %v1137 = vld [vmem:[%s49 + $0x8] sm:$0xff]
    %v1138 = vld [vmem:[%s49 + $0x10] sm:$0xff]
    %v1139 = vld [vmem:[%s49 + $0x18] sm:$0xff]
    %v1140 = vld [vmem:[%s53] sm:$0xff]
    %v1141 = vld [vmem:[%s53 + $0x8] sm:$0xff]
    %v1142 = vld [vmem:[%s53 + $0x10] sm:$0xff]
    %v1143 = vld [vmem:[%s53 + $0x18] sm:$0xff]
    %v1144 = vld [vmem:[%s55] sm:$0xff]
    %v1145 = vld [vmem:[%s55 + $0x8] sm:$0xff]
    %v1146 = vld [vmem:[%s55 + $0x10] sm:$0xff]
    %v1147 = vld [vmem:[%s55 + $0x18] sm:$0xff]
    %v1148 = vld [vmem:[%s57] sm:$0x1]
    %v1149 = vlaneseq
    %v1150 = vand.u32 %v1149, 127
    %vm1151 = vcmp.ge.s32.totalorder %v1150, 64
    %vm1152 = vcmp.lt.s32.totalorder %v1150, 96
    %vm1153 = vmand %vm1151, %vm1152
    %v1155 = vsel %vm256, 0.0, 0
    %1157 = vmatprep.subr.mxu0 0.0
    %1158 = vmatpush1.msra.mxu0 %v1136
    %1159 = vmatprep.subr.mxu0 0.0
    %1160 = vmatpush1.msra.mxu0 %v1137
    %1161 = vmatprep.subr.mxu0 0.0
    %1162 = vmatpush1.msra.mxu0 %v1138
    %1163 = vmatprep.subr.mxu0 0.0
    %1164 = vmatpush1.msra.mxu0 %v1139
    %1165 = vmatprep.subr.mxu0 0.0
    %1166 = vmatpush1.msra.mxu0 0.0
    %1167 = vmatprep.subr.mxu0 0.0
    %1168 = vmatpush1.msra.mxu0 0.0
    %1169 = vmatprep.subr.mxu0 0.0
    %1170 = vmatpush1.msra.mxu0 0.0
    %1171 = vmatprep.subr.mxu0 0.0
    %1172 = vmatpush1.msra.mxu0 0.0
    %1173 = vmatprep.subr.mxu0 0.0
    %1174 = vmatpush1.msra.mxu0 0.0
    %1175 = vmatprep.subr.mxu0 0.0
    %1176 = vmatpush1.msra.mxu0 0.0
    %1177 = vmatprep.subr.mxu0 0.0
    %1178 = vmatpush1.msra.mxu0 0.0
    %1179 = vmatprep.subr.mxu0 0.0
    %1180 = vmatpush1.msra.mxu0 0.0
    %1181 = vmatprep.subr.mxu0 0.0
    %1182 = vmatpush1.msra.mxu0 0.0
    %1183 = vmatprep.subr.mxu0 0.0
    %1184 = vmatpush1.msra.mxu0 0.0
    %1185 = vmatprep.subr.mxu0 0.0
    %1186 = vmatpush1.msra.mxu0 0.0
    %1187 = vmatprep.subr.mxu0 0.0
    %1188 = vmatpush1.msra.mxu0 0.0
    %1189 = vmatprep.subr.mxu0 0.0
    %1190 = vmatpush1.msra.mxu0 0.0
    %1191 = vmatprep.subr.mxu0 0.0
    %1192 = vmatpush1.msra.mxu0 0.0
    %1193 = vmatprep.subr.mxu0 0.0
    %1194 = vmatpush1.msra.mxu0 0.0
    %1195 = vmatprep.subr.mxu0 0.0
    %1196 = vmatpush1.msra.mxu0 0.0
    %1197 = vmatprep.subr.mxu0 0.0
    %1198 = vmatpush1.msra.mxu0 0.0
    %1199 = vmatprep.subr.mxu0 0.0
    %1200 = vmatpush1.msra.mxu0 0.0
    %1201 = vmatprep.subr.mxu0 0.0
    %1202 = vmatpush1.msra.mxu0 0.0
    %1203 = vmatprep.subr.mxu0 0.0
    %1204 = vmatpush1.msra.mxu0 0.0
    %1205 = vmatprep.subr.mxu0 0.0
    %1206 = vmatpush1.msra.mxu0 0.0
    %1207 = vmatprep.subr.mxu0 0.0
    %1208 = vmatpush1.msra.mxu0 0.0
    %1209 = vmatprep.subr.mxu0 0.0
    %1210 = vmatpush1.msra.mxu0 0.0
    %1211 = vmatprep.subr.mxu0 0.0
    %1212 = vmatpush1.msra.mxu0 0.0
    %1213 = vmatprep.subr.mxu0 0.0
    %1214 = vmatpush1.msra.mxu0 0.0
    %1215 = vmatprep.subr.mxu0 0.0
    %1216 = vmatpush1.msra.mxu0 0.0
    %1217 = vmatprep.subr.mxu0 0.0
    %1218 = vmatpush1.msra.mxu0 0.0
    %1219 = vmatprep.subr.mxu0 0.0
    %1220 = vmatpush1.msra.mxu0 0.0
    %1221 = vmatprep.mubr.f32.mxu0 0.0
    %1222 = vmatmul.mubr.f32.gmra.mrb[0].mxu0 %v1155
    %v1223 = vpop.f32.mrb[0].mxu0
    %v1224 = vadd.f32 0.0, %v1223
    %v1225 = vpop.f32.mrb[0].mxu0
    %1226 = vdwg.mxu0
    %v1227 = vadd.f32 %v1133, %v1224
    %v1228 = vtanh.pop %v1227
    %v1229 = vxor.u32 %v1227, 2147483648
    %v1230 = vmul.f32 %v1229, 1.442695
    %v1231 = vpow.pop %v1230
    %v1232 = vadd.f32 %v1231, 1.0
    %v1233 = vrcp.pop %v1232
    %v1234 = vmul.f32 1.0, %v1233
    %v1235 = vsel %vm1153, %v1228, %v1234
    %v1236 = vmul.f32 %v1235, 0.0
    %1238 = vrot.lane.b32.xlu0 %v1235, 64
    %v1239 = vpop.permute.xlu0 %1238
    %v1241 = vmul.f32 %v1235, %v1239
    %1243 = vrot.lane.b32.xlu0 %v1241, 32
    %v1244 = vpop.permute.xlu0 %1243
    %v1246 = vadd.f32 %v1236, %v1244
    %v1247 = vtanh.pop %v1246
    %1249 = vrot.lane.b32.xlu0 %v1247, 64
    %v1250 = vpop.permute.xlu0 %1249
    %v1252 = vmul.f32 %v1235, %v1250
    %v1254 = vlaneseq
    %v1255 = vshrl.u32 %v1254, 7
    %v1256 = vsub.s32 0, %v1255
    %v1257 = vrot.slane %v1148, %v1256
    %1260 = vrot.lane.b32.xlu0 %v1252, 32
    %v1261 = vpop.permute.xlu0 %1260
    %v1262 = vsel %vm256, %v1261, 0
    %1264 = vmatprep.subr.mxu0 0.0
    %1265 = vmatpush1.msra.mxu0 %v1140
    %1266 = vmatprep.subr.mxu0 0.0
    %1267 = vmatpush1.msra.mxu0 %v1141
    %1268 = vmatprep.subr.mxu0 0.0
    %1269 = vmatpush1.msra.mxu0 %v1142
    %1270 = vmatprep.subr.mxu0 0.0
    %1271 = vmatpush1.msra.mxu0 %v1143
    %1272 = vmatprep.subr.mxu0 0.0
    %1273 = vmatpush1.msra.mxu0 0.0
    %1274 = vmatprep.subr.mxu0 0.0
    %1275 = vmatpush1.msra.mxu0 0.0
    %1276 = vmatprep.subr.mxu0 0.0
    %1277 = vmatpush1.msra.mxu0 0.0
    %1278 = vmatprep.subr.mxu0 0.0
    %1279 = vmatpush1.msra.mxu0 0.0
    %1280 = vmatprep.subr.mxu0 0.0
    %1281 = vmatpush1.msra.mxu0 0.0
    %1282 = vmatprep.subr.mxu0 0.0
    %1283 = vmatpush1.msra.mxu0 0.0
    %1284 = vmatprep.subr.mxu0 0.0
    %1285 = vmatpush1.msra.mxu0 0.0
    %1286 = vmatprep.subr.mxu0 0.0
    %1287 = vmatpush1.msra.mxu0 0.0
    %1288 = vmatprep.subr.mxu0 0.0
    %1289 = vmatpush1.msra.mxu0 0.0
    %1290 = vmatprep.subr.mxu0 0.0
    %1291 = vmatpush1.msra.mxu0 0.0
    %1292 = vmatprep.subr.mxu0 0.0
    %1293 = vmatpush1.msra.mxu0 0.0
    %1294 = vmatprep.subr.mxu0 0.0
    %1295 = vmatpush1.msra.mxu0 0.0
    %1296 = vmatprep.subr.mxu0 0.0
    %1297 = vmatpush1.msra.mxu0 0.0
    %1298 = vmatprep.subr.mxu0 0.0
    %1299 = vmatpush1.msra.mxu0 0.0
    %1300 = vmatprep.subr.mxu0 0.0
    %1301 = vmatpush1.msra.mxu0 0.0
    %1302 = vmatprep.subr.mxu0 0.0
    %1303 = vmatpush1.msra.mxu0 0.0
    %1304 = vmatprep.subr.mxu0 0.0
    %1305 = vmatpush1.msra.mxu0 0.0
    %1306 = vmatprep.subr.mxu0 0.0
    %1307 = vmatpush1.msra.mxu0 0.0
    %1308 = vmatprep.subr.mxu0 0.0
    %1309 = vmatpush1.msra.mxu0 0.0
    %1310 = vmatprep.subr.mxu0 0.0
    %1311 = vmatpush1.msra.mxu0 0.0
    %1312 = vmatprep.subr.mxu0 0.0
    %1313 = vmatpush1.msra.mxu0 0.0
    %1314 = vmatprep.subr.mxu0 0.0
    %1315 = vmatpush1.msra.mxu0 0.0
    %1316 = vmatprep.subr.mxu0 0.0
    %1317 = vmatpush1.msra.mxu0 0.0
    %1318 = vmatprep.subr.mxu0 0.0
    %1319 = vmatpush1.msra.mxu0 0.0
    %1320 = vmatprep.subr.mxu0 0.0
    %1321 = vmatpush1.msra.mxu0 0.0
    %1322 = vmatprep.subr.mxu0 0.0
    %1323 = vmatpush1.msra.mxu0 0.0
    %1324 = vmatprep.subr.mxu0 0.0
    %1325 = vmatpush1.msra.mxu0 0.0
    %1326 = vmatprep.subr.mxu0 0.0
    %1327 = vmatpush1.msra.mxu0 0.0
    %1328 = vmatprep.mubr.f32.mxu0 0.0
    %1329 = vmatmul.mubr.f32.gmra.mrb[0].mxu0 %v1262
    %v1330 = vpop.f32.mrb[0].mxu0
    %v1331 = vadd.f32 %v1257, %v1330
    %v1332 = vpop.f32.mrb[0].mxu0
    %1333 = vdwg.mxu0
    %1334 = vmatprep.subr.mxu0 0.0
    %1335 = vmatpush1.msra.mxu0 %v1144
    %1336 = vmatprep.subr.mxu0 0.0
    %1337 = vmatpush1.msra.mxu0 %v1145
    %1338 = vmatprep.subr.mxu0 0.0
    %1339 = vmatpush1.msra.mxu0 %v1146
    %1340 = vmatprep.subr.mxu0 0.0
    %1341 = vmatpush1.msra.mxu0 %v1147
    %1342 = vmatprep.subr.mxu0 0.0
    %1343 = vmatpush1.msra.mxu0 0.0
    %1344 = vmatprep.subr.mxu0 0.0
    %1345 = vmatpush1.msra.mxu0 0.0
    %1346 = vmatprep.subr.mxu0 0.0
    %1347 = vmatpush1.msra.mxu0 0.0
    %1348 = vmatprep.subr.mxu0 0.0
    %1349 = vmatpush1.msra.mxu0 0.0
    %1350 = vmatprep.subr.mxu0 0.0
    %1351 = vmatpush1.msra.mxu0 0.0
    %1352 = vmatprep.subr.mxu0 0.0
    %1353 = vmatpush1.msra.mxu0 0.0
    %1354 = vmatprep.subr.mxu0 0.0
    %1355 = vmatpush1.msra.mxu0 0.0
    %1356 = vmatprep.subr.mxu0 0.0
    %1357 = vmatpush1.msra.mxu0 0.0
    %1358 = vmatprep.subr.mxu0 0.0
    %1359 = vmatpush1.msra.mxu0 0.0
    %1360 = vmatprep.subr.mxu0 0.0
    %1361 = vmatpush1.msra.mxu0 0.0
    %1362 = vmatprep.subr.mxu0 0.0
    %1363 = vmatpush1.msra.mxu0 0.0
    %1364 = vmatprep.subr.mxu0 0.0
    %1365 = vmatpush1.msra.mxu0 0.0
    %1366 = vmatprep.subr.mxu0 0.0
    %1367 = vmatpush1.msra.mxu0 0.0
    %1368 = vmatprep.subr.mxu0 0.0
    %1369 = vmatpush1.msra.mxu0 0.0
    %1370 = vmatprep.subr.mxu0 0.0
    %1371 = vmatpush1.msra.mxu0 0.0
    %1372 = vmatprep.subr.mxu0 0.0
    %1373 = vmatpush1.msra.mxu0 0.0
    %1374 = vmatprep.subr.mxu0 0.0
    %1375 = vmatpush1.msra.mxu0 0.0
    %1376 = vmatprep.subr.mxu0 0.0
    %1377 = vmatpush1.msra.mxu0 0.0
    %1378 = vmatprep.subr.mxu0 0.0
    %1379 = vmatpush1.msra.mxu0 0.0
    %1380 = vmatprep.subr.mxu0 0.0
    %1381 = vmatpush1.msra.mxu0 0.0
    %1382 = vmatprep.subr.mxu0 0.0
    %1383 = vmatpush1.msra.mxu0 0.0
    %1384 = vmatprep.subr.mxu0 0.0
    %1385 = vmatpush1.msra.mxu0 0.0
    %1386 = vmatprep.subr.mxu0 0.0
    %1387 = vmatpush1.msra.mxu0 0.0
    %1388 = vmatprep.subr.mxu0 0.0
    %1389 = vmatpush1.msra.mxu0 0.0
    %1390 = vmatprep.subr.mxu0 0.0
    %1391 = vmatpush1.msra.mxu0 0.0
    %1392 = vmatprep.subr.mxu0 0.0
    %1393 = vmatpush1.msra.mxu0 0.0
    %1394 = vmatprep.subr.mxu0 0.0
    %1395 = vmatpush1.msra.mxu0 0.0
    %1396 = vmatprep.subr.mxu0 0.0
    %1397 = vmatpush1.msra.mxu0 0.0
    %1398 = vmatprep.mubr.f32.mxu0 0.0
    %1399 = vmatmul.mubr.f32.gmra.mrb[0].mxu0 %v1155
    %v1400 = vpop.f32.mrb[0].mxu0
    %v1401 = vadd.f32 0.0, %v1400
    %v1402 = vpop.f32.mrb[0].mxu0
    %1403 = vdwg.mxu0
    %v1404 = vadd.f32 %v1331, %v1401
    %v1405 = vtanh.pop %v1404
    %v1406 = vxor.u32 %v1404, 2147483648
    %v1407 = vmul.f32 %v1406, 1.442695
    %v1408 = vpow.pop %v1407
    %v1409 = vadd.f32 %v1408, 1.0
    %v1410 = vrcp.pop %v1409
    %v1411 = vmul.f32 1.0, %v1410
    %v1412 = vsel %vm1153, %v1405, %v1411
    %v1413 = vmul.f32 %v1412, 0.0
    %1415 = vrot.lane.b32.xlu0 %v1412, 64
    %v1416 = vpop.permute.xlu0 %1415
    %v1418 = vmul.f32 %v1412, %v1416
    %1420 = vrot.lane.b32.xlu0 %v1418, 32
    %v1421 = vpop.permute.xlu0 %1420
    %v1423 = vadd.f32 %v1413, %v1421
    %v1424 = vtanh.pop %v1423
    %1426 = vrot.lane.b32.xlu0 %v1424, 64
    %v1427 = vpop.permute.xlu0 %1426
    %v1429 = vmul.f32 %v1412, %v1427
    %1430 = vmatprep.subr.mxu0 0.0
    %1431 = vmatpush1.msra.mxu0 %v1136
    %1432 = vmatprep.subr.mxu0 0.0
    %1433 = vmatpush1.msra.mxu0 %v1137
    %1434 = vmatprep.subr.mxu0 0.0
    %1435 = vmatpush1.msra.mxu0 %v1138
    %1436 = vmatprep.subr.mxu0 0.0
    %1437 = vmatpush1.msra.mxu0 %v1139
    %1438 = vmatprep.subr.mxu0 0.0
    %1439 = vmatpush1.msra.mxu0 0.0
    %1440 = vmatprep.subr.mxu0 0.0
    %1441 = vmatpush1.msra.mxu0 0.0
    %1442 = vmatprep.subr.mxu0 0.0
    %1443 = vmatpush1.msra.mxu0 0.0
    %1444 = vmatprep.subr.mxu0 0.0
    %1445 = vmatpush1.msra.mxu0 0.0
    %1446 = vmatprep.subr.mxu0 0.0
    %1447 = vmatpush1.msra.mxu0 0.0
    %1448 = vmatprep.subr.mxu0 0.0
    %1449 = vmatpush1.msra.mxu0 0.0
    %1450 = vmatprep.subr.mxu0 0.0
    %1451 = vmatpush1.msra.mxu0 0.0
    %1452 = vmatprep.subr.mxu0 0.0
    %1453 = vmatpush1.msra.mxu0 0.0
    %1454 = vmatprep.subr.mxu0 0.0
    %1455 = vmatpush1.msra.mxu0 0.0
    %1456 = vmatprep.subr.mxu0 0.0
    %1457 = vmatpush1.msra.mxu0 0.0
    %1458 = vmatprep.subr.mxu0 0.0
    %1459 = vmatpush1.msra.mxu0 0.0
    %1460 = vmatprep.subr.mxu0 0.0
    %1461 = vmatpush1.msra.mxu0 0.0
    %1462 = vmatprep.subr.mxu0 0.0
    %1463 = vmatpush1.msra.mxu0 0.0
    %1464 = vmatprep.subr.mxu0 0.0
    %1465 = vmatpush1.msra.mxu0 0.0
    %1466 = vmatprep.subr.mxu0 0.0
    %1467 = vmatpush1.msra.mxu0 0.0
    %1468 = vmatprep.subr.mxu0 0.0
    %1469 = vmatpush1.msra.mxu0 0.0
    %1470 = vmatprep.subr.mxu0 0.0
    %1471 = vmatpush1.msra.mxu0 0.0
    %1472 = vmatprep.subr.mxu0 0.0
    %1473 = vmatpush1.msra.mxu0 0.0
    %1474 = vmatprep.subr.mxu0 0.0
    %1475 = vmatpush1.msra.mxu0 0.0
    %1476 = vmatprep.subr.mxu0 0.0
    %1477 = vmatpush1.msra.mxu0 0.0
    %1478 = vmatprep.subr.mxu0 0.0
    %1479 = vmatpush1.msra.mxu0 0.0
    %1480 = vmatprep.subr.mxu0 0.0
    %1481 = vmatpush1.msra.mxu0 0.0
    %1482 = vmatprep.subr.mxu0 0.0
    %1483 = vmatpush1.msra.mxu0 0.0
    %1484 = vmatprep.subr.mxu0 0.0
    %1485 = vmatpush1.msra.mxu0 0.0
    %1486 = vmatprep.subr.mxu0 0.0
    %1487 = vmatpush1.msra.mxu0 0.0
    %1488 = vmatprep.subr.mxu0 0.0
    %1489 = vmatpush1.msra.mxu0 0.0
    %1490 = vmatprep.subr.mxu0 0.0
    %1491 = vmatpush1.msra.mxu0 0.0
    %1492 = vmatprep.subr.mxu0 0.0
    %1493 = vmatpush1.msra.mxu0 0.0
    %1494 = vmatprep.mubr.f32.mxu0 0.0
    %1495 = vmatmul.mubr.f32.gmra.mrb[0].mxu0 %v1262
    %v1496 = vpop.f32.mrb[0].mxu0
    %v1497 = vadd.f32 0.0, %v1496
    %v1498 = vpop.f32.mrb[0].mxu0
    %1499 = vdwg.mxu0
    %v1500 = vadd.f32 %v1133, %v1497
    %v1501 = vtanh.pop %v1500
    %v1502 = vxor.u32 %v1500, 2147483648
    %v1503 = vmul.f32 %v1502, 1.442695
    %v1504 = vpow.pop %v1503
    %v1505 = vadd.f32 %v1504, 1.0
    %v1506 = vrcp.pop %v1505
    %v1507 = vmul.f32 1.0, %v1506
    %v1508 = vsel %vm1153, %v1501, %v1507
    %v1509 = vmul.f32 %v1508, %v1246
    %1511 = vrot.lane.b32.xlu0 %v1508, 64
    %v1512 = vpop.permute.xlu0 %1511
    %v1514 = vmul.f32 %v1508, %v1512
    %1516 = vrot.lane.b32.xlu0 %v1514, 32
    %v1517 = vpop.permute.xlu0 %1516
    %v1519 = vadd.f32 %v1509, %v1517
    %v1520 = vtanh.pop %v1519
    %1522 = vrot.lane.b32.xlu0 %v1520, 64
    %v1523 = vpop.permute.xlu0 %1522
    %v1525 = vmul.f32 %v1508, %v1523
    %1527 = vrot.lane.b32.xlu0 %v1525, 32
    %v1528 = vpop.permute.xlu0 %1527
    %v1529 = vsel %vm256, %v1528, 0
    %1531 = vmatprep.subr.mxu0 0.0
    %1532 = vmatpush1.msra.mxu0 %v1140
    %1533 = vmatprep.subr.mxu0 0.0
    %1534 = vmatpush1.msra.mxu0 %v1141
    %1535 = vmatprep.subr.mxu0 0.0
    %1536 = vmatpush1.msra.mxu0 %v1142
    %1537 = vmatprep.subr.mxu0 0.0
    %1538 = vmatpush1.msra.mxu0 %v1143
    %1539 = vmatprep.subr.mxu0 0.0
    %1540 = vmatpush1.msra.mxu0 0.0
    %1541 = vmatprep.subr.mxu0 0.0
    %1542 = vmatpush1.msra.mxu0 0.0
    %1543 = vmatprep.subr.mxu0 0.0
    %1544 = vmatpush1.msra.mxu0 0.0
    %1545 = vmatprep.subr.mxu0 0.0
    %1546 = vmatpush1.msra.mxu0 0.0
    %1547 = vmatprep.subr.mxu0 0.0
    %1548 = vmatpush1.msra.mxu0 0.0
    %1549 = vmatprep.subr.mxu0 0.0
    %1550 = vmatpush1.msra.mxu0 0.0
    %1551 = vmatprep.subr.mxu0 0.0
    %1552 = vmatpush1.msra.mxu0 0.0
    %1553 = vmatprep.subr.mxu0 0.0
    %1554 = vmatpush1.msra.mxu0 0.0
    %1555 = vmatprep.subr.mxu0 0.0
    %1556 = vmatpush1.msra.mxu0 0.0
    %1557 = vmatprep.subr.mxu0 0.0
    %1558 = vmatpush1.msra.mxu0 0.0
    %1559 = vmatprep.subr.mxu0 0.0
    %1560 = vmatpush1.msra.mxu0 0.0
    %1561 = vmatprep.subr.mxu0 0.0
    %1562 = vmatpush1.msra.mxu0 0.0
    %1563 = vmatprep.subr.mxu0 0.0
    %1564 = vmatpush1.msra.mxu0 0.0
    %1565 = vmatprep.subr.mxu0 0.0
    %1566 = vmatpush1.msra.mxu0 0.0
    %1567 = vmatprep.subr.mxu0 0.0
    %1568 = vmatpush1.msra.mxu0 0.0
    %1569 = vmatprep.subr.mxu0 0.0
    %1570 = vmatpush1.msra.mxu0 0.0
    %1571 = vmatprep.subr.mxu0 0.0
    %1572 = vmatpush1.msra.mxu0 0.0
    %1573 = vmatprep.subr.mxu0 0.0
    %1574 = vmatpush1.msra.mxu0 0.0
    %1575 = vmatprep.subr.mxu0 0.0
    %1576 = vmatpush1.msra.mxu0 0.0
    %1577 = vmatprep.subr.mxu0 0.0
    %1578 = vmatpush1.msra.mxu0 0.0
    %1579 = vmatprep.subr.mxu0 0.0
    %1580 = vmatpush1.msra.mxu0 0.0
    %1581 = vmatprep.subr.mxu0 0.0
    %1582 = vmatpush1.msra.mxu0 0.0
    %1583 = vmatprep.subr.mxu0 0.0
    %1584 = vmatpush1.msra.mxu0 0.0
    %1585 = vmatprep.subr.mxu0 0.0
    %1586 = vmatpush1.msra.mxu0 0.0
    %1587 = vmatprep.subr.mxu0 0.0
    %1588 = vmatpush1.msra.mxu0 0.0
    %1589 = vmatprep.subr.mxu0 0.0
    %1590 = vmatpush1.msra.mxu0 0.0
    %1591 = vmatprep.subr.mxu0 0.0
    %1592 = vmatpush1.msra.mxu0 0.0
    %1593 = vmatprep.subr.mxu0 0.0
    %1594 = vmatpush1.msra.mxu0 0.0
    %1595 = vmatprep.mubr.f32.mxu0 0.0
    %1596 = vmatmul.mubr.f32.gmra.mrb[0].mxu0 %v1529
    %v1597 = vpop.f32.mrb[0].mxu0
    %v1598 = vadd.f32 %v1257, %v1597
    %v1599 = vpop.f32.mrb[0].mxu0
    %1600 = vdwg.mxu0
    %1602 = vrot.lane.b32.xlu0 %v1429, 32
    %v1603 = vpop.permute.xlu0 %1602
    %v1604 = vsel %vm256, %v1603, 0
    %1606 = vmatprep.subr.mxu0 0.0
    %1607 = vmatpush1.msra.mxu0 %v1144
    %1608 = vmatprep.subr.mxu0 0.0
    %1609 = vmatpush1.msra.mxu0 %v1145
    %1610 = vmatprep.subr.mxu0 0.0
    %1611 = vmatpush1.msra.mxu0 %v1146
    %1612 = vmatprep.subr.mxu0 0.0
    %1613 = vmatpush1.msra.mxu0 %v1147
    %1614 = vmatprep.subr.mxu0 0.0
    %1615 = vmatpush1.msra.mxu0 0.0
    %1616 = vmatprep.subr.mxu0 0.0
    %1617 = vmatpush1.msra.mxu0 0.0
    %1618 = vmatprep.subr.mxu0 0.0
    %1619 = vmatpush1.msra.mxu0 0.0
    %1620 = vmatprep.subr.mxu0 0.0
    %1621 = vmatpush1.msra.mxu0 0.0
    %1622 = vmatprep.subr.mxu0 0.0
    %1623 = vmatpush1.msra.mxu0 0.0
    %1624 = vmatprep.subr.mxu0 0.0
    %1625 = vmatpush1.msra.mxu0 0.0
    %1626 = vmatprep.subr.mxu0 0.0
    %1627 = vmatpush1.msra.mxu0 0.0
    %1628 = vmatprep.subr.mxu0 0.0
    %1629 = vmatpush1.msra.mxu0 0.0
    %1630 = vmatprep.subr.mxu0 0.0
    %1631 = vmatpush1.msra.mxu0 0.0
    %1632 = vmatprep.subr.mxu0 0.0
    %1633 = vmatpush1.msra.mxu0 0.0
    %1634 = vmatprep.subr.mxu0 0.0
    %1635 = vmatpush1.msra.mxu0 0.0
    %1636 = vmatprep.subr.mxu0 0.0
    %1637 = vmatpush1.msra.mxu0 0.0
    %1638 = vmatprep.subr.mxu0 0.0
    %1639 = vmatpush1.msra.mxu0 0.0
    %1640 = vmatprep.subr.mxu0 0.0
    %1641 = vmatpush1.msra.mxu0 0.0
    %1642 = vmatprep.subr.mxu0 0.0
    %1643 = vmatpush1.msra.mxu0 0.0
    %1644 = vmatprep.subr.mxu0 0.0
    %1645 = vmatpush1.msra.mxu0 0.0
    %1646 = vmatprep.subr.mxu0 0.0
    %1647 = vmatpush1.msra.mxu0 0.0
    %1648 = vmatprep.subr.mxu0 0.0
    %1649 = vmatpush1.msra.mxu0 0.0
    %1650 = vmatprep.subr.mxu0 0.0
    %1651 = vmatpush1.msra.mxu0 0.0
    %1652 = vmatprep.subr.mxu0 0.0
    %1653 = vmatpush1.msra.mxu0 0.0
    %1654 = vmatprep.subr.mxu0 0.0
    %1655 = vmatpush1.msra.mxu0 0.0
    %1656 = vmatprep.subr.mxu0 0.0
    %1657 = vmatpush1.msra.mxu0 0.0
    %1658 = vmatprep.subr.mxu0 0.0
    %1659 = vmatpush1.msra.mxu0 0.0
    %1660 = vmatprep.subr.mxu0 0.0
    %1661 = vmatpush1.msra.mxu0 0.0
    %1662 = vmatprep.subr.mxu0 0.0
    %1663 = vmatpush1.msra.mxu0 0.0
    %1664 = vmatprep.subr.mxu0 0.0
    %1665 = vmatpush1.msra.mxu0 0.0
    %1666 = vmatprep.subr.mxu0 0.0
    %1667 = vmatpush1.msra.mxu0 0.0
    %1668 = vmatprep.subr.mxu0 0.0
    %1669 = vmatpush1.msra.mxu0 0.0
    %1670 = vmatprep.mubr.f32.mxu0 0.0
    %1671 = vmatmul.mubr.f32.gmra.mrb[0].mxu0 %v1604
    %v1672 = vpop.f32.mrb[0].mxu0
    %v1673 = vadd.f32 0.0, %v1672
    %v1674 = vpop.f32.mrb[0].mxu0
    %1675 = vdwg.mxu0
    %v1676 = vadd.f32 %v1598, %v1673
    %v1677 = vtanh.pop %v1676
    %v1678 = vxor.u32 %v1676, 2147483648
    %v1679 = vmul.f32 %v1678, 1.442695
    %v1680 = vpow.pop %v1679
    %v1681 = vadd.f32 %v1680, 1.0
    %v1682 = vrcp.pop %v1681
    %v1683 = vmul.f32 1.0, %v1682
    %v1684 = vsel %vm1153, %v1677, %v1683
    %v1685 = vmul.f32 %v1684, %v1423
    %1687 = vrot.lane.b32.xlu0 %v1684, 64
    %v1688 = vpop.permute.xlu0 %1687
    %v1690 = vmul.f32 %v1684, %v1688
    %1692 = vrot.lane.b32.xlu0 %v1690, 32
    %v1693 = vpop.permute.xlu0 %1692
    %v1695 = vadd.f32 %v1685, %v1693
    %v1696 = vtanh.pop %v1695
    %1698 = vrot.lane.b32.xlu0 %v1696, 64
    %v1699 = vpop.permute.xlu0 %1698
    %v1701 = vmul.f32 %v1684, %v1699
    %1702 = vmatprep.subr.mxu0 0.0
    %1703 = vmatpush1.msra.mxu0 %v1136
    %1704 = vmatprep.subr.mxu0 0.0
    %1705 = vmatpush1.msra.mxu0 %v1137
    %1706 = vmatprep.subr.mxu0 0.0
    %1707 = vmatpush1.msra.mxu0 %v1138
    %1708 = vmatprep.subr.mxu0 0.0
    %1709 = vmatpush1.msra.mxu0 %v1139
    %1710 = vmatprep.subr.mxu0 0.0
    %1711 = vmatpush1.msra.mxu0 0.0
    %1712 = vmatprep.subr.mxu0 0.0
    %1713 = vmatpush1.msra.mxu0 0.0
    %1714 = vmatprep.subr.mxu0 0.0
    %1715 = vmatpush1.msra.mxu0 0.0
    %1716 = vmatprep.subr.mxu0 0.0
    %1717 = vmatpush1.msra.mxu0 0.0
    %1718 = vmatprep.subr.mxu0 0.0
    %1719 = vmatpush1.msra.mxu0 0.0
    %1720 = vmatprep.subr.mxu0 0.0
    %1721 = vmatpush1.msra.mxu0 0.0
    %1722 = vmatprep.subr.mxu0 0.0
    %1723 = vmatpush1.msra.mxu0 0.0
    %1724 = vmatprep.subr.mxu0 0.0
    %1725 = vmatpush1.msra.mxu0 0.0
    %1726 = vmatprep.subr.mxu0 0.0
    %1727 = vmatpush1.msra.mxu0 0.0
    %1728 = vmatprep.subr.mxu0 0.0
    %1729 = vmatpush1.msra.mxu0 0.0
    %1730 = vmatprep.subr.mxu0 0.0
    %1731 = vmatpush1.msra.mxu0 0.0
    %1732 = vmatprep.subr.mxu0 0.0
    %1733 = vmatpush1.msra.mxu0 0.0
    %1734 = vmatprep.subr.mxu0 0.0
    %1735 = vmatpush1.msra.mxu0 0.0
    %1736 = vmatprep.subr.mxu0 0.0
    %1737 = vmatpush1.msra.mxu0 0.0
    %1738 = vmatprep.subr.mxu0 0.0
    %1739 = vmatpush1.msra.mxu0 0.0
    %1740 = vmatprep.subr.mxu0 0.0
    %1741 = vmatpush1.msra.mxu0 0.0
    %1742 = vmatprep.subr.mxu0 0.0
    %1743 = vmatpush1.msra.mxu0 0.0
    %1744 = vmatprep.subr.mxu0 0.0
    %1745 = vmatpush1.msra.mxu0 0.0
    %1746 = vmatprep.subr.mxu0 0.0
    %1747 = vmatpush1.msra.mxu0 0.0
    %1748 = vmatprep.subr.mxu0 0.0
    %1749 = vmatpush1.msra.mxu0 0.0
    %1750 = vmatprep.subr.mxu0 0.0
    %1751 = vmatpush1.msra.mxu0 0.0
    %1752 = vmatprep.subr.mxu0 0.0
    %1753 = vmatpush1.msra.mxu0 0.0
    %1754 = vmatprep.subr.mxu0 0.0
    %1755 = vmatpush1.msra.mxu0 0.0
    %1756 = vmatprep.subr.mxu0 0.0
    %1757 = vmatpush1.msra.mxu0 0.0
    %1758 = vmatprep.subr.mxu0 0.0
    %1759 = vmatpush1.msra.mxu0 0.0
    %1760 = vmatprep.subr.mxu0 0.0
    %1761 = vmatpush1.msra.mxu0 0.0
    %1762 = vmatprep.subr.mxu0 0.0
    %1763 = vmatpush1.msra.mxu0 0.0
    %1764 = vmatprep.subr.mxu0 0.0
    %1765 = vmatpush1.msra.mxu0 0.0
    %1766 = vmatprep.mubr.f32.mxu0 0.0
    %1767 = vmatmul.mubr.f32.gmra.mrb[0].mxu0 %v1529
    %v1768 = vpop.f32.mrb[0].mxu0
    %v1769 = vadd.f32 0.0, %v1768
    %v1770 = vpop.f32.mrb[0].mxu0
    %1771 = vdwg.mxu0
    %v1772 = vadd.f32 %v1133, %v1769
    %v1773 = vtanh.pop %v1772
    %v1774 = vxor.u32 %v1772, 2147483648
    %v1775 = vmul.f32 %v1774, 1.442695
    %v1776 = vpow.pop %v1775
    %v1777 = vadd.f32 %v1776, 1.0
    %v1778 = vrcp.pop %v1777
    %v1779 = vmul.f32 1.0, %v1778
    %v1780 = vsel %vm1153, %v1773, %v1779
    %v1781 = vmul.f32 %v1780, %v1519
    %1783 = vrot.lane.b32.xlu0 %v1780, 64
    %v1784 = vpop.permute.xlu0 %1783
    %v1786 = vmul.f32 %v1780, %v1784
    %1788 = vrot.lane.b32.xlu0 %v1786, 32
    %v1789 = vpop.permute.xlu0 %1788
    %v1791 = vadd.f32 %v1781, %v1789
    %v1792 = vtanh.pop %v1791
    %1794 = vrot.lane.b32.xlu0 %v1792, 64
    %v1795 = vpop.permute.xlu0 %1794
    %v1797 = vmul.f32 %v1780, %v1795
    %1799 = vrot.lane.b32.xlu0 %v1797, 32
    %v1800 = vpop.permute.xlu0 %1799
    %v1801 = vsel %vm256, %v1800, 0
    %1803 = vmatprep.subr.mxu0 0.0
    %1804 = vmatpush1.msra.mxu0 %v1140
    %1805 = vmatprep.subr.mxu0 0.0
    %1806 = vmatpush1.msra.mxu0 %v1141
    %1807 = vmatprep.subr.mxu0 0.0
    %1808 = vmatpush1.msra.mxu0 %v1142
    %1809 = vmatprep.subr.mxu0 0.0
    %1810 = vmatpush1.msra.mxu0 %v1143
    %1811 = vmatprep.subr.mxu0 0.0
    %1812 = vmatpush1.msra.mxu0 0.0
    %1813 = vmatprep.subr.mxu0 0.0
    %1814 = vmatpush1.msra.mxu0 0.0
    %1815 = vmatprep.subr.mxu0 0.0
    %1816 = vmatpush1.msra.mxu0 0.0
    %1817 = vmatprep.subr.mxu0 0.0
    %1818 = vmatpush1.msra.mxu0 0.0
    %1819 = vmatprep.subr.mxu0 0.0
    %1820 = vmatpush1.msra.mxu0 0.0
    %1821 = vmatprep.subr.mxu0 0.0
    %1822 = vmatpush1.msra.mxu0 0.0
    %1823 = vmatprep.subr.mxu0 0.0
    %1824 = vmatpush1.msra.mxu0 0.0
    %1825 = vmatprep.subr.mxu0 0.0
    %1826 = vmatpush1.msra.mxu0 0.0
    %1827 = vmatprep.subr.mxu0 0.0
    %1828 = vmatpush1.msra.mxu0 0.0
    %1829 = vmatprep.subr.mxu0 0.0
    %1830 = vmatpush1.msra.mxu0 0.0
    %1831 = vmatprep.subr.mxu0 0.0
    %1832 = vmatpush1.msra.mxu0 0.0
    %1833 = vmatprep.subr.mxu0 0.0
    %1834 = vmatpush1.msra.mxu0 0.0
    %1835 = vmatprep.subr.mxu0 0.0
    %1836 = vmatpush1.msra.mxu0 0.0
    %1837 = vmatprep.subr.mxu0 0.0
    %1838 = vmatpush1.msra.mxu0 0.0
    %1839 = vmatprep.subr.mxu0 0.0
    %1840 = vmatpush1.msra.mxu0 0.0
    %1841 = vmatprep.subr.mxu0 0.0
    %1842 = vmatpush1.msra.mxu0 0.0
    %1843 = vmatprep.subr.mxu0 0.0
    %1844 = vmatpush1.msra.mxu0 0.0
    %1845 = vmatprep.subr.mxu0 0.0
    %1846 = vmatpush1.msra.mxu0 0.0
    %1847 = vmatprep.subr.mxu0 0.0
    %1848 = vmatpush1.msra.mxu0 0.0
    %1849 = vmatprep.subr.mxu0 0.0
    %1850 = vmatpush1.msra.mxu0 0.0
    %1851 = vmatprep.subr.mxu0 0.0
    %1852 = vmatpush1.msra.mxu0 0.0
    %1853 = vmatprep.subr.mxu0 0.0
    %1854 = vmatpush1.msra.mxu0 0.0
    %1855 = vmatprep.subr.mxu0 0.0
    %1856 = vmatpush1.msra.mxu0 0.0
    %1857 = vmatprep.subr.mxu0 0.0
    %1858 = vmatpush1.msra.mxu0 0.0
    %1859 = vmatprep.subr.mxu0 0.0
    %1860 = vmatpush1.msra.mxu0 0.0
    %1861 = vmatprep.subr.mxu0 0.0
    %1862 = vmatpush1.msra.mxu0 0.0
    %1863 = vmatprep.subr.mxu0 0.0
    %1864 = vmatpush1.msra.mxu0 0.0
    %1865 = vmatprep.subr.mxu0 0.0
    %1866 = vmatpush1.msra.mxu0 0.0
    %1867 = vmatprep.mubr.f32.mxu0 0.0
    %1868 = vmatmul.mubr.f32.gmra.mrb[0].mxu0 %v1801
    %v1869 = vpop.f32.mrb[0].mxu0
    %v1870 = vadd.f32 %v1257, %v1869
    %v1871 = vpop.f32.mrb[0].mxu0
    %1872 = vdwg.mxu0
    %1874 = vrot.lane.b32.xlu0 %v1701, 32
    %v1875 = vpop.permute.xlu0 %1874
    %v1876 = vsel %vm256, %v1875, 0
    %1878 = vmatprep.subr.mxu0 0.0
    %1879 = vmatpush1.msra.mxu0 %v1144
    %1880 = vmatprep.subr.mxu0 0.0
    %1881 = vmatpush1.msra.mxu0 %v1145
    %1882 = vmatprep.subr.mxu0 0.0
    %1883 = vmatpush1.msra.mxu0 %v1146
    %1884 = vmatprep.subr.mxu0 0.0
    %1885 = vmatpush1.msra.mxu0 %v1147
    %1886 = vmatprep.subr.mxu0 0.0
    %1887 = vmatpush1.msra.mxu0 0.0
    %1888 = vmatprep.subr.mxu0 0.0
    %1889 = vmatpush1.msra.mxu0 0.0
    %1890 = vmatprep.subr.mxu0 0.0
    %1891 = vmatpush1.msra.mxu0 0.0
    %1892 = vmatprep.subr.mxu0 0.0
    %1893 = vmatpush1.msra.mxu0 0.0
    %1894 = vmatprep.subr.mxu0 0.0
    %1895 = vmatpush1.msra.mxu0 0.0
    %1896 = vmatprep.subr.mxu0 0.0
    %1897 = vmatpush1.msra.mxu0 0.0
    %1898 = vmatprep.subr.mxu0 0.0
    %1899 = vmatpush1.msra.mxu0 0.0
    %1900 = vmatprep.subr.mxu0 0.0
    %1901 = vmatpush1.msra.mxu0 0.0
    %1902 = vmatprep.subr.mxu0 0.0
    %1903 = vmatpush1.msra.mxu0 0.0
    %1904 = vmatprep.subr.mxu0 0.0
    %1905 = vmatpush1.msra.mxu0 0.0
    %1906 = vmatprep.subr.mxu0 0.0
    %1907 = vmatpush1.msra.mxu0 0.0
    %1908 = vmatprep.subr.mxu0 0.0
    %1909 = vmatpush1.msra.mxu0 0.0
    %1910 = vmatprep.subr.mxu0 0.0
    %1911 = vmatpush1.msra.mxu0 0.0
    %1912 = vmatprep.subr.mxu0 0.0
    %1913 = vmatpush1.msra.mxu0 0.0
    %1914 = vmatprep.subr.mxu0 0.0
    %1915 = vmatpush1.msra.mxu0 0.0
    %1916 = vmatprep.subr.mxu0 0.0
    %1917 = vmatpush1.msra.mxu0 0.0
    %1918 = vmatprep.subr.mxu0 0.0
    %1919 = vmatpush1.msra.mxu0 0.0
    %1920 = vmatprep.subr.mxu0 0.0
    %1921 = vmatpush1.msra.mxu0 0.0
    %1922 = vmatprep.subr.mxu0 0.0
    %1923 = vmatpush1.msra.mxu0 0.0
    %1924 = vmatprep.subr.mxu0 0.0
    %1925 = vmatpush1.msra.mxu0 0.0
    %1926 = vmatprep.subr.mxu0 0.0
    %1927 = vmatpush1.msra.mxu0 0.0
    %1928 = vmatprep.subr.mxu0 0.0
    %1929 = vmatpush1.msra.mxu0 0.0
    %1930 = vmatprep.subr.mxu0 0.0
    %1931 = vmatpush1.msra.mxu0 0.0
    %1932 = vmatprep.subr.mxu0 0.0
    %1933 = vmatpush1.msra.mxu0 0.0
    %1934 = vmatprep.subr.mxu0 0.0
    %1935 = vmatpush1.msra.mxu0 0.0
    %1936 = vmatprep.subr.mxu0 0.0
    %1937 = vmatpush1.msra.mxu0 0.0
    %1938 = vmatprep.subr.mxu0 0.0
    %1939 = vmatpush1.msra.mxu0 0.0
    %1940 = vmatprep.subr.mxu0 0.0
    %1941 = vmatpush1.msra.mxu0 0.0
    %1942 = vmatprep.mubr.f32.mxu0 0.0
    %1943 = vmatmul.mubr.f32.gmra.mrb[0].mxu0 %v1876
    %v1944 = vpop.f32.mrb[0].mxu0
    %v1945 = vadd.f32 0.0, %v1944
    %v1946 = vpop.f32.mrb[0].mxu0
    %1947 = vdwg.mxu0
    %v1948 = vadd.f32 %v1870, %v1945
    %v1949 = vtanh.pop %v1948
    %v1950 = vxor.u32 %v1948, 2147483648
    %v1951 = vmul.f32 %v1950, 1.442695
    %v1952 = vpow.pop %v1951
    %v1953 = vadd.f32 %v1952, 1.0
    %v1954 = vrcp.pop %v1953
    %v1955 = vmul.f32 1.0, %v1954
    %v1956 = vsel %vm1153, %v1949, %v1955
    %v1957 = vmul.f32 %v1956, %v1695
    %1959 = vrot.lane.b32.xlu0 %v1956, 64
    %v1960 = vpop.permute.xlu0 %1959
    %v1962 = vmul.f32 %v1956, %v1960
    %1964 = vrot.lane.b32.xlu0 %v1962, 32
    %v1965 = vpop.permute.xlu0 %1964
    %v1967 = vadd.f32 %v1957, %v1965
    %v1968 = vtanh.pop %v1967
    %1970 = vrot.lane.b32.xlu0 %v1968, 64
    %v1971 = vpop.permute.xlu0 %1970
    %v1973 = vmul.f32 %v1956, %v1971
    %1974 = vmatprep.subr.mxu0 0.0
    %1975 = vmatpush1.msra.mxu0 %v1136
    %1976 = vmatprep.subr.mxu0 0.0
    %1977 = vmatpush1.msra.mxu0 %v1137
    %1978 = vmatprep.subr.mxu0 0.0
    %1979 = vmatpush1.msra.mxu0 %v1138
    %1980 = vmatprep.subr.mxu0 0.0
    %1981 = vmatpush1.msra.mxu0 %v1139
    %1982 = vmatprep.subr.mxu0 0.0
    %1983 = vmatpush1.msra.mxu0 0.0
    %1984 = vmatprep.subr.mxu0 0.0
    %1985 = vmatpush1.msra.mxu0 0.0
    %1986 = vmatprep.subr.mxu0 0.0
    %1987 = vmatpush1.msra.mxu0 0.0
    %1988 = vmatprep.subr.mxu0 0.0
    %1989 = vmatpush1.msra.mxu0 0.0
    %1990 = vmatprep.subr.mxu0 0.0
    %1991 = vmatpush1.msra.mxu0 0.0
    %1992 = vmatprep.subr.mxu0 0.0
    %1993 = vmatpush1.msra.mxu0 0.0
    %1994 = vmatprep.subr.mxu0 0.0
    %1995 = vmatpush1.msra.mxu0 0.0
    %1996 = vmatprep.subr.mxu0 0.0
    %1997 = vmatpush1.msra.mxu0 0.0
    %1998 = vmatprep.subr.mxu0 0.0
    %1999 = vmatpush1.msra.mxu0 0.0
    %2000 = vmatprep.subr.mxu0 0.0
    %2001 = vmatpush1.msra.mxu0 0.0
    %2002 = vmatprep.subr.mxu0 0.0
    %2003 = vmatpush1.msra.mxu0 0.0
    %2004 = vmatprep.subr.mxu0 0.0
    %2005 = vmatpush1.msra.mxu0 0.0
    %2006 = vmatprep.subr.mxu0 0.0
    %2007 = vmatpush1.msra.mxu0 0.0
    %2008 = vmatprep.subr.mxu0 0.0
    %2009 = vmatpush1.msra.mxu0 0.0
    %2010 = vmatprep.subr.mxu0 0.0
    %2011 = vmatpush1.msra.mxu0 0.0
    %2012 = vmatprep.subr.mxu0 0.0
    %2013 = vmatpush1.msra.mxu0 0.0
    %2014 = vmatprep.subr.mxu0 0.0
    %2015 = vmatpush1.msra.mxu0 0.0
    %2016 = vmatprep.subr.mxu0 0.0
    %2017 = vmatpush1.msra.mxu0 0.0
    %2018 = vmatprep.subr.mxu0 0.0
    %2019 = vmatpush1.msra.mxu0 0.0
    %2020 = vmatprep.subr.mxu0 0.0
    %2021 = vmatpush1.msra.mxu0 0.0
    %2022 = vmatprep.subr.mxu0 0.0
    %2023 = vmatpush1.msra.mxu0 0.0
    %2024 = vmatprep.subr.mxu0 0.0
    %2025 = vmatpush1.msra.mxu0 0.0
    %2026 = vmatprep.subr.mxu0 0.0
    %2027 = vmatpush1.msra.mxu0 0.0
    %2028 = vmatprep.subr.mxu0 0.0
    %2029 = vmatpush1.msra.mxu0 0.0
    %2030 = vmatprep.subr.mxu0 0.0
    %2031 = vmatpush1.msra.mxu0 0.0
    %2032 = vmatprep.subr.mxu0 0.0
    %2033 = vmatpush1.msra.mxu0 0.0
    %2034 = vmatprep.subr.mxu0 0.0
    %2035 = vmatpush1.msra.mxu0 0.0
    %2036 = vmatprep.subr.mxu0 0.0
    %2037 = vmatpush1.msra.mxu0 0.0
    %2038 = vmatprep.mubr.f32.mxu0 0.0
    %2039 = vmatmul.mubr.f32.gmra.mrb[0].mxu0 %v1801
    %v2040 = vpop.f32.mrb[0].mxu0
    %v2041 = vadd.f32 0.0, %v2040
    %v2042 = vpop.f32.mrb[0].mxu0
    %2043 = vdwg.mxu0
    %v2044 = vadd.f32 %v1133, %v2041
    %v2045 = vtanh.pop %v2044
    %v2046 = vxor.u32 %v2044, 2147483648
    %v2047 = vmul.f32 %v2046, 1.442695
    %v2048 = vpow.pop %v2047
    %v2049 = vadd.f32 %v2048, 1.0
    %v2050 = vrcp.pop %v2049
    %v2051 = vmul.f32 1.0, %v2050
    %v2052 = vsel %vm1153, %v2045, %v2051
    %v2053 = vmul.f32 %v2052, %v1791
    %2055 = vrot.lane.b32.xlu0 %v2052, 64
    %v2056 = vpop.permute.xlu0 %2055
    %v2058 = vmul.f32 %v2052, %v2056
    %2060 = vrot.lane.b32.xlu0 %v2058, 32
    %v2061 = vpop.permute.xlu0 %2060
    %v2063 = vadd.f32 %v2053, %v2061
    %v2064 = vtanh.pop %v2063
    %2066 = vrot.lane.b32.xlu0 %v2064, 64
    %v2067 = vpop.permute.xlu0 %2066
    %v2069 = vmul.f32 %v2052, %v2067
    %2071 = vrot.lane.b32.xlu0 %v2069, 32
    %v2072 = vpop.permute.xlu0 %2071
    %v2073 = vsel %vm256, %v2072, 0
    %2075 = vmatprep.subr.mxu0 0.0
    %2076 = vmatpush1.msra.mxu0 %v1140
    %2077 = vmatprep.subr.mxu0 0.0
    %2078 = vmatpush1.msra.mxu0 %v1141
    %2079 = vmatprep.subr.mxu0 0.0
    %2080 = vmatpush1.msra.mxu0 %v1142
    %2081 = vmatprep.subr.mxu0 0.0
    %2082 = vmatpush1.msra.mxu0 %v1143
    %2083 = vmatprep.subr.mxu0 0.0
    %2084 = vmatpush1.msra.mxu0 0.0
    %2085 = vmatprep.subr.mxu0 0.0
    %2086 = vmatpush1.msra.mxu0 0.0
    %2087 = vmatprep.subr.mxu0 0.0
    %2088 = vmatpush1.msra.mxu0 0.0
    %2089 = vmatprep.subr.mxu0 0.0
    %2090 = vmatpush1.msra.mxu0 0.0
    %2091 = vmatprep.subr.mxu0 0.0
    %2092 = vmatpush1.msra.mxu0 0.0
    %2093 = vmatprep.subr.mxu0 0.0
    %2094 = vmatpush1.msra.mxu0 0.0
    %2095 = vmatprep.subr.mxu0 0.0
    %2096 = vmatpush1.msra.mxu0 0.0
    %2097 = vmatprep.subr.mxu0 0.0
    %2098 = vmatpush1.msra.mxu0 0.0
    %2099 = vmatprep.subr.mxu0 0.0
    %2100 = vmatpush1.msra.mxu0 0.0
    %2101 = vmatprep.subr.mxu0 0.0
    %2102 = vmatpush1.msra.mxu0 0.0
    %2103 = vmatprep.subr.mxu0 0.0
    %2104 = vmatpush1.msra.mxu0 0.0
    %2105 = vmatprep.subr.mxu0 0.0
    %2106 = vmatpush1.msra.mxu0 0.0
    %2107 = vmatprep.subr.mxu0 0.0
    %2108 = vmatpush1.msra.mxu0 0.0
    %2109 = vmatprep.subr.mxu0 0.0
    %2110 = vmatpush1.msra.mxu0 0.0
    %2111 = vmatprep.subr.mxu0 0.0
    %2112 = vmatpush1.msra.mxu0 0.0
    %2113 = vmatprep.subr.mxu0 0.0
    %2114 = vmatpush1.msra.mxu0 0.0
    %2115 = vmatprep.subr.mxu0 0.0
    %2116 = vmatpush1.msra.mxu0 0.0
    %2117 = vmatprep.subr.mxu0 0.0
    %2118 = vmatpush1.msra.mxu0 0.0
    %2119 = vmatprep.subr.mxu0 0.0
    %2120 = vmatpush1.msra.mxu0 0.0
    %2121 = vmatprep.subr.mxu0 0.0
    %2122 = vmatpush1.msra.mxu0 0.0
    %2123 = vmatprep.subr.mxu0 0.0
    %2124 = vmatpush1.msra.mxu0 0.0
    %2125 = vmatprep.subr.mxu0 0.0
    %2126 = vmatpush1.msra.mxu0 0.0
    %2127 = vmatprep.subr.mxu0 0.0
    %2128 = vmatpush1.msra.mxu0 0.0
    %2129 = vmatprep.subr.mxu0 0.0
    %2130 = vmatpush1.msra.mxu0 0.0
    %2131 = vmatprep.subr.mxu0 0.0
    %2132 = vmatpush1.msra.mxu0 0.0
    %2133 = vmatprep.subr.mxu0 0.0
    %2134 = vmatpush1.msra.mxu0 0.0
    %2135 = vmatprep.subr.mxu0 0.0
    %2136 = vmatpush1.msra.mxu0 0.0
    %2137 = vmatprep.subr.mxu0 0.0
    %2138 = vmatpush1.msra.mxu0 0.0
    %2139 = vmatprep.mubr.f32.mxu0 0.0
    %2140 = vmatmul.mubr.f32.gmra.mrb[0].mxu0 %v2073
    %v2141 = vpop.f32.mrb[0].mxu0
    %v2142 = vadd.f32 %v1257, %v2141
    %v2143 = vpop.f32.mrb[0].mxu0
    %2144 = vdwg.mxu0
    %2146 = vrot.lane.b32.xlu0 %v1973, 32
    %v2147 = vpop.permute.xlu0 %2146
    %v2148 = vsel %vm256, %v2147, 0
    %2150 = vmatprep.subr.mxu0 0.0
    %2151 = vmatpush1.msra.mxu0 %v1144
    %2152 = vmatprep.subr.mxu0 0.0
    %2153 = vmatpush1.msra.mxu0 %v1145
    %2154 = vmatprep.subr.mxu0 0.0
    %2155 = vmatpush1.msra.mxu0 %v1146
    %2156 = vmatprep.subr.mxu0 0.0
    %2157 = vmatpush1.msra.mxu0 %v1147
    %2158 = vmatprep.subr.mxu0 0.0
    %2159 = vmatpush1.msra.mxu0 0.0
    %2160 = vmatprep.subr.mxu0 0.0
    %2161 = vmatpush1.msra.mxu0 0.0
    %2162 = vmatprep.subr.mxu0 0.0
    %2163 = vmatpush1.msra.mxu0 0.0
    %2164 = vmatprep.subr.mxu0 0.0
    %2165 = vmatpush1.msra.mxu0 0.0
    %2166 = vmatprep.subr.mxu0 0.0
    %2167 = vmatpush1.msra.mxu0 0.0
    %2168 = vmatprep.subr.mxu0 0.0
    %2169 = vmatpush1.msra.mxu0 0.0
    %2170 = vmatprep.subr.mxu0 0.0
    %2171 = vmatpush1.msra.mxu0 0.0
    %2172 = vmatprep.subr.mxu0 0.0
    %2173 = vmatpush1.msra.mxu0 0.0
    %2174 = vmatprep.subr.mxu0 0.0
    %2175 = vmatpush1.msra.mxu0 0.0
    %2176 = vmatprep.subr.mxu0 0.0
    %2177 = vmatpush1.msra.mxu0 0.0
    %2178 = vmatprep.subr.mxu0 0.0
    %2179 = vmatpush1.msra.mxu0 0.0
    %2180 = vmatprep.subr.mxu0 0.0
    %2181 = vmatpush1.msra.mxu0 0.0
    %2182 = vmatprep.subr.mxu0 0.0
    %2183 = vmatpush1.msra.mxu0 0.0
    %2184 = vmatprep.subr.mxu0 0.0
    %2185 = vmatpush1.msra.mxu0 0.0
    %2186 = vmatprep.subr.mxu0 0.0
    %2187 = vmatpush1.msra.mxu0 0.0
    %2188 = vmatprep.subr.mxu0 0.0
    %2189 = vmatpush1.msra.mxu0 0.0
    %2190 = vmatprep.subr.mxu0 0.0
    %2191 = vmatpush1.msra.mxu0 0.0
    %2192 = vmatprep.subr.mxu0 0.0
    %2193 = vmatpush1.msra.mxu0 0.0
    %2194 = vmatprep.subr.mxu0 0.0
    %2195 = vmatpush1.msra.mxu0 0.0
    %2196 = vmatprep.subr.mxu0 0.0
    %2197 = vmatpush1.msra.mxu0 0.0
    %2198 = vmatprep.subr.mxu0 0.0
    %2199 = vmatpush1.msra.mxu0 0.0
    %2200 = vmatprep.subr.mxu0 0.0
    %2201 = vmatpush1.msra.mxu0 0.0
    %2202 = vmatprep.subr.mxu0 0.0
    %2203 = vmatpush1.msra.mxu0 0.0
    %2204 = vmatprep.subr.mxu0 0.0
    %2205 = vmatpush1.msra.mxu0 0.0
    %2206 = vmatprep.subr.mxu0 0.0
    %2207 = vmatpush1.msra.mxu0 0.0
    %2208 = vmatprep.subr.mxu0 0.0
    %2209 = vmatpush1.msra.mxu0 0.0
    %2210 = vmatprep.subr.mxu0 0.0
    %2211 = vmatpush1.msra.mxu0 0.0
    %2212 = vmatprep.subr.mxu0 0.0
    %2213 = vmatpush1.msra.mxu0 0.0
    %2214 = vmatprep.mubr.f32.mxu0 0.0
    %2215 = vmatmul.mubr.f32.gmra.mrb[0].mxu0 %v2148
    %v2216 = vpop.f32.mrb[0].mxu0
    %v2217 = vadd.f32 0.0, %v2216
    %v2218 = vpop.f32.mrb[0].mxu0
    %2219 = vdwg.mxu0
    %v2220 = vadd.f32 %v2142, %v2217
    %v2221 = vtanh.pop %v2220
    %v2222 = vxor.u32 %v2220, 2147483648
    %v2223 = vmul.f32 %v2222, 1.442695
    %v2224 = vpow.pop %v2223
    %v2225 = vadd.f32 %v2224, 1.0
    %v2226 = vrcp.pop %v2225
    %v2227 = vmul.f32 1.0, %v2226
    %v2228 = vsel %vm1153, %v2221, %v2227
    %v2229 = vmul.f32 %v2228, %v1967
    %2231 = vrot.lane.b32.xlu0 %v2228, 64
    %v2232 = vpop.permute.xlu0 %2231
    %v2234 = vmul.f32 %v2228, %v2232
    %2236 = vrot.lane.b32.xlu0 %v2234, 32
    %v2237 = vpop.permute.xlu0 %2236
    %v2239 = vadd.f32 %v2229, %v2237
    %v2240 = vtanh.pop %v2239
    %2242 = vrot.lane.b32.xlu0 %v2240, 64
    %v2243 = vpop.permute.xlu0 %2242
    %v2245 = vmul.f32 %v2228, %v2243
    %2246 = vmatprep.subr.mxu0 0.0
    %2247 = vmatpush1.msra.mxu0 %v1136
    %2248 = vmatprep.subr.mxu0 0.0
    %2249 = vmatpush1.msra.mxu0 %v1137
    %2250 = vmatprep.subr.mxu0 0.0
    %2251 = vmatpush1.msra.mxu0 %v1138
    %2252 = vmatprep.subr.mxu0 0.0
    %2253 = vmatpush1.msra.mxu0 %v1139
    %2254 = vmatprep.subr.mxu0 0.0
    %2255 = vmatpush1.msra.mxu0 0.0
    %2256 = vmatprep.subr.mxu0 0.0
    %2257 = vmatpush1.msra.mxu0 0.0
    %2258 = vmatprep.subr.mxu0 0.0
    %2259 = vmatpush1.msra.mxu0 0.0
    %2260 = vmatprep.subr.mxu0 0.0
    %2261 = vmatpush1.msra.mxu0 0.0
    %2262 = vmatprep.subr.mxu0 0.0
    %2263 = vmatpush1.msra.mxu0 0.0
    %2264 = vmatprep.subr.mxu0 0.0
    %2265 = vmatpush1.msra.mxu0 0.0
    %2266 = vmatprep.subr.mxu0 0.0
    %2267 = vmatpush1.msra.mxu0 0.0
    %2268 = vmatprep.subr.mxu0 0.0
    %2269 = vmatpush1.msra.mxu0 0.0
    %2270 = vmatprep.subr.mxu0 0.0
    %2271 = vmatpush1.msra.mxu0 0.0
    %2272 = vmatprep.subr.mxu0 0.0
    %2273 = vmatpush1.msra.mxu0 0.0
    %2274 = vmatprep.subr.mxu0 0.0
    %2275 = vmatpush1.msra.mxu0 0.0
    %2276 = vmatprep.subr.mxu0 0.0
    %2277 = vmatpush1.msra.mxu0 0.0
    %2278 = vmatprep.subr.mxu0 0.0
    %2279 = vmatpush1.msra.mxu0 0.0
    %2280 = vmatprep.subr.mxu0 0.0
    %2281 = vmatpush1.msra.mxu0 0.0
    %2282 = vmatprep.subr.mxu0 0.0
    %2283 = vmatpush1.msra.mxu0 0.0
    %2284 = vmatprep.subr.mxu0 0.0
    %2285 = vmatpush1.msra.mxu0 0.0
    %2286 = vmatprep.subr.mxu0 0.0
    %2287 = vmatpush1.msra.mxu0 0.0
    %2288 = vmatprep.subr.mxu0 0.0
    %2289 = vmatpush1.msra.mxu0 0.0
    %2290 = vmatprep.subr.mxu0 0.0
    %2291 = vmatpush1.msra.mxu0 0.0
    %2292 = vmatprep.subr.mxu0 0.0
    %2293 = vmatpush1.msra.mxu0 0.0
    %2294 = vmatprep.subr.mxu0 0.0
    %2295 = vmatpush1.msra.mxu0 0.0
    %2296 = vmatprep.subr.mxu0 0.0
    %2297 = vmatpush1.msra.mxu0 0.0
    %2298 = vmatprep.subr.mxu0 0.0
    %2299 = vmatpush1.msra.mxu0 0.0
    %2300 = vmatprep.subr.mxu0 0.0
    %2301 = vmatpush1.msra.mxu0 0.0
    %2302 = vmatprep.subr.mxu0 0.0
    %2303 = vmatpush1.msra.mxu0 0.0
    %2304 = vmatprep.subr.mxu0 0.0
    %2305 = vmatpush1.msra.mxu0 0.0
    %2306 = vmatprep.subr.mxu0 0.0
    %2307 = vmatpush1.msra.mxu0 0.0
    %2308 = vmatprep.subr.mxu0 0.0
    %2309 = vmatpush1.msra.mxu0 0.0
    %2310 = vmatprep.mubr.f32.mxu0 0.0
    %2311 = vmatmul.mubr.f32.gmra.mrb[0].mxu0 %v2073
    %v2312 = vpop.f32.mrb[0].mxu0
    %v2313 = vadd.f32 0.0, %v2312
    %v2314 = vpop.f32.mrb[0].mxu0
    %2315 = vdwg.mxu0
    %v2316 = vadd.f32 %v1133, %v2313
    %v2317 = vtanh.pop %v2316
    %v2318 = vxor.u32 %v2316, 2147483648
    %v2319 = vmul.f32 %v2318, 1.442695
    %v2320 = vpow.pop %v2319
    %v2321 = vadd.f32 %v2320, 1.0
    %v2322 = vrcp.pop %v2321
    %v2323 = vmul.f32 1.0, %v2322
    %v2324 = vsel %vm1153, %v2317, %v2323
    %v2325 = vmul.f32 %v2324, %v2063
    %2327 = vrot.lane.b32.xlu0 %v2324, 64
    %v2328 = vpop.permute.xlu0 %2327
    %v2330 = vmul.f32 %v2324, %v2328
    %2332 = vrot.lane.b32.xlu0 %v2330, 32
    %v2333 = vpop.permute.xlu0 %2332
    %v2335 = vadd.f32 %v2325, %v2333
    %v2336 = vtanh.pop %v2335
    %2338 = vrot.lane.b32.xlu0 %v2336, 64
    %v2339 = vpop.permute.xlu0 %2338
    %v2341 = vmul.f32 %v2324, %v2339
    %2343 = vrot.lane.b32.xlu0 %v2341, 32
    %v2344 = vpop.permute.xlu0 %2343
    %v2345 = vsel %vm256, %v2344, 0
    %2347 = vmatprep.subr.mxu0 0.0
    %2348 = vmatpush1.msra.mxu0 %v1140
    %2349 = vmatprep.subr.mxu0 0.0
    %2350 = vmatpush1.msra.mxu0 %v1141
    %2351 = vmatprep.subr.mxu0 0.0
    %2352 = vmatpush1.msra.mxu0 %v1142
    %2353 = vmatprep.subr.mxu0 0.0
    %2354 = vmatpush1.msra.mxu0 %v1143
    %2355 = vmatprep.subr.mxu0 0.0
    %2356 = vmatpush1.msra.mxu0 0.0
    %2357 = vmatprep.subr.mxu0 0.0
    %2358 = vmatpush1.msra.mxu0 0.0
    %2359 = vmatprep.subr.mxu0 0.0
    %2360 = vmatpush1.msra.mxu0 0.0
    %2361 = vmatprep.subr.mxu0 0.0
    %2362 = vmatpush1.msra.mxu0 0.0
    %2363 = vmatprep.subr.mxu0 0.0
    %2364 = vmatpush1.msra.mxu0 0.0
    %2365 = vmatprep.subr.mxu0 0.0
    %2366 = vmatpush1.msra.mxu0 0.0
    %2367 = vmatprep.subr.mxu0 0.0
    %2368 = vmatpush1.msra.mxu0 0.0
    %2369 = vmatprep.subr.mxu0 0.0
    %2370 = vmatpush1.msra.mxu0 0.0
    %2371 = vmatprep.subr.mxu0 0.0
    %2372 = vmatpush1.msra.mxu0 0.0
    %2373 = vmatprep.subr.mxu0 0.0
    %2374 = vmatpush1.msra.mxu0 0.0
    %2375 = vmatprep.subr.mxu0 0.0
    %2376 = vmatpush1.msra.mxu0 0.0
    %2377 = vmatprep.subr.mxu0 0.0
    %2378 = vmatpush1.msra.mxu0 0.0
    %2379 = vmatprep.subr.mxu0 0.0
    %2380 = vmatpush1.msra.mxu0 0.0
    %2381 = vmatprep.subr.mxu0 0.0
    %2382 = vmatpush1.msra.mxu0 0.0
    %2383 = vmatprep.subr.mxu0 0.0
    %2384 = vmatpush1.msra.mxu0 0.0
    %2385 = vmatprep.subr.mxu0 0.0
    %2386 = vmatpush1.msra.mxu0 0.0
    %2387 = vmatprep.subr.mxu0 0.0
    %2388 = vmatpush1.msra.mxu0 0.0
    %2389 = vmatprep.subr.mxu0 0.0
    %2390 = vmatpush1.msra.mxu0 0.0
    %2391 = vmatprep.subr.mxu0 0.0
    %2392 = vmatpush1.msra.mxu0 0.0
    %2393 = vmatprep.subr.mxu0 0.0
    %2394 = vmatpush1.msra.mxu0 0.0
    %2395 = vmatprep.subr.mxu0 0.0
    %2396 = vmatpush1.msra.mxu0 0.0
    %2397 = vmatprep.subr.mxu0 0.0
    %2398 = vmatpush1.msra.mxu0 0.0
    %2399 = vmatprep.subr.mxu0 0.0
    %2400 = vmatpush1.msra.mxu0 0.0
    %2401 = vmatprep.subr.mxu0 0.0
    %2402 = vmatpush1.msra.mxu0 0.0
    %2403 = vmatprep.subr.mxu0 0.0
    %2404 = vmatpush1.msra.mxu0 0.0
    %2405 = vmatprep.subr.mxu0 0.0
    %2406 = vmatpush1.msra.mxu0 0.0
    %2407 = vmatprep.subr.mxu0 0.0
    %2408 = vmatpush1.msra.mxu0 0.0
    %2409 = vmatprep.subr.mxu0 0.0
    %2410 = vmatpush1.msra.mxu0 0.0
    %2411 = vmatprep.mubr.f32.mxu0 0.0
    %2412 = vmatmul.mubr.f32.gmra.mrb[0].mxu0 %v2345
    %v2413 = vpop.f32.mrb[0].mxu0
    %v2414 = vadd.f32 %v1257, %v2413
    %v2415 = vpop.f32.mrb[0].mxu0
    %2416 = vdwg.mxu0
    %2418 = vrot.lane.b32.xlu0 %v2245, 32
    %v2419 = vpop.permute.xlu0 %2418
    %v2420 = vsel %vm256, %v2419, 0
    %2422 = vmatprep.subr.mxu0 0.0
    %2423 = vmatpush1.msra.mxu0 %v1144
    %2424 = vmatprep.subr.mxu0 0.0
    %2425 = vmatpush1.msra.mxu0 %v1145
    %2426 = vmatprep.subr.mxu0 0.0
    %2427 = vmatpush1.msra.mxu0 %v1146
    %2428 = vmatprep.subr.mxu0 0.0
    %2429 = vmatpush1.msra.mxu0 %v1147
    %2430 = vmatprep.subr.mxu0 0.0
    %2431 = vmatpush1.msra.mxu0 0.0
    %2432 = vmatprep.subr.mxu0 0.0
    %2433 = vmatpush1.msra.mxu0 0.0
    %2434 = vmatprep.subr.mxu0 0.0
    %2435 = vmatpush1.msra.mxu0 0.0
    %2436 = vmatprep.subr.mxu0 0.0
    %2437 = vmatpush1.msra.mxu0 0.0
    %2438 = vmatprep.subr.mxu0 0.0
    %2439 = vmatpush1.msra.mxu0 0.0
    %2440 = vmatprep.subr.mxu0 0.0
    %2441 = vmatpush1.msra.mxu0 0.0
    %2442 = vmatprep.subr.mxu0 0.0
    %2443 = vmatpush1.msra.mxu0 0.0
    %2444 = vmatprep.subr.mxu0 0.0
    %2445 = vmatpush1.msra.mxu0 0.0
    %2446 = vmatprep.subr.mxu0 0.0
    %2447 = vmatpush1.msra.mxu0 0.0
    %2448 = vmatprep.subr.mxu0 0.0
    %2449 = vmatpush1.msra.mxu0 0.0
    %2450 = vmatprep.subr.mxu0 0.0
    %2451 = vmatpush1.msra.mxu0 0.0
    %2452 = vmatprep.subr.mxu0 0.0
    %2453 = vmatpush1.msra.mxu0 0.0
    %2454 = vmatprep.subr.mxu0 0.0
    %2455 = vmatpush1.msra.mxu0 0.0
    %2456 = vmatprep.subr.mxu0 0.0
    %2457 = vmatpush1.msra.mxu0 0.0
    %2458 = vmatprep.subr.mxu0 0.0
    %2459 = vmatpush1.msra.mxu0 0.0
    %2460 = vmatprep.subr.mxu0 0.0
    %2461 = vmatpush1.msra.mxu0 0.0
    %2462 = vmatprep.subr.mxu0 0.0
    %2463 = vmatpush1.msra.mxu0 0.0
    %2464 = vmatprep.subr.mxu0 0.0
    %2465 = vmatpush1.msra.mxu0 0.0
    %2466 = vmatprep.subr.mxu0 0.0
    %2467 = vmatpush1.msra.mxu0 0.0
    %2468 = vmatprep.subr.mxu0 0.0
    %2469 = vmatpush1.msra.mxu0 0.0
    %2470 = vmatprep.subr.mxu0 0.0
    %2471 = vmatpush1.msra.mxu0 0.0
    %2472 = vmatprep.subr.mxu0 0.0
    %2473 = vmatpush1.msra.mxu0 0.0
    %2474 = vmatprep.subr.mxu0 0.0
    %2475 = vmatpush1.msra.mxu0 0.0
    %2476 = vmatprep.subr.mxu0 0.0
    %2477 = vmatpush1.msra.mxu0 0.0
    %2478 = vmatprep.subr.mxu0 0.0
    %2479 = vmatpush1.msra.mxu0 0.0
    %2480 = vmatprep.subr.mxu0 0.0
    %2481 = vmatpush1.msra.mxu0 0.0
    %2482 = vmatprep.subr.mxu0 0.0
    %2483 = vmatpush1.msra.mxu0 0.0
    %2484 = vmatprep.subr.mxu0 0.0
    %2485 = vmatpush1.msra.mxu0 0.0
    %2486 = vmatprep.mubr.f32.mxu0 0.0
    %2487 = vmatmul.mubr.f32.gmra.mrb[0].mxu0 %v2420
    %v2488 = vpop.f32.mrb[0].mxu0
    %v2489 = vadd.f32 0.0, %v2488
    %v2490 = vpop.f32.mrb[0].mxu0
    %2491 = vdwg.mxu0
    %v2492 = vadd.f32 %v2414, %v2489
    %v2493 = vtanh.pop %v2492
    %v2494 = vxor.u32 %v2492, 2147483648
    %v2495 = vmul.f32 %v2494, 1.442695
    %v2496 = vpow.pop %v2495
    %v2497 = vadd.f32 %v2496, 1.0
    %v2498 = vrcp.pop %v2497
    %v2499 = vmul.f32 1.0, %v2498
    %v2500 = vsel %vm1153, %v2493, %v2499
    %v2501 = vmul.f32 %v2500, %v2239
    %2503 = vrot.lane.b32.xlu0 %v2500, 64
    %v2504 = vpop.permute.xlu0 %2503
    %v2506 = vmul.f32 %v2500, %v2504
    %2508 = vrot.lane.b32.xlu0 %v2506, 32
    %v2509 = vpop.permute.xlu0 %2508
    %v2511 = vadd.f32 %v2501, %v2509
    %v2512 = vtanh.pop %v2511
    %2514 = vrot.lane.b32.xlu0 %v2512, 64
    %v2515 = vpop.permute.xlu0 %2514
    %v2517 = vmul.f32 %v2500, %v2515
    %2518 = vmatprep.subr.mxu0 0.0
    %2519 = vmatpush1.msra.mxu0 %v1136
    %2520 = vmatprep.subr.mxu0 0.0
    %2521 = vmatpush1.msra.mxu0 %v1137
    %2522 = vmatprep.subr.mxu0 0.0
    %2523 = vmatpush1.msra.mxu0 %v1138
    %2524 = vmatprep.subr.mxu0 0.0
    %2525 = vmatpush1.msra.mxu0 %v1139
    %2526 = vmatprep.subr.mxu0 0.0
    %2527 = vmatpush1.msra.mxu0 0.0
    %2528 = vmatprep.subr.mxu0 0.0
    %2529 = vmatpush1.msra.mxu0 0.0
    %2530 = vmatprep.subr.mxu0 0.0
    %2531 = vmatpush1.msra.mxu0 0.0
    %2532 = vmatprep.subr.mxu0 0.0
    %2533 = vmatpush1.msra.mxu0 0.0
    %2534 = vmatprep.subr.mxu0 0.0
    %2535 = vmatpush1.msra.mxu0 0.0
    %2536 = vmatprep.subr.mxu0 0.0
    %2537 = vmatpush1.msra.mxu0 0.0
    %2538 = vmatprep.subr.mxu0 0.0
    %2539 = vmatpush1.msra.mxu0 0.0
    %2540 = vmatprep.subr.mxu0 0.0
    %2541 = vmatpush1.msra.mxu0 0.0
    %2542 = vmatprep.subr.mxu0 0.0
    %2543 = vmatpush1.msra.mxu0 0.0
    %2544 = vmatprep.subr.mxu0 0.0
    %2545 = vmatpush1.msra.mxu0 0.0
    %2546 = vmatprep.subr.mxu0 0.0
    %2547 = vmatpush1.msra.mxu0 0.0
    %2548 = vmatprep.subr.mxu0 0.0
    %2549 = vmatpush1.msra.mxu0 0.0
    %2550 = vmatprep.subr.mxu0 0.0
    %2551 = vmatpush1.msra.mxu0 0.0
    %2552 = vmatprep.subr.mxu0 0.0
    %2553 = vmatpush1.msra.mxu0 0.0
    %2554 = vmatprep.subr.mxu0 0.0
    %2555 = vmatpush1.msra.mxu0 0.0
    %2556 = vmatprep.subr.mxu0 0.0
    %2557 = vmatpush1.msra.mxu0 0.0
    %2558 = vmatprep.subr.mxu0 0.0
    %2559 = vmatpush1.msra.mxu0 0.0
    %2560 = vmatprep.subr.mxu0 0.0
    %2561 = vmatpush1.msra.mxu0 0.0
    %2562 = vmatprep.subr.mxu0 0.0
    %2563 = vmatpush1.msra.mxu0 0.0
    %2564 = vmatprep.subr.mxu0 0.0
    %2565 = vmatpush1.msra.mxu0 0.0
    %2566 = vmatprep.subr.mxu0 0.0
    %2567 = vmatpush1.msra.mxu0 0.0
    %2568 = vmatprep.subr.mxu0 0.0
    %2569 = vmatpush1.msra.mxu0 0.0
    %2570 = vmatprep.subr.mxu0 0.0
    %2571 = vmatpush1.msra.mxu0 0.0
    %2572 = vmatprep.subr.mxu0 0.0
    %2573 = vmatpush1.msra.mxu0 0.0
    %2574 = vmatprep.subr.mxu0 0.0
    %2575 = vmatpush1.msra.mxu0 0.0
    %2576 = vmatprep.subr.mxu0 0.0
    %2577 = vmatpush1.msra.mxu0 0.0
    %2578 = vmatprep.subr.mxu0 0.0
    %2579 = vmatpush1.msra.mxu0 0.0
    %2580 = vmatprep.subr.mxu0 0.0
    %2581 = vmatpush1.msra.mxu0 0.0
    %2582 = vmatprep.mubr.f32.mxu0 0.0
    %2583 = vmatmul.mubr.f32.gmra.mrb[0].mxu0 %v2345
    %v2584 = vpop.f32.mrb[0].mxu0
    %v2585 = vadd.f32 0.0, %v2584
    %v2586 = vpop.f32.mrb[0].mxu0
    %2587 = vdwg.mxu0
    %v2588 = vadd.f32 %v1133, %v2585
    %v2589 = vtanh.pop %v2588
    %v2590 = vxor.u32 %v2588, 2147483648
    %v2591 = vmul.f32 %v2590, 1.442695
    %v2592 = vpow.pop %v2591
    %v2593 = vadd.f32 %v2592, 1.0
    %v2594 = vrcp.pop %v2593
    %v2595 = vmul.f32 1.0, %v2594
    %v2596 = vsel %vm1153, %v2589, %v2595
    %v2597 = vmul.f32 %v2596, %v2335
    %2599 = vrot.lane.b32.xlu0 %v2596, 64
    %v2600 = vpop.permute.xlu0 %2599
    %v2602 = vmul.f32 %v2596, %v2600
    %2604 = vrot.lane.b32.xlu0 %v2602, 32
    %v2605 = vpop.permute.xlu0 %2604
    %v2607 = vadd.f32 %v2597, %v2605
    %v2608 = vtanh.pop %v2607
    %2610 = vrot.lane.b32.xlu0 %v2608, 64
    %v2611 = vpop.permute.xlu0 %2610
    %v2613 = vmul.f32 %v2596, %v2611
    %2615 = vrot.lane.b32.xlu0 %v2613, 32
    %v2616 = vpop.permute.xlu0 %2615
    %v2617 = vsel %vm256, %v2616, 0
    %2619 = vmatprep.subr.mxu0 0.0
    %2620 = vmatpush1.msra.mxu0 %v1140
    %2621 = vmatprep.subr.mxu0 0.0
    %2622 = vmatpush1.msra.mxu0 %v1141
    %2623 = vmatprep.subr.mxu0 0.0
    %2624 = vmatpush1.msra.mxu0 %v1142
    %2625 = vmatprep.subr.mxu0 0.0
    %2626 = vmatpush1.msra.mxu0 %v1143
    %2627 = vmatprep.subr.mxu0 0.0
    %2628 = vmatpush1.msra.mxu0 0.0
    %2629 = vmatprep.subr.mxu0 0.0
    %2630 = vmatpush1.msra.mxu0 0.0
    %2631 = vmatprep.subr.mxu0 0.0
    %2632 = vmatpush1.msra.mxu0 0.0
    %2633 = vmatprep.subr.mxu0 0.0
    %2634 = vmatpush1.msra.mxu0 0.0
    %2635 = vmatprep.subr.mxu0 0.0
    %2636 = vmatpush1.msra.mxu0 0.0
    %2637 = vmatprep.subr.mxu0 0.0
    %2638 = vmatpush1.msra.mxu0 0.0
    %2639 = vmatprep.subr.mxu0 0.0
    %2640 = vmatpush1.msra.mxu0 0.0
    %2641 = vmatprep.subr.mxu0 0.0
    %2642 = vmatpush1.msra.mxu0 0.0
    %2643 = vmatprep.subr.mxu0 0.0
    %2644 = vmatpush1.msra.mxu0 0.0
    %2645 = vmatprep.subr.mxu0 0.0
    %2646 = vmatpush1.msra.mxu0 0.0
    %2647 = vmatprep.subr.mxu0 0.0
    %2648 = vmatpush1.msra.mxu0 0.0
    %2649 = vmatprep.subr.mxu0 0.0
    %2650 = vmatpush1.msra.mxu0 0.0
    %2651 = vmatprep.subr.mxu0 0.0
    %2652 = vmatpush1.msra.mxu0 0.0
    %2653 = vmatprep.subr.mxu0 0.0
    %2654 = vmatpush1.msra.mxu0 0.0
    %2655 = vmatprep.subr.mxu0 0.0
    %2656 = vmatpush1.msra.mxu0 0.0
    %2657 = vmatprep.subr.mxu0 0.0
    %2658 = vmatpush1.msra.mxu0 0.0
    %2659 = vmatprep.subr.mxu0 0.0
    %2660 = vmatpush1.msra.mxu0 0.0
    %2661 = vmatprep.subr.mxu0 0.0
    %2662 = vmatpush1.msra.mxu0 0.0
    %2663 = vmatprep.subr.mxu0 0.0
    %2664 = vmatpush1.msra.mxu0 0.0
    %2665 = vmatprep.subr.mxu0 0.0
    %2666 = vmatpush1.msra.mxu0 0.0
    %2667 = vmatprep.subr.mxu0 0.0
    %2668 = vmatpush1.msra.mxu0 0.0
    %2669 = vmatprep.subr.mxu0 0.0
    %2670 = vmatpush1.msra.mxu0 0.0
    %2671 = vmatprep.subr.mxu0 0.0
    %2672 = vmatpush1.msra.mxu0 0.0
    %2673 = vmatprep.subr.mxu0 0.0
    %2674 = vmatpush1.msra.mxu0 0.0
    %2675 = vmatprep.subr.mxu0 0.0
    %2676 = vmatpush1.msra.mxu0 0.0
    %2677 = vmatprep.subr.mxu0 0.0
    %2678 = vmatpush1.msra.mxu0 0.0
    %2679 = vmatprep.subr.mxu0 0.0
    %2680 = vmatpush1.msra.mxu0 0.0
    %2681 = vmatprep.subr.mxu0 0.0
    %2682 = vmatpush1.msra.mxu0 0.0
    %2683 = vmatprep.mubr.f32.mxu0 0.0
    %2684 = vmatmul.mubr.f32.gmra.mrb[0].mxu0 %v2617
    %v2685 = vpop.f32.mrb[0].mxu0
    %v2686 = vadd.f32 %v1257, %v2685
    %v2687 = vpop.f32.mrb[0].mxu0
    %2688 = vdwg.mxu0
    %2690 = vrot.lane.b32.xlu0 %v2517, 32
    %v2691 = vpop.permute.xlu0 %2690
    %v2692 = vsel %vm256, %v2691, 0
    %2694 = vmatprep.subr.mxu0 0.0
    %2695 = vmatpush1.msra.mxu0 %v1144
    %2696 = vmatprep.subr.mxu0 0.0
    %2697 = vmatpush1.msra.mxu0 %v1145
    %2698 = vmatprep.subr.mxu0 0.0
    %2699 = vmatpush1.msra.mxu0 %v1146
    %2700 = vmatprep.subr.mxu0 0.0
    %2701 = vmatpush1.msra.mxu0 %v1147
    %2702 = vmatprep.subr.mxu0 0.0
    %2703 = vmatpush1.msra.mxu0 0.0
    %2704 = vmatprep.subr.mxu0 0.0
    %2705 = vmatpush1.msra.mxu0 0.0
    %2706 = vmatprep.subr.mxu0 0.0
    %2707 = vmatpush1.msra.mxu0 0.0
    %2708 = vmatprep.subr.mxu0 0.0
    %2709 = vmatpush1.msra.mxu0 0.0
    %2710 = vmatprep.subr.mxu0 0.0
    %2711 = vmatpush1.msra.mxu0 0.0
    %2712 = vmatprep.subr.mxu0 0.0
    %2713 = vmatpush1.msra.mxu0 0.0
    %2714 = vmatprep.subr.mxu0 0.0
    %2715 = vmatpush1.msra.mxu0 0.0
    %2716 = vmatprep.subr.mxu0 0.0
    %2717 = vmatpush1.msra.mxu0 0.0
    %2718 = vmatprep.subr.mxu0 0.0
    %2719 = vmatpush1.msra.mxu0 0.0
    %2720 = vmatprep.subr.mxu0 0.0
    %2721 = vmatpush1.msra.mxu0 0.0
    %2722 = vmatprep.subr.mxu0 0.0
    %2723 = vmatpush1.msra.mxu0 0.0
    %2724 = vmatprep.subr.mxu0 0.0
    %2725 = vmatpush1.msra.mxu0 0.0
    %2726 = vmatprep.subr.mxu0 0.0
    %2727 = vmatpush1.msra.mxu0 0.0
    %2728 = vmatprep.subr.mxu0 0.0
    %2729 = vmatpush1.msra.mxu0 0.0
    %2730 = vmatprep.subr.mxu0 0.0
    %2731 = vmatpush1.msra.mxu0 0.0
    %2732 = vmatprep.subr.mxu0 0.0
    %2733 = vmatpush1.msra.mxu0 0.0
    %2734 = vmatprep.subr.mxu0 0.0
    %2735 = vmatpush1.msra.mxu0 0.0
    %2736 = vmatprep.subr.mxu0 0.0
    %2737 = vmatpush1.msra.mxu0 0.0
    %2738 = vmatprep.subr.mxu0 0.0
    %2739 = vmatpush1.msra.mxu0 0.0
    %2740 = vmatprep.subr.mxu0 0.0
    %2741 = vmatpush1.msra.mxu0 0.0
    %2742 = vmatprep.subr.mxu0 0.0
    %2743 = vmatpush1.msra.mxu0 0.0
    %2744 = vmatprep.subr.mxu0 0.0
    %2745 = vmatpush1.msra.mxu0 0.0
    %2746 = vmatprep.subr.mxu0 0.0
    %2747 = vmatpush1.msra.mxu0 0.0
    %2748 = vmatprep.subr.mxu0 0.0
    %2749 = vmatpush1.msra.mxu0 0.0
    %2750 = vmatprep.subr.mxu0 0.0
    %2751 = vmatpush1.msra.mxu0 0.0
    %2752 = vmatprep.subr.mxu0 0.0
    %2753 = vmatpush1.msra.mxu0 0.0
    %2754 = vmatprep.subr.mxu0 0.0
    %2755 = vmatpush1.msra.mxu0 0.0
    %2756 = vmatprep.subr.mxu0 0.0
    %2757 = vmatpush1.msra.mxu0 0.0
    %2758 = vmatprep.mubr.f32.mxu0 0.0
    %2759 = vmatmul.mubr.f32.gmra.mrb[0].mxu0 %v2692
    %v2760 = vpop.f32.mrb[0].mxu0
    %v2761 = vadd.f32 0.0, %v2760
    %v2762 = vpop.f32.mrb[0].mxu0
    %2763 = vdwg.mxu0
    %v2764 = vadd.f32 %v2686, %v2761
    %v2765 = vtanh.pop %v2764
    %v2766 = vxor.u32 %v2764, 2147483648
    %v2767 = vmul.f32 %v2766, 1.442695
    %v2768 = vpow.pop %v2767
    %v2769 = vadd.f32 %v2768, 1.0
    %v2770 = vrcp.pop %v2769
    %v2771 = vmul.f32 1.0, %v2770
    %v2772 = vsel %vm1153, %v2765, %v2771
    %v2773 = vmul.f32 %v2772, %v2511
    %2775 = vrot.lane.b32.xlu0 %v2772, 64
    %v2776 = vpop.permute.xlu0 %2775
    %v2778 = vmul.f32 %v2772, %v2776
    %2780 = vrot.lane.b32.xlu0 %v2778, 32
    %v2781 = vpop.permute.xlu0 %2780
    %v2783 = vadd.f32 %v2773, %v2781
    %v2784 = vtanh.pop %v2783
    %2786 = vrot.lane.b32.xlu0 %v2784, 64
    %v2787 = vpop.permute.xlu0 %2786
    %v2789 = vmul.f32 %v2772, %v2787
    %2790 = vmatprep.subr.mxu0 0.0
    %2791 = vmatpush1.msra.mxu0 %v1136
    %2792 = vmatprep.subr.mxu0 0.0
    %2793 = vmatpush1.msra.mxu0 %v1137
    %2794 = vmatprep.subr.mxu0 0.0
    %2795 = vmatpush1.msra.mxu0 %v1138
    %2796 = vmatprep.subr.mxu0 0.0
    %2797 = vmatpush1.msra.mxu0 %v1139
    %2798 = vmatprep.subr.mxu0 0.0
    %2799 = vmatpush1.msra.mxu0 0.0
    %2800 = vmatprep.subr.mxu0 0.0
    %2801 = vmatpush1.msra.mxu0 0.0
    %2802 = vmatprep.subr.mxu0 0.0
    %2803 = vmatpush1.msra.mxu0 0.0
    %2804 = vmatprep.subr.mxu0 0.0
    %2805 = vmatpush1.msra.mxu0 0.0
    %2806 = vmatprep.subr.mxu0 0.0
    %2807 = vmatpush1.msra.mxu0 0.0
    %2808 = vmatprep.subr.mxu0 0.0
    %2809 = vmatpush1.msra.mxu0 0.0
    %2810 = vmatprep.subr.mxu0 0.0
    %2811 = vmatpush1.msra.mxu0 0.0
    %2812 = vmatprep.subr.mxu0 0.0
    %2813 = vmatpush1.msra.mxu0 0.0
    %2814 = vmatprep.subr.mxu0 0.0
    %2815 = vmatpush1.msra.mxu0 0.0
    %2816 = vmatprep.subr.mxu0 0.0
    %2817 = vmatpush1.msra.mxu0 0.0
    %2818 = vmatprep.subr.mxu0 0.0
    %2819 = vmatpush1.msra.mxu0 0.0
    %2820 = vmatprep.subr.mxu0 0.0
    %2821 = vmatpush1.msra.mxu0 0.0
    %2822 = vmatprep.subr.mxu0 0.0
    %2823 = vmatpush1.msra.mxu0 0.0
    %2824 = vmatprep.subr.mxu0 0.0
    %2825 = vmatpush1.msra.mxu0 0.0
    %2826 = vmatprep.subr.mxu0 0.0
    %2827 = vmatpush1.msra.mxu0 0.0
    %2828 = vmatprep.subr.mxu0 0.0
    %2829 = vmatpush1.msra.mxu0 0.0
    %2830 = vmatprep.subr.mxu0 0.0
    %2831 = vmatpush1.msra.mxu0 0.0
    %2832 = vmatprep.subr.mxu0 0.0
    %2833 = vmatpush1.msra.mxu0 0.0
    %2834 = vmatprep.subr.mxu0 0.0
    %2835 = vmatpush1.msra.mxu0 0.0
    %2836 = vmatprep.subr.mxu0 0.0
    %2837 = vmatpush1.msra.mxu0 0.0
    %2838 = vmatprep.subr.mxu0 0.0
    %2839 = vmatpush1.msra.mxu0 0.0
    %2840 = vmatprep.subr.mxu0 0.0
    %2841 = vmatpush1.msra.mxu0 0.0
    %2842 = vmatprep.subr.mxu0 0.0
    %2843 = vmatpush1.msra.mxu0 0.0
    %2844 = vmatprep.subr.mxu0 0.0
    %2845 = vmatpush1.msra.mxu0 0.0
    %2846 = vmatprep.subr.mxu0 0.0
    %2847 = vmatpush1.msra.mxu0 0.0
    %2848 = vmatprep.subr.mxu0 0.0
    %2849 = vmatpush1.msra.mxu0 0.0
    %2850 = vmatprep.subr.mxu0 0.0
    %2851 = vmatpush1.msra.mxu0 0.0
    %2852 = vmatprep.subr.mxu0 0.0
    %2853 = vmatpush1.msra.mxu0 0.0
    %2854 = vmatprep.mubr.f32.mxu0 0.0
    %2855 = vmatmul.mubr.f32.gmra.mrb[0].mxu0 %v2617
    %v2856 = vpop.f32.mrb[0].mxu0
    %v2857 = vadd.f32 0.0, %v2856
    %v2858 = vpop.f32.mrb[0].mxu0
    %2859 = vdwg.mxu0
    %v2860 = vadd.f32 %v1133, %v2857
    %v2861 = vtanh.pop %v2860
    %v2862 = vxor.u32 %v2860, 2147483648
    %v2863 = vmul.f32 %v2862, 1.442695
    %v2864 = vpow.pop %v2863
    %v2865 = vadd.f32 %v2864, 1.0
    %v2866 = vrcp.pop %v2865
    %v2867 = vmul.f32 1.0, %v2866
    %v2868 = vsel %vm1153, %v2861, %v2867
    %v2869 = vmul.f32 %v2868, %v2607
    %2871 = vrot.lane.b32.xlu0 %v2868, 64
    %v2872 = vpop.permute.xlu0 %2871
    %v2874 = vmul.f32 %v2868, %v2872
    %2876 = vrot.lane.b32.xlu0 %v2874, 32
    %v2877 = vpop.permute.xlu0 %2876
    %v2879 = vadd.f32 %v2869, %v2877
    %v2880 = vtanh.pop %v2879
    %2882 = vrot.lane.b32.xlu0 %v2880, 64
    %v2883 = vpop.permute.xlu0 %2882
    %v2885 = vmul.f32 %v2868, %v2883
    %2887 = vrot.lane.b32.xlu0 %v2885, 32
    %v2888 = vpop.permute.xlu0 %2887
    %v2889 = vsel %vm256, %v2888, 0
    %2891 = vmatprep.subr.mxu0 0.0
    %2892 = vmatpush1.msra.mxu0 %v1140
    %2893 = vmatprep.subr.mxu0 0.0
    %2894 = vmatpush1.msra.mxu0 %v1141
    %2895 = vmatprep.subr.mxu0 0.0
    %2896 = vmatpush1.msra.mxu0 %v1142
    %2897 = vmatprep.subr.mxu0 0.0
    %2898 = vmatpush1.msra.mxu0 %v1143
    %2899 = vmatprep.subr.mxu0 0.0
    %2900 = vmatpush1.msra.mxu0 0.0
    %2901 = vmatprep.subr.mxu0 0.0
    %2902 = vmatpush1.msra.mxu0 0.0
    %2903 = vmatprep.subr.mxu0 0.0
    %2904 = vmatpush1.msra.mxu0 0.0
    %2905 = vmatprep.subr.mxu0 0.0
    %2906 = vmatpush1.msra.mxu0 0.0
    %2907 = vmatprep.subr.mxu0 0.0
    %2908 = vmatpush1.msra.mxu0 0.0
    %2909 = vmatprep.subr.mxu0 0.0
    %2910 = vmatpush1.msra.mxu0 0.0
    %2911 = vmatprep.subr.mxu0 0.0
    %2912 = vmatpush1.msra.mxu0 0.0
    %2913 = vmatprep.subr.mxu0 0.0
    %2914 = vmatpush1.msra.mxu0 0.0
    %2915 = vmatprep.subr.mxu0 0.0
    %2916 = vmatpush1.msra.mxu0 0.0
    %2917 = vmatprep.subr.mxu0 0.0
    %2918 = vmatpush1.msra.mxu0 0.0
    %2919 = vmatprep.subr.mxu0 0.0
    %2920 = vmatpush1.msra.mxu0 0.0
    %2921 = vmatprep.subr.mxu0 0.0
    %2922 = vmatpush1.msra.mxu0 0.0
    %2923 = vmatprep.subr.mxu0 0.0
    %2924 = vmatpush1.msra.mxu0 0.0
    %2925 = vmatprep.subr.mxu0 0.0
    %2926 = vmatpush1.msra.mxu0 0.0
    %2927 = vmatprep.subr.mxu0 0.0
    %2928 = vmatpush1.msra.mxu0 0.0
    %2929 = vmatprep.subr.mxu0 0.0
    %2930 = vmatpush1.msra.mxu0 0.0
    %2931 = vmatprep.subr.mxu0 0.0
    %2932 = vmatpush1.msra.mxu0 0.0
    %2933 = vmatprep.subr.mxu0 0.0
    %2934 = vmatpush1.msra.mxu0 0.0
    %2935 = vmatprep.subr.mxu0 0.0
    %2936 = vmatpush1.msra.mxu0 0.0
    %2937 = vmatprep.subr.mxu0 0.0
    %2938 = vmatpush1.msra.mxu0 0.0
    %2939 = vmatprep.subr.mxu0 0.0
    %2940 = vmatpush1.msra.mxu0 0.0
    %2941 = vmatprep.subr.mxu0 0.0
    %2942 = vmatpush1.msra.mxu0 0.0
    %2943 = vmatprep.subr.mxu0 0.0
    %2944 = vmatpush1.msra.mxu0 0.0
    %2945 = vmatprep.subr.mxu0 0.0
    %2946 = vmatpush1.msra.mxu0 0.0
    %2947 = vmatprep.subr.mxu0 0.0
    %2948 = vmatpush1.msra.mxu0 0.0
    %2949 = vmatprep.subr.mxu0 0.0
    %2950 = vmatpush1.msra.mxu0 0.0
    %2951 = vmatprep.subr.mxu0 0.0
    %2952 = vmatpush1.msra.mxu0 0.0
    %2953 = vmatprep.subr.mxu0 0.0
    %2954 = vmatpush1.msra.mxu0 0.0
    %2955 = vmatprep.mubr.f32.mxu0 0.0
    %2956 = vmatmul.mubr.f32.gmra.mrb[0].mxu0 %v2889
    %v2957 = vpop.f32.mrb[0].mxu0
    %v2958 = vadd.f32 %v1257, %v2957
    %v2959 = vpop.f32.mrb[0].mxu0
    %2960 = vdwg.mxu0
    %2962 = vrot.lane.b32.xlu0 %v2789, 32
    %v2963 = vpop.permute.xlu0 %2962
    %v2964 = vsel %vm256, %v2963, 0
    %2966 = vmatprep.subr.mxu0 0.0
    %2967 = vmatpush1.msra.mxu0 %v1144
    %2968 = vmatprep.subr.mxu0 0.0
    %2969 = vmatpush1.msra.mxu0 %v1145
    %2970 = vmatprep.subr.mxu0 0.0
    %2971 = vmatpush1.msra.mxu0 %v1146
    %2972 = vmatprep.subr.mxu0 0.0
    %2973 = vmatpush1.msra.mxu0 %v1147
    %2974 = vmatprep.subr.mxu0 0.0
    %2975 = vmatpush1.msra.mxu0 0.0
    %2976 = vmatprep.subr.mxu0 0.0
    %2977 = vmatpush1.msra.mxu0 0.0
    %2978 = vmatprep.subr.mxu0 0.0
    %2979 = vmatpush1.msra.mxu0 0.0
    %2980 = vmatprep.subr.mxu0 0.0
    %2981 = vmatpush1.msra.mxu0 0.0
    %2982 = vmatprep.subr.mxu0 0.0
    %2983 = vmatpush1.msra.mxu0 0.0
    %2984 = vmatprep.subr.mxu0 0.0
    %2985 = vmatpush1.msra.mxu0 0.0
    %2986 = vmatprep.subr.mxu0 0.0
    %2987 = vmatpush1.msra.mxu0 0.0
    %2988 = vmatprep.subr.mxu0 0.0
    %2989 = vmatpush1.msra.mxu0 0.0
    %2990 = vmatprep.subr.mxu0 0.0
    %2991 = vmatpush1.msra.mxu0 0.0
    %2992 = vmatprep.subr.mxu0 0.0
    %2993 = vmatpush1.msra.mxu0 0.0
    %2994 = vmatprep.subr.mxu0 0.0
    %2995 = vmatpush1.msra.mxu0 0.0
    %2996 = vmatprep.subr.mxu0 0.0
    %2997 = vmatpush1.msra.mxu0 0.0
    %2998 = vmatprep.subr.mxu0 0.0
    %2999 = vmatpush1.msra.mxu0 0.0
    %3000 = vmatprep.subr.mxu0 0.0
    %3001 = vmatpush1.msra.mxu0 0.0
    %3002 = vmatprep.subr.mxu0 0.0
    %3003 = vmatpush1.msra.mxu0 0.0
    %3004 = vmatprep.subr.mxu0 0.0
    %3005 = vmatpush1.msra.mxu0 0.0
    %3006 = vmatprep.subr.mxu0 0.0
    %3007 = vmatpush1.msra.mxu0 0.0
    %3008 = vmatprep.subr.mxu0 0.0
    %3009 = vmatpush1.msra.mxu0 0.0
    %3010 = vmatprep.subr.mxu0 0.0
    %3011 = vmatpush1.msra.mxu0 0.0
    %3012 = vmatprep.subr.mxu0 0.0
    %3013 = vmatpush1.msra.mxu0 0.0
    %3014 = vmatprep.subr.mxu0 0.0
    %3015 = vmatpush1.msra.mxu0 0.0
    %3016 = vmatprep.subr.mxu0 0.0
    %3017 = vmatpush1.msra.mxu0 0.0
    %3018 = vmatprep.subr.mxu0 0.0
    %3019 = vmatpush1.msra.mxu0 0.0
    %3020 = vmatprep.subr.mxu0 0.0
    %3021 = vmatpush1.msra.mxu0 0.0
    %3022 = vmatprep.subr.mxu0 0.0
    %3023 = vmatpush1.msra.mxu0 0.0
    %3024 = vmatprep.subr.mxu0 0.0
    %3025 = vmatpush1.msra.mxu0 0.0
    %3026 = vmatprep.subr.mxu0 0.0
    %3027 = vmatpush1.msra.mxu0 0.0
    %3028 = vmatprep.subr.mxu0 0.0
    %3029 = vmatpush1.msra.mxu0 0.0
    %3030 = vmatprep.mubr.f32.mxu0 0.0
    %3031 = vmatmul.mubr.f32.gmra.mrb[0].mxu0 %v2964
    %v3032 = vpop.f32.mrb[0].mxu0
    %v3033 = vadd.f32 0.0, %v3032
    %v3034 = vpop.f32.mrb[0].mxu0
    %3035 = vdwg.mxu0
    %v3036 = vadd.f32 %v2958, %v3033
    %v3037 = vtanh.pop %v3036
    %v3038 = vxor.u32 %v3036, 2147483648
    %v3039 = vmul.f32 %v3038, 1.442695
    %v3040 = vpow.pop %v3039
    %v3041 = vadd.f32 %v3040, 1.0
    %v3042 = vrcp.pop %v3041
    %v3043 = vmul.f32 1.0, %v3042
    %v3044 = vsel %vm1153, %v3037, %v3043
    %v3045 = vmul.f32 %v3044, %v2783
    %3047 = vrot.lane.b32.xlu0 %v3044, 64
    %v3048 = vpop.permute.xlu0 %3047
    %v3050 = vmul.f32 %v3044, %v3048
    %3052 = vrot.lane.b32.xlu0 %v3050, 32
    %v3053 = vpop.permute.xlu0 %3052
    %v3055 = vadd.f32 %v3045, %v3053
    %v3056 = vtanh.pop %v3055
    %3058 = vrot.lane.b32.xlu0 %v3056, 64
    %v3059 = vpop.permute.xlu0 %3058
    %v3061 = vmul.f32 %v3044, %v3059
    %3062 = vmatprep.subr.mxu0 0.0
    %3063 = vmatpush1.msra.mxu0 %v1136
    %3064 = vmatprep.subr.mxu0 0.0
    %3065 = vmatpush1.msra.mxu0 %v1137
    %3066 = vmatprep.subr.mxu0 0.0
    %3067 = vmatpush1.msra.mxu0 %v1138
    %3068 = vmatprep.subr.mxu0 0.0
    %3069 = vmatpush1.msra.mxu0 %v1139
    %3070 = vmatprep.subr.mxu0 0.0
    %3071 = vmatpush1.msra.mxu0 0.0
    %3072 = vmatprep.subr.mxu0 0.0
    %3073 = vmatpush1.msra.mxu0 0.0
    %3074 = vmatprep.subr.mxu0 0.0
    %3075 = vmatpush1.msra.mxu0 0.0
    %3076 = vmatprep.subr.mxu0 0.0
    %3077 = vmatpush1.msra.mxu0 0.0
    %3078 = vmatprep.subr.mxu0 0.0
    %3079 = vmatpush1.msra.mxu0 0.0
    %3080 = vmatprep.subr.mxu0 0.0
    %3081 = vmatpush1.msra.mxu0 0.0
    %3082 = vmatprep.subr.mxu0 0.0
    %3083 = vmatpush1.msra.mxu0 0.0
    %3084 = vmatprep.subr.mxu0 0.0
    %3085 = vmatpush1.msra.mxu0 0.0
    %3086 = vmatprep.subr.mxu0 0.0
    %3087 = vmatpush1.msra.mxu0 0.0
    %3088 = vmatprep.subr.mxu0 0.0
    %3089 = vmatpush1.msra.mxu0 0.0
    %3090 = vmatprep.subr.mxu0 0.0
    %3091 = vmatpush1.msra.mxu0 0.0
    %3092 = vmatprep.subr.mxu0 0.0
    %3093 = vmatpush1.msra.mxu0 0.0
    %3094 = vmatprep.subr.mxu0 0.0
    %3095 = vmatpush1.msra.mxu0 0.0
    %3096 = vmatprep.subr.mxu0 0.0
    %3097 = vmatpush1.msra.mxu0 0.0
    %3098 = vmatprep.subr.mxu0 0.0
    %3099 = vmatpush1.msra.mxu0 0.0
    %3100 = vmatprep.subr.mxu0 0.0
    %3101 = vmatpush1.msra.mxu0 0.0
    %3102 = vmatprep.subr.mxu0 0.0
    %3103 = vmatpush1.msra.mxu0 0.0
    %3104 = vmatprep.subr.mxu0 0.0
    %3105 = vmatpush1.msra.mxu0 0.0
    %3106 = vmatprep.subr.mxu0 0.0
    %3107 = vmatpush1.msra.mxu0 0.0
    %3108 = vmatprep.subr.mxu0 0.0
    %3109 = vmatpush1.msra.mxu0 0.0
    %3110 = vmatprep.subr.mxu0 0.0
    %3111 = vmatpush1.msra.mxu0 0.0
    %3112 = vmatprep.subr.mxu0 0.0
    %3113 = vmatpush1.msra.mxu0 0.0
    %3114 = vmatprep.subr.mxu0 0.0
    %3115 = vmatpush1.msra.mxu0 0.0
    %3116 = vmatprep.subr.mxu0 0.0
    %3117 = vmatpush1.msra.mxu0 0.0
    %3118 = vmatprep.subr.mxu0 0.0
    %3119 = vmatpush1.msra.mxu0 0.0
    %3120 = vmatprep.subr.mxu0 0.0
    %3121 = vmatpush1.msra.mxu0 0.0
    %3122 = vmatprep.subr.mxu0 0.0
    %3123 = vmatpush1.msra.mxu0 0.0
    %3124 = vmatprep.subr.mxu0 0.0
    %3125 = vmatpush1.msra.mxu0 0.0
    %3126 = vmatprep.mubr.f32.mxu0 0.0
    %3127 = vmatmul.mubr.f32.gmra.mrb[0].mxu0 %v2889
    %v3128 = vpop.f32.mrb[0].mxu0
    %v3129 = vadd.f32 0.0, %v3128
    %v3130 = vpop.f32.mrb[0].mxu0
    %3131 = vdwg.mxu0
    %v3132 = vadd.f32 %v1133, %v3129
    %v3133 = vtanh.pop %v3132
    %v3134 = vxor.u32 %v3132, 2147483648
    %v3135 = vmul.f32 %v3134, 1.442695
    %v3136 = vpow.pop %v3135
    %v3137 = vadd.f32 %v3136, 1.0
    %v3138 = vrcp.pop %v3137
    %v3139 = vmul.f32 1.0, %v3138
    %v3140 = vsel %vm1153, %v3133, %v3139
    %v3141 = vmul.f32 %v3140, %v2879
    %3143 = vrot.lane.b32.xlu0 %v3140, 64
    %v3144 = vpop.permute.xlu0 %3143
    %v3146 = vmul.f32 %v3140, %v3144
    %3148 = vrot.lane.b32.xlu0 %v3146, 32
    %v3149 = vpop.permute.xlu0 %3148
    %v3151 = vadd.f32 %v3141, %v3149
    %v3152 = vtanh.pop %v3151
    %3154 = vrot.lane.b32.xlu0 %v3152, 64
    %v3155 = vpop.permute.xlu0 %3154
    %v3157 = vmul.f32 %v3140, %v3155
    %3159 = vrot.lane.b32.xlu0 %v3157, 32
    %v3160 = vpop.permute.xlu0 %3159
    %v3161 = vsel %vm256, %v3160, 0
    %3163 = vmatprep.subr.mxu0 0.0
    %3164 = vmatpush1.msra.mxu0 %v1140
    %3165 = vmatprep.subr.mxu0 0.0
    %3166 = vmatpush1.msra.mxu0 %v1141
    %3167 = vmatprep.subr.mxu0 0.0
    %3168 = vmatpush1.msra.mxu0 %v1142
    %3169 = vmatprep.subr.mxu0 0.0
    %3170 = vmatpush1.msra.mxu0 %v1143
    %3171 = vmatprep.subr.mxu0 0.0
    %3172 = vmatpush1.msra.mxu0 0.0
    %3173 = vmatprep.subr.mxu0 0.0
    %3174 = vmatpush1.msra.mxu0 0.0
    %3175 = vmatprep.subr.mxu0 0.0
    %3176 = vmatpush1.msra.mxu0 0.0
    %3177 = vmatprep.subr.mxu0 0.0
    %3178 = vmatpush1.msra.mxu0 0.0
    %3179 = vmatprep.subr.mxu0 0.0
    %3180 = vmatpush1.msra.mxu0 0.0
    %3181 = vmatprep.subr.mxu0 0.0
    %3182 = vmatpush1.msra.mxu0 0.0
    %3183 = vmatprep.subr.mxu0 0.0
    %3184 = vmatpush1.msra.mxu0 0.0
    %3185 = vmatprep.subr.mxu0 0.0
    %3186 = vmatpush1.msra.mxu0 0.0
    %3187 = vmatprep.subr.mxu0 0.0
    %3188 = vmatpush1.msra.mxu0 0.0
    %3189 = vmatprep.subr.mxu0 0.0
    %3190 = vmatpush1.msra.mxu0 0.0
    %3191 = vmatprep.subr.mxu0 0.0
    %3192 = vmatpush1.msra.mxu0 0.0
    %3193 = vmatprep.subr.mxu0 0.0
    %3194 = vmatpush1.msra.mxu0 0.0
    %3195 = vmatprep.subr.mxu0 0.0
    %3196 = vmatpush1.msra.mxu0 0.0
    %3197 = vmatprep.subr.mxu0 0.0
    %3198 = vmatpush1.msra.mxu0 0.0
    %3199 = vmatprep.subr.mxu0 0.0
    %3200 = vmatpush1.msra.mxu0 0.0
    %3201 = vmatprep.subr.mxu0 0.0
    %3202 = vmatpush1.msra.mxu0 0.0
    %3203 = vmatprep.subr.mxu0 0.0
    %3204 = vmatpush1.msra.mxu0 0.0
    %3205 = vmatprep.subr.mxu0 0.0
    %3206 = vmatpush1.msra.mxu0 0.0
    %3207 = vmatprep.subr.mxu0 0.0
    %3208 = vmatpush1.msra.mxu0 0.0
    %3209 = vmatprep.subr.mxu0 0.0
    %3210 = vmatpush1.msra.mxu0 0.0
    %3211 = vmatprep.subr.mxu0 0.0
    %3212 = vmatpush1.msra.mxu0 0.0
    %3213 = vmatprep.subr.mxu0 0.0
    %3214 = vmatpush1.msra.mxu0 0.0
    %3215 = vmatprep.subr.mxu0 0.0
    %3216 = vmatpush1.msra.mxu0 0.0
    %3217 = vmatprep.subr.mxu0 0.0
    %3218 = vmatpush1.msra.mxu0 0.0
    %3219 = vmatprep.subr.mxu0 0.0
    %3220 = vmatpush1.msra.mxu0 0.0
    %3221 = vmatprep.subr.mxu0 0.0
    %3222 = vmatpush1.msra.mxu0 0.0
    %3223 = vmatprep.subr.mxu0 0.0
    %3224 = vmatpush1.msra.mxu0 0.0
    %3225 = vmatprep.subr.mxu0 0.0
    %3226 = vmatpush1.msra.mxu0 0.0
    %3227 = vmatprep.mubr.f32.mxu0 0.0
    %3228 = vmatmul.mubr.f32.gmra.mrb[0].mxu0 %v3161
    %v3229 = vpop.f32.mrb[0].mxu0
    %v3230 = vadd.f32 %v1257, %v3229
    %v3231 = vpop.f32.mrb[0].mxu0
    %3232 = vdwg.mxu0
    %3234 = vrot.lane.b32.xlu0 %v3061, 32
    %v3235 = vpop.permute.xlu0 %3234
    %v3236 = vsel %vm256, %v3235, 0
    %3238 = vmatprep.subr.mxu0 0.0
    %3239 = vmatpush1.msra.mxu0 %v1144
    %3240 = vmatprep.subr.mxu0 0.0
    %3241 = vmatpush1.msra.mxu0 %v1145
    %3242 = vmatprep.subr.mxu0 0.0
    %3243 = vmatpush1.msra.mxu0 %v1146
    %3244 = vmatprep.subr.mxu0 0.0
    %3245 = vmatpush1.msra.mxu0 %v1147
    %3246 = vmatprep.subr.mxu0 0.0
    %3247 = vmatpush1.msra.mxu0 0.0
    %3248 = vmatprep.subr.mxu0 0.0
    %3249 = vmatpush1.msra.mxu0 0.0
    %3250 = vmatprep.subr.mxu0 0.0
    %3251 = vmatpush1.msra.mxu0 0.0
    %3252 = vmatprep.subr.mxu0 0.0
    %3253 = vmatpush1.msra.mxu0 0.0
    %3254 = vmatprep.subr.mxu0 0.0
    %3255 = vmatpush1.msra.mxu0 0.0
    %3256 = vmatprep.subr.mxu0 0.0
    %3257 = vmatpush1.msra.mxu0 0.0
    %3258 = vmatprep.subr.mxu0 0.0
    %3259 = vmatpush1.msra.mxu0 0.0
    %3260 = vmatprep.subr.mxu0 0.0
    %3261 = vmatpush1.msra.mxu0 0.0
    %3262 = vmatprep.subr.mxu0 0.0
    %3263 = vmatpush1.msra.mxu0 0.0
    %3264 = vmatprep.subr.mxu0 0.0
    %3265 = vmatpush1.msra.mxu0 0.0
    %3266 = vmatprep.subr.mxu0 0.0
    %3267 = vmatpush1.msra.mxu0 0.0
    %3268 = vmatprep.subr.mxu0 0.0
    %3269 = vmatpush1.msra.mxu0 0.0
    %3270 = vmatprep.subr.mxu0 0.0
    %3271 = vmatpush1.msra.mxu0 0.0
    %3272 = vmatprep.subr.mxu0 0.0
    %3273 = vmatpush1.msra.mxu0 0.0
    %3274 = vmatprep.subr.mxu0 0.0
    %3275 = vmatpush1.msra.mxu0 0.0
    %3276 = vmatprep.subr.mxu0 0.0
    %3277 = vmatpush1.msra.mxu0 0.0
    %3278 = vmatprep.subr.mxu0 0.0
    %3279 = vmatpush1.msra.mxu0 0.0
    %3280 = vmatprep.subr.mxu0 0.0
    %3281 = vmatpush1.msra.mxu0 0.0
    %3282 = vmatprep.subr.mxu0 0.0
    %3283 = vmatpush1.msra.mxu0 0.0
    %3284 = vmatprep.subr.mxu0 0.0
    %3285 = vmatpush1.msra.mxu0 0.0
    %3286 = vmatprep.subr.mxu0 0.0
    %3287 = vmatpush1.msra.mxu0 0.0
    %3288 = vmatprep.subr.mxu0 0.0
    %3289 = vmatpush1.msra.mxu0 0.0
    %3290 = vmatprep.subr.mxu0 0.0
    %3291 = vmatpush1.msra.mxu0 0.0
    %3292 = vmatprep.subr.mxu0 0.0
    %3293 = vmatpush1.msra.mxu0 0.0
    %3294 = vmatprep.subr.mxu0 0.0
    %3295 = vmatpush1.msra.mxu0 0.0
    %3296 = vmatprep.subr.mxu0 0.0
    %3297 = vmatpush1.msra.mxu0 0.0
    %3298 = vmatprep.subr.mxu0 0.0
    %3299 = vmatpush1.msra.mxu0 0.0
    %3300 = vmatprep.subr.mxu0 0.0
    %3301 = vmatpush1.msra.mxu0 0.0
    %3302 = vmatprep.mubr.f32.mxu0 0.0
    %3303 = vmatmul.mubr.f32.gmra.mrb[0].mxu0 %v3236
    %v3304 = vpop.f32.mrb[0].mxu0
    %v3305 = vadd.f32 0.0, %v3304
    %v3306 = vpop.f32.mrb[0].mxu0
    %3307 = vdwg.mxu0
    %v3308 = vadd.f32 %v3230, %v3305
    %v3309 = vtanh.pop %v3308
    %v3310 = vxor.u32 %v3308, 2147483648
    %v3311 = vmul.f32 %v3310, 1.442695
    %v3312 = vpow.pop %v3311
    %v3313 = vadd.f32 %v3312, 1.0
    %v3314 = vrcp.pop %v3313
    %v3315 = vmul.f32 1.0, %v3314
    %v3316 = vsel %vm1153, %v3309, %v3315
    %v3317 = vmul.f32 %v3316, %v3055
    %3319 = vrot.lane.b32.xlu0 %v3316, 64
    %v3320 = vpop.permute.xlu0 %3319
    %v3322 = vmul.f32 %v3316, %v3320
    %3324 = vrot.lane.b32.xlu0 %v3322, 32
    %v3325 = vpop.permute.xlu0 %3324
    %v3327 = vadd.f32 %v3317, %v3325
    %v3328 = vtanh.pop %v3327
    %3330 = vrot.lane.b32.xlu0 %v3328, 64
    %v3331 = vpop.permute.xlu0 %3330
    %v3333 = vmul.f32 %v3316, %v3331
    %v3335 = vunpack.c.l.s4 1966171168
    %v3336 = vunpack.c.0.s8 %v3335
    %v3337 = vlaneseq
    %v3338 = vshrl.u32 %v3337, 7
    %v3339 = vsub.s32 %v3336, %v3338
    %v3340 = vrot.slane %v1429, %v3339
    %v3341 = vcombine.high %v3340, %v3340
    %v3343 = vunpack.c.l.s4 1966171168
    %v3344 = vunpack.c.0.s8 %v3343
    %v3345 = vlaneseq
    %v3346 = vshrl.u32 %v3345, 7
    %v3347 = vsub.s32 %v3344, %v3346
    %v3348 = vrot.slane %v3340, %v3347
    %v3350 = vunpack.c.l.s4 1966171168
    %v3351 = vunpack.c.0.s8 %v3350
    %v3352 = vlaneseq
    %v3353 = vshrl.u32 %v3352, 7
    %v3354 = vsub.s32 %v3351, %v3353
    %v3355 = vrot.slane %v3341, %v3354
    %v3359 = vunpack.c.l.s4 1966171168
    %v3360 = vunpack.c.0.s8 %v3359
    %v3361 = vlaneseq
    %v3362 = vshrl.u32 %v3361, 7
    %v3363 = vsub.s32 %v3360, %v3362
    %v3364 = vrot.slane %v1701, %v3363
    %v3365 = vcombine.high %v3364, %v3364
    %v3367 = vunpack.c.l.s4 1966171168
    %v3368 = vunpack.c.0.s8 %v3367
    %v3369 = vlaneseq
    %v3370 = vshrl.u32 %v3369, 7
    %v3371 = vsub.s32 %v3368, %v3370
    %v3372 = vrot.slane %v3364, %v3371
    %v3374 = vunpack.c.l.s4 1966171168
    %v3375 = vunpack.c.0.s8 %v3374
    %v3376 = vlaneseq
    %v3377 = vshrl.u32 %v3376, 7
    %v3378 = vsub.s32 %v3375, %v3377
    %v3379 = vrot.slane %v3365, %v3378
    %v3381 = vunpack.c.l.s4 1966171168
    %v3382 = vunpack.c.0.s8 %v3381
    %v3383 = vlaneseq
    %v3384 = vshrl.u32 %v3383, 7
    %v3385 = vsub.s32 %v3382, %v3384
    %v3386 = vrot.slane %v1973, %v3385
    %v3387 = vcombine.high %v3386, %v3386
    %v3389 = vunpack.c.l.s4 1966171168
    %v3390 = vunpack.c.0.s8 %v3389
    %v3391 = vlaneseq
    %v3392 = vshrl.u32 %v3391, 7
    %v3393 = vsub.s32 %v3390, %v3392
    %v3394 = vrot.slane %v3386, %v3393
    %v3396 = vunpack.c.l.s4 1966171168
    %v3397 = vunpack.c.0.s8 %v3396
    %v3398 = vlaneseq
    %v3399 = vshrl.u32 %v3398, 7
    %v3400 = vsub.s32 %v3397, %v3399
    %v3401 = vrot.slane %v3387, %v3400
    %v3403 = vunpack.c.l.s4 1966171168
    %v3404 = vunpack.c.0.s8 %v3403
    %v3405 = vlaneseq
    %v3406 = vshrl.u32 %v3405, 7
    %v3407 = vsub.s32 %v3404, %v3406
    %v3408 = vrot.slane %v2245, %v3407
    %v3409 = vcombine.high %v3408, %v3408
    %v3411 = vunpack.c.l.s4 1966171168
    %v3412 = vunpack.c.0.s8 %v3411
    %v3413 = vlaneseq
    %v3414 = vshrl.u32 %v3413, 7
    %v3415 = vsub.s32 %v3412, %v3414
    %v3416 = vrot.slane %v3408, %v3415
    %v3418 = vunpack.c.l.s4 1966171168
    %v3419 = vunpack.c.0.s8 %v3418
    %v3420 = vlaneseq
    %v3421 = vshrl.u32 %v3420, 7
    %v3422 = vsub.s32 %v3419, %v3421
    %v3423 = vrot.slane %v3409, %v3422
    %v3425 = vunpack.c.l.s4 1966171168
    %v3426 = vunpack.c.0.s8 %v3425
    %v3427 = vlaneseq
    %v3428 = vshrl.u32 %v3427, 7
    %v3429 = vsub.s32 %v3426, %v3428
    %v3430 = vrot.slane %v2517, %v3429
    %v3431 = vcombine.high %v3430, %v3430
    %v3433 = vunpack.c.l.s4 1966171168
    %v3434 = vunpack.c.0.s8 %v3433
    %v3435 = vlaneseq
    %v3436 = vshrl.u32 %v3435, 7
    %v3437 = vsub.s32 %v3434, %v3436
    %v3438 = vrot.slane %v3430, %v3437
    %v3440 = vunpack.c.l.s4 1966171168
    %v3441 = vunpack.c.0.s8 %v3440
    %v3442 = vlaneseq
    %v3443 = vshrl.u32 %v3442, 7
    %v3444 = vsub.s32 %v3441, %v3443
    %v3445 = vrot.slane %v3431, %v3444
    %v3447 = vunpack.c.l.s4 1966171168
    %v3448 = vunpack.c.0.s8 %v3447
    %v3449 = vlaneseq
    %v3450 = vshrl.u32 %v3449, 7
    %v3451 = vsub.s32 %v3448, %v3450
    %v3452 = vrot.slane %v2789, %v3451
    %v3453 = vcombine.high %v3452, %v3452
    %v3455 = vunpack.c.l.s4 1966171168
    %v3456 = vunpack.c.0.s8 %v3455
    %v3457 = vlaneseq
    %v3458 = vshrl.u32 %v3457, 7
    %v3459 = vsub.s32 %v3456, %v3458
    %v3460 = vrot.slane %v3452, %v3459
    %v3462 = vunpack.c.l.s4 1966171168
    %v3463 = vunpack.c.0.s8 %v3462
    %v3464 = vlaneseq
    %v3465 = vshrl.u32 %v3464, 7
    %v3466 = vsub.s32 %v3463, %v3465
    %v3467 = vrot.slane %v3453, %v3466
    %v3469 = vunpack.c.l.s4 1966171168
    %v3470 = vunpack.c.0.s8 %v3469
    %v3471 = vlaneseq
    %v3472 = vshrl.u32 %v3471, 7
    %v3473 = vsub.s32 %v3470, %v3472
    %v3474 = vrot.slane %v3061, %v3473
    %v3475 = vcombine.high %v3474, %v3474
    %v3477 = vunpack.c.l.s4 1966171168
    %v3478 = vunpack.c.0.s8 %v3477
    %v3479 = vlaneseq
    %v3480 = vshrl.u32 %v3479, 7
    %v3481 = vsub.s32 %v3478, %v3480
    %v3482 = vrot.slane %v3474, %v3481
    %v3484 = vunpack.c.l.s4 1966171168
    %v3485 = vunpack.c.0.s8 %v3484
    %v3486 = vlaneseq
    %v3487 = vshrl.u32 %v3486, 7
    %v3488 = vsub.s32 %v3485, %v3487
    %v3489 = vrot.slane %v3475, %v3488
    %v3492 = vunpack.c.l.s4 1966171168
    %v3493 = vunpack.c.0.s8 %v3492
    %v3494 = vlaneseq
    %v3495 = vshrl.u32 %v3494, 7
    %v3496 = vsub.s32 %v3493, %v3495
    %v3497 = vrot.slane %v3333, %v3496
    %v3498 = vcombine.high %v3497, %v3497
    %v3500 = vunpack.c.l.s4 1966171168
    %v3501 = vunpack.c.0.s8 %v3500
    %v3502 = vlaneseq
    %v3503 = vshrl.u32 %v3502, 7
    %v3504 = vsub.s32 %v3501, %v3503
    %v3505 = vrot.slane %v3497, %v3504
    %v3507 = vunpack.c.l.s4 1966171168
    %v3508 = vunpack.c.0.s8 %v3507
    %v3509 = vlaneseq
    %v3510 = vshrl.u32 %v3509, 7
    %v3511 = vsub.s32 %v3508, %v3510
    %v3512 = vrot.slane %v3498, %v3511
    %v3513 = vlaneseq
    %v3514 = vshrl.u32 %v3513, 7
    %v3515 = vsub.s32 0, %v3514
    %v3516 = vrot.slane %v3372, %v3515
    %v3517 = vlaneseq
    %v3518 = vshrl.u32 %v3517, 7
    %v3519 = vsub.s32 0, %v3518
    %v3520 = vrot.slane %v3379, %v3519
    %v3523 = vlaneseq
    %v3524 = vshrl.u32 %v3523, 7
    %v3525 = vsub.s32 0, %v3524
    %v3526 = vrot.slane %v3394, %v3525
    %v3527 = vlaneseq
    %v3528 = vshrl.u32 %v3527, 7
    %v3529 = vsub.s32 0, %v3528
    %v3530 = vrot.slane %v3401, %v3529
    %v3533 = vlaneseq
    %v3534 = vshrl.u32 %v3533, 7
    %v3535 = vsub.s32 0, %v3534
    %v3536 = vrot.slane %v3416, %v3535
    %v3537 = vlaneseq
    %v3538 = vshrl.u32 %v3537, 7
    %v3539 = vsub.s32 0, %v3538
    %v3540 = vrot.slane %v3423, %v3539
    %v3543 = vlaneseq
    %v3544 = vshrl.u32 %v3543, 7
    %v3545 = vsub.s32 0, %v3544
    %v3546 = vrot.slane %v3438, %v3545
    %v3547 = vlaneseq
    %v3548 = vshrl.u32 %v3547, 7
    %v3549 = vsub.s32 0, %v3548
    %v3550 = vrot.slane %v3445, %v3549
    %v3553 = vlaneseq
    %v3554 = vshrl.u32 %v3553, 7
    %v3555 = vsub.s32 0, %v3554
    %v3556 = vrot.slane %v3460, %v3555
    %v3557 = vlaneseq
    %v3558 = vshrl.u32 %v3557, 7
    %v3559 = vsub.s32 0, %v3558
    %v3560 = vrot.slane %v3467, %v3559
    %v3563 = vlaneseq
    %v3564 = vshrl.u32 %v3563, 7
    %v3565 = vsub.s32 0, %v3564
    %v3566 = vrot.slane %v3482, %v3565
    %v3567 = vlaneseq
    %v3568 = vshrl.u32 %v3567, 7
    %v3569 = vsub.s32 0, %v3568
    %v3570 = vrot.slane %v3489, %v3569
    %v3573 = vlaneseq
    %v3574 = vshrl.u32 %v3573, 7
    %v3575 = vsub.s32 0, %v3574
    %v3576 = vrot.slane %v3505, %v3575
    %v3577 = vlaneseq
    %v3578 = vshrl.u32 %v3577, 7
    %v3579 = vsub.s32 0, %v3578
    %v3580 = vrot.slane %v3512, %v3579
    %vm3583 = vcmask 1040384
    %v3584 = vsel %vm3583, %v3348, %v3516
    %v3585 = vsel %vm3583, %v3355, %v3520
    %v3586 = vsel %vm376, %v3584, %v3526
    %v3587 = vsel %vm376, %v3585, %v3530
    %vm3588 = vcmask 1042432
    %v3589 = vsel %vm3588, %v3586, %v3536
    %v3590 = vsel %vm3588, %v3587, %v3540
    %vm3591 = vcmask 1043456
    %v3592 = vsel %vm3591, %v3589, %v3546
    %v3593 = vsel %vm3591, %v3590, %v3550
    %vm3594 = vcmask 1044480
    %v3595 = vsel %vm3594, %v3592, %v3556
    %v3596 = vsel %vm3594, %v3593, %v3560
    %v3597 = vsel %vm170, %v3595, %v3566
    %v3598 = vsel %vm170, %v3596, %v3570
    %vm3599 = vcmask 1046528
    %v3600 = vsel %vm3599, %v3597, %v3576
    %v3601 = vsel %vm3599, %v3598, %v3580
    %v3602 = vld [vmem:[%s59] sm:$0xff]
    %v3603 = vld [vmem:[%s59 + $0x8] sm:$0xff]
    %v3604 = vld [vmem:[%s59 + $0x10] sm:$0xff]
    %v3605 = vld [vmem:[%s59 + $0x18] sm:$0xff]
    %v3606 = vld [vmem:[%s61] sm:$0x1]
    %v3608 = vlaneseq
    %v3609 = vshrl.u32 %v3608, 7
    %v3610 = vsub.s32 0, %v3609
    %v3611 = vrot.slane %v3606, %v3610
    %3615 = vrot.lane.b32.xlu0 %v3600, 32
    %v3616 = vpop.permute.xlu0 %3615
    %3617 = vrot.lane.b32.xlu0 %v3601, 32
    %v3618 = vpop.permute.xlu0 %3617
    %v3619 = vsel %vm256, %v3616, 0
    %v3621 = vsel %vm256, %v3618, 0
    %3623 = vmatprep.subr.mxu0 0.0
    %3624 = vmatpush1.msra.mxu0 %v3602
    %3625 = vmatprep.subr.mxu0 0.0
    %3626 = vmatpush1.msra.mxu0 %v3603
    %3627 = vmatprep.subr.mxu0 0.0
    %3628 = vmatpush1.msra.mxu0 %v3604
    %3629 = vmatprep.subr.mxu0 0.0
    %3630 = vmatpush1.msra.mxu0 %v3605
    %3631 = vmatprep.subr.mxu0 0.0
    %3632 = vmatpush1.msra.mxu0 0.0
    %3633 = vmatprep.subr.mxu0 0.0
    %3634 = vmatpush1.msra.mxu0 0.0
    %3635 = vmatprep.subr.mxu0 0.0
    %3636 = vmatpush1.msra.mxu0 0.0
    %3637 = vmatprep.subr.mxu0 0.0
    %3638 = vmatpush1.msra.mxu0 0.0
    %3639 = vmatprep.subr.mxu0 0.0
    %3640 = vmatpush1.msra.mxu0 0.0
    %3641 = vmatprep.subr.mxu0 0.0
    %3642 = vmatpush1.msra.mxu0 0.0
    %3643 = vmatprep.subr.mxu0 0.0
    %3644 = vmatpush1.msra.mxu0 0.0
    %3645 = vmatprep.subr.mxu0 0.0
    %3646 = vmatpush1.msra.mxu0 0.0
    %3647 = vmatprep.subr.mxu0 0.0
    %3648 = vmatpush1.msra.mxu0 0.0
    %3649 = vmatprep.subr.mxu0 0.0
    %3650 = vmatpush1.msra.mxu0 0.0
    %3651 = vmatprep.subr.mxu0 0.0
    %3652 = vmatpush1.msra.mxu0 0.0
    %3653 = vmatprep.subr.mxu0 0.0
    %3654 = vmatpush1.msra.mxu0 0.0
    %3655 = vmatprep.subr.mxu0 0.0
    %3656 = vmatpush1.msra.mxu0 0.0
    %3657 = vmatprep.subr.mxu0 0.0
    %3658 = vmatpush1.msra.mxu0 0.0
    %3659 = vmatprep.subr.mxu0 0.0
    %3660 = vmatpush1.msra.mxu0 0.0
    %3661 = vmatprep.subr.mxu0 0.0
    %3662 = vmatpush1.msra.mxu0 0.0
    %3663 = vmatprep.subr.mxu0 0.0
    %3664 = vmatpush1.msra.mxu0 0.0
    %3665 = vmatprep.subr.mxu0 0.0
    %3666 = vmatpush1.msra.mxu0 0.0
    %3667 = vmatprep.subr.mxu0 0.0
    %3668 = vmatpush1.msra.mxu0 0.0
    %3669 = vmatprep.subr.mxu0 0.0
    %3670 = vmatpush1.msra.mxu0 0.0
    %3671 = vmatprep.subr.mxu0 0.0
    %3672 = vmatpush1.msra.mxu0 0.0
    %3673 = vmatprep.subr.mxu0 0.0
    %3674 = vmatpush1.msra.mxu0 0.0
    %3675 = vmatprep.subr.mxu0 0.0
    %3676 = vmatpush1.msra.mxu0 0.0
    %3677 = vmatprep.subr.mxu0 0.0
    %3678 = vmatpush1.msra.mxu0 0.0
    %3679 = vmatprep.subr.mxu0 0.0
    %3680 = vmatpush1.msra.mxu0 0.0
    %3681 = vmatprep.subr.mxu0 0.0
    %3682 = vmatpush1.msra.mxu0 0.0
    %3683 = vmatprep.subr.mxu0 0.0
    %3684 = vmatpush1.msra.mxu0 0.0
    %3685 = vmatprep.subr.mxu0 0.0
    %3686 = vmatpush1.msra.mxu0 0.0
    %3687 = vmatprep.mubr.f32.mxu0 0.0
    %3688 = vmatmul.mubr.f32.gmra.mrb[0].mxu0 %v3619
    %v3689 = vpop.f32.mrb[0].mxu0
    %v3690 = vadd.f32 %v3611, %v3689
    %v3691 = vpop.f32.mrb[0].mxu0
    %3692 = vmatprep.mubr.f32.mxu0 0.0
    %3693 = vmatmul.mubr.f32.gmra.mrb[0].mxu0 %v3621
    %v3694 = vpop.f32.mrb[0].mxu0
    %v3695 = vadd.f32 %v3611, %v3694
    %v3696 = vpop.f32.mrb[0].mxu0
    %3697 = vdwg.mxu0
    %v3698 = vmul.f32 %v3690, 0.35355338
    %v3699 = vmul.f32 %v3695, 0.35355338
    %3701 = vrot.lane.b32.xlu0 %v3690, 96
    %v3702 = vpop.permute.xlu0 %3701
    %vm3703 = vcmask 64512
    %v3705 = vsel %vm3703, %v3698, 0
    %v3707 = vsel %vm3703, %v3702, 0
    %3709 = vmatprep.subr.mxu0 0.0
    %3710 = vmatpush1.xpose.msra.mxu0 %v3707
    %3711 = vmatprep.subr.mxu0 0.0
    %3712 = vmatpush1.xpose.msra.mxu0 0.0
    %3713 = vmatprep.subr.mxu0 0.0
    %3714 = vmatpush1.xpose.msra.mxu0 0.0
    %3715 = vmatprep.subr.mxu0 0.0
    %3716 = vmatpush1.xpose.msra.mxu0 0.0
    %3717 = vmatprep.subr.mxu0 0.0
    %3718 = vmatpush1.xpose.msra.mxu0 0.0
    %3719 = vmatprep.subr.mxu0 0.0
    %3720 = vmatpush1.xpose.msra.mxu0 0.0
    %3721 = vmatprep.subr.mxu0 0.0
    %3722 = vmatpush1.xpose.msra.mxu0 0.0
    %3723 = vmatprep.subr.mxu0 0.0
    %3724 = vmatpush1.xpose.msra.mxu0 0.0
    %3725 = vmatprep.subr.mxu0 0.0
    %3726 = vmatpush1.xpose.msra.mxu0 0.0
    %3727 = vmatprep.subr.mxu0 0.0
    %3728 = vmatpush1.xpose.msra.mxu0 0.0
    %3729 = vmatprep.subr.mxu0 0.0
    %3730 = vmatpush1.xpose.msra.mxu0 0.0
    %3731 = vmatprep.subr.mxu0 0.0
    %3732 = vmatpush1.xpose.msra.mxu0 0.0
    %3733 = vmatprep.subr.mxu0 0.0
    %3734 = vmatpush1.xpose.msra.mxu0 0.0
    %3735 = vmatprep.subr.mxu0 0.0
    %3736 = vmatpush1.xpose.msra.mxu0 0.0
    %3737 = vmatprep.subr.mxu0 0.0
    %3738 = vmatpush1.xpose.msra.mxu0 0.0
    %3739 = vmatprep.subr.mxu0 0.0
    %3740 = vmatpush1.xpose.msra.mxu0 0.0
    %3741 = vmatprep.subr.mxu0 0.0
    %3742 = vmatpush1.xpose.msra.mxu0 0.0
    %3743 = vmatprep.subr.mxu0 0.0
    %3744 = vmatpush1.xpose.msra.mxu0 0.0
    %3745 = vmatprep.subr.mxu0 0.0
    %3746 = vmatpush1.xpose.msra.mxu0 0.0
    %3747 = vmatprep.subr.mxu0 0.0
    %3748 = vmatpush1.xpose.msra.mxu0 0.0
    %3749 = vmatprep.subr.mxu0 0.0
    %3750 = vmatpush1.xpose.msra.mxu0 0.0
    %3751 = vmatprep.subr.mxu0 0.0
    %3752 = vmatpush1.xpose.msra.mxu0 0.0
    %3753 = vmatprep.subr.mxu0 0.0
    %3754 = vmatpush1.xpose.msra.mxu0 0.0
    %3755 = vmatprep.subr.mxu0 0.0
    %3756 = vmatpush1.xpose.msra.mxu0 0.0
    %3757 = vmatprep.subr.mxu0 0.0
    %3758 = vmatpush1.xpose.msra.mxu0 0.0
    %3759 = vmatprep.subr.mxu0 0.0
    %3760 = vmatpush1.xpose.msra.mxu0 0.0
    %3761 = vmatprep.subr.mxu0 0.0
    %3762 = vmatpush1.xpose.msra.mxu0 0.0
    %3763 = vmatprep.subr.mxu0 0.0
    %3764 = vmatpush1.xpose.msra.mxu0 0.0
    %3765 = vmatprep.subr.mxu0 0.0
    %3766 = vmatpush1.xpose.msra.mxu0 0.0
    %3767 = vmatprep.subr.mxu0 0.0
    %3768 = vmatpush1.xpose.msra.mxu0 0.0
    %3769 = vmatprep.subr.mxu0 0.0
    %3770 = vmatpush1.xpose.msra.mxu0 0.0
    %3771 = vmatprep.subr.mxu0 0.0
    %3772 = vmatpush1.xpose.msra.mxu0 0.0
    %3773 = vmatprep.mubr.f32.mxu0 0.0
    %3774 = vmatmul.mubr.f32.gmra.mrb[0].mxu0 %v3705
    %v3775 = vpop.f32.mrb[0].mxu0
    %v3776 = vadd.f32 0.0, %v3775
    %v3777 = vpop.f32.mrb[0].mxu0
    %3778 = vdwg.mxu0
    %3780 = vrot.lane.b32.xlu0 %v3695, 96
    %v3781 = vpop.permute.xlu0 %3780
    %v3783 = vsel %vm3703, %v3699, 0
    %v3785 = vsel %vm3703, %v3781, 0
    %3787 = vmatprep.subr.mxu0 0.0
    %3788 = vmatpush1.xpose.msra.mxu0 %v3785
    %3789 = vmatprep.subr.mxu0 0.0
    %3790 = vmatpush1.xpose.msra.mxu0 0.0
    %3791 = vmatprep.subr.mxu0 0.0
    %3792 = vmatpush1.xpose.msra.mxu0 0.0
    %3793 = vmatprep.subr.mxu0 0.0
    %3794 = vmatpush1.xpose.msra.mxu0 0.0
    %3795 = vmatprep.subr.mxu0 0.0
    %3796 = vmatpush1.xpose.msra.mxu0 0.0
    %3797 = vmatprep.subr.mxu0 0.0
    %3798 = vmatpush1.xpose.msra.mxu0 0.0
    %3799 = vmatprep.subr.mxu0 0.0
    %3800 = vmatpush1.xpose.msra.mxu0 0.0
    %3801 = vmatprep.subr.mxu0 0.0
    %3802 = vmatpush1.xpose.msra.mxu0 0.0
    %3803 = vmatprep.subr.mxu0 0.0
    %3804 = vmatpush1.xpose.msra.mxu0 0.0
    %3805 = vmatprep.subr.mxu0 0.0
    %3806 = vmatpush1.xpose.msra.mxu0 0.0
    %3807 = vmatprep.subr.mxu0 0.0
    %3808 = vmatpush1.xpose.msra.mxu0 0.0
    %3809 = vmatprep.subr.mxu0 0.0
    %3810 = vmatpush1.xpose.msra.mxu0 0.0
    %3811 = vmatprep.subr.mxu0 0.0
    %3812 = vmatpush1.xpose.msra.mxu0 0.0
    %3813 = vmatprep.subr.mxu0 0.0
    %3814 = vmatpush1.xpose.msra.mxu0 0.0
    %3815 = vmatprep.subr.mxu0 0.0
    %3816 = vmatpush1.xpose.msra.mxu0 0.0
    %3817 = vmatprep.subr.mxu0 0.0
    %3818 = vmatpush1.xpose.msra.mxu0 0.0
    %3819 = vmatprep.subr.mxu0 0.0
    %3820 = vmatpush1.xpose.msra.mxu0 0.0
    %3821 = vmatprep.subr.mxu0 0.0
    %3822 = vmatpush1.xpose.msra.mxu0 0.0
    %3823 = vmatprep.subr.mxu0 0.0
    %3824 = vmatpush1.xpose.msra.mxu0 0.0
    %3825 = vmatprep.subr.mxu0 0.0
    %3826 = vmatpush1.xpose.msra.mxu0 0.0
    %3827 = vmatprep.subr.mxu0 0.0
    %3828 = vmatpush1.xpose.msra.mxu0 0.0
    %3829 = vmatprep.subr.mxu0 0.0
    %3830 = vmatpush1.xpose.msra.mxu0 0.0
    %3831 = vmatprep.subr.mxu0 0.0
    %3832 = vmatpush1.xpose.msra.mxu0 0.0
    %3833 = vmatprep.subr.mxu0 0.0
    %3834 = vmatpush1.xpose.msra.mxu0 0.0
    %3835 = vmatprep.subr.mxu0 0.0
    %3836 = vmatpush1.xpose.msra.mxu0 0.0
    %3837 = vmatprep.subr.mxu0 0.0
    %3838 = vmatpush1.xpose.msra.mxu0 0.0
    %3839 = vmatprep.subr.mxu0 0.0
    %3840 = vmatpush1.xpose.msra.mxu0 0.0
    %3841 = vmatprep.subr.mxu0 0.0
    %3842 = vmatpush1.xpose.msra.mxu0 0.0
    %3843 = vmatprep.subr.mxu0 0.0
    %3844 = vmatpush1.xpose.msra.mxu0 0.0
    %3845 = vmatprep.subr.mxu0 0.0
    %3846 = vmatpush1.xpose.msra.mxu0 0.0
    %3847 = vmatprep.subr.mxu0 0.0
    %3848 = vmatpush1.xpose.msra.mxu0 0.0
    %3849 = vmatprep.subr.mxu0 0.0
    %3850 = vmatpush1.xpose.msra.mxu0 0.0
    %3851 = vmatprep.mubr.f32.mxu0 0.0
    %3852 = vmatmul.mubr.f32.gmra.mrb[0].mxu0 %v3783
    %v3853 = vpop.f32.mrb[0].mxu0
    %v3854 = vadd.f32 0.0, %v3853
    %v3855 = vpop.f32.mrb[0].mxu0
    %3856 = vdwg.mxu0
    %v3857 = vsel %vm3703, %v3776, -inf
    %3858 = vmax.xlane.f32.xlu0 %v3857
    %v3859 = vpop.xlane.xlu0 %3858
    %v3860 = vsel %vm3703, %v3854, -inf
    %3861 = vmax.xlane.f32.xlu0 %v3860
    %v3862 = vpop.xlane.xlu0 %3861
    %v3863 = vsub.f32 %v3776, %v3859
    %v3864 = vsub.f32 %v3854, %v3862
    %v3865 = vmul.f32 %v3863, 1.442695
    %v3866 = vpow.pop %v3865
    %v3867 = vmul.f32 %v3864, 1.442695
    %v3868 = vpow.pop %v3867
    %v3869 = vsel %vm3703, %v3866, 0.0
    %3870 = vadd.xlane.f32.xlu0 %v3869
    %v3871 = vpop.xlane.xlu0 %3870
    %v3872 = vsel %vm3703, %v3868, 0.0
    %3873 = vadd.xlane.f32.xlu0 %v3872
    %v3874 = vpop.xlane.xlu0 %3873
    %v3875 = vrcp.pop %v3871
    %v3876 = vrcp.pop %v3874
    %v3877 = vmul.f32 %v3866, %v3875
    %v3878 = vmul.f32 %v3868, %v3876
    %3879 = vrot.lane.b32.xlu0 %v3690, 64
    %v3880 = vpop.permute.xlu0 %3879
    %v3883 = vsel %vm3703, %v3877, 0
    %3885 = vmatprep.subr.mxu0 0.0
    %3886 = vmatpush1.msra.mxu0 %v3880
    %3887 = vmatprep.subr.mxu0 0.0
    %3888 = vmatpush1.msra.mxu0 0.0
    %3889 = vmatprep.subr.mxu0 0.0
    %3890 = vmatpush1.msra.mxu0 0.0
    %3891 = vmatprep.subr.mxu0 0.0
    %3892 = vmatpush1.msra.mxu0 0.0
    %3893 = vmatprep.subr.mxu0 0.0
    %3894 = vmatpush1.msra.mxu0 0.0
    %3895 = vmatprep.subr.mxu0 0.0
    %3896 = vmatpush1.msra.mxu0 0.0
    %3897 = vmatprep.subr.mxu0 0.0
    %3898 = vmatpush1.msra.mxu0 0.0
    %3899 = vmatprep.subr.mxu0 0.0
    %3900 = vmatpush1.msra.mxu0 0.0
    %3901 = vmatprep.subr.mxu0 0.0
    %3902 = vmatpush1.msra.mxu0 0.0
    %3903 = vmatprep.subr.mxu0 0.0
    %3904 = vmatpush1.msra.mxu0 0.0
    %3905 = vmatprep.subr.mxu0 0.0
    %3906 = vmatpush1.msra.mxu0 0.0
    %3907 = vmatprep.subr.mxu0 0.0
    %3908 = vmatpush1.msra.mxu0 0.0
    %3909 = vmatprep.subr.mxu0 0.0
    %3910 = vmatpush1.msra.mxu0 0.0
    %3911 = vmatprep.subr.mxu0 0.0
    %3912 = vmatpush1.msra.mxu0 0.0
    %3913 = vmatprep.subr.mxu0 0.0
    %3914 = vmatpush1.msra.mxu0 0.0
    %3915 = vmatprep.subr.mxu0 0.0
    %3916 = vmatpush1.msra.mxu0 0.0
    %3917 = vmatprep.subr.mxu0 0.0
    %3918 = vmatpush1.msra.mxu0 0.0
    %3919 = vmatprep.subr.mxu0 0.0
    %3920 = vmatpush1.msra.mxu0 0.0
    %3921 = vmatprep.subr.mxu0 0.0
    %3922 = vmatpush1.msra.mxu0 0.0
    %3923 = vmatprep.subr.mxu0 0.0
    %3924 = vmatpush1.msra.mxu0 0.0
    %3925 = vmatprep.subr.mxu0 0.0
    %3926 = vmatpush1.msra.mxu0 0.0
    %3927 = vmatprep.subr.mxu0 0.0
    %3928 = vmatpush1.msra.mxu0 0.0
    %3929 = vmatprep.subr.mxu0 0.0
    %3930 = vmatpush1.msra.mxu0 0.0
    %3931 = vmatprep.subr.mxu0 0.0
    %3932 = vmatpush1.msra.mxu0 0.0
    %3933 = vmatprep.subr.mxu0 0.0
    %3934 = vmatpush1.msra.mxu0 0.0
    %3935 = vmatprep.subr.mxu0 0.0
    %3936 = vmatpush1.msra.mxu0 0.0
    %3937 = vmatprep.subr.mxu0 0.0
    %3938 = vmatpush1.msra.mxu0 0.0
    %3939 = vmatprep.subr.mxu0 0.0
    %3940 = vmatpush1.msra.mxu0 0.0
    %3941 = vmatprep.subr.mxu0 0.0
    %3942 = vmatpush1.msra.mxu0 0.0
    %3943 = vmatprep.subr.mxu0 0.0
    %3944 = vmatpush1.msra.mxu0 0.0
    %3945 = vmatprep.subr.mxu0 0.0
    %3946 = vmatpush1.msra.mxu0 0.0
    %3947 = vmatprep.subr.mxu0 0.0
    %3948 = vmatpush1.msra.mxu0 0.0
    %3949 = vmatprep.mubr.f32.mxu0 0.0
    %3950 = vmatmul.mubr.f32.gmra.mrb[0].mxu0 %v3883
    %v3951 = vpop.f32.mrb[0].mxu0
    %v3952 = vadd.f32 0.0, %v3951
    %v3953 = vpop.f32.mrb[0].mxu0
    %3954 = vdwg.mxu0
    %3955 = vrot.lane.b32.xlu0 %v3695, 64
    %v3956 = vpop.permute.xlu0 %3955
    %v3959 = vsel %vm3703, %v3878, 0
    %3961 = vmatprep.subr.mxu0 0.0
    %3962 = vmatpush1.msra.mxu0 %v3956
    %3963 = vmatprep.subr.mxu0 0.0
    %3964 = vmatpush1.msra.mxu0 0.0
    %3965 = vmatprep.subr.mxu0 0.0
    %3966 = vmatpush1.msra.mxu0 0.0
    %3967 = vmatprep.subr.mxu0 0.0
    %3968 = vmatpush1.msra.mxu0 0.0
    %3969 = vmatprep.subr.mxu0 0.0
    %3970 = vmatpush1.msra.mxu0 0.0
    %3971 = vmatprep.subr.mxu0 0.0
    %3972 = vmatpush1.msra.mxu0 0.0
    %3973 = vmatprep.subr.mxu0 0.0
    %3974 = vmatpush1.msra.mxu0 0.0
    %3975 = vmatprep.subr.mxu0 0.0
    %3976 = vmatpush1.msra.mxu0 0.0
    %3977 = vmatprep.subr.mxu0 0.0
    %3978 = vmatpush1.msra.mxu0 0.0
    %3979 = vmatprep.subr.mxu0 0.0
    %3980 = vmatpush1.msra.mxu0 0.0
    %3981 = vmatprep.subr.mxu0 0.0
    %3982 = vmatpush1.msra.mxu0 0.0
    %3983 = vmatprep.subr.mxu0 0.0
    %3984 = vmatpush1.msra.mxu0 0.0
    %3985 = vmatprep.subr.mxu0 0.0
    %3986 = vmatpush1.msra.mxu0 0.0
    %3987 = vmatprep.subr.mxu0 0.0
    %3988 = vmatpush1.msra.mxu0 0.0
    %3989 = vmatprep.subr.mxu0 0.0
    %3990 = vmatpush1.msra.mxu0 0.0
    %3991 = vmatprep.subr.mxu0 0.0
    %3992 = vmatpush1.msra.mxu0 0.0
    %3993 = vmatprep.subr.mxu0 0.0
    %3994 = vmatpush1.msra.mxu0 0.0
    %3995 = vmatprep.subr.mxu0 0.0
    %3996 = vmatpush1.msra.mxu0 0.0
    %3997 = vmatprep.subr.mxu0 0.0
    %3998 = vmatpush1.msra.mxu0 0.0
    %3999 = vmatprep.subr.mxu0 0.0
    %4000 = vmatpush1.msra.mxu0 0.0
    %4001 = vmatprep.subr.mxu0 0.0
    %4002 = vmatpush1.msra.mxu0 0.0
    %4003 = vmatprep.subr.mxu0 0.0
    %4004 = vmatpush1.msra.mxu0 0.0
    %4005 = vmatprep.subr.mxu0 0.0
    %4006 = vmatpush1.msra.mxu0 0.0
    %4007 = vmatprep.subr.mxu0 0.0
    %4008 = vmatpush1.msra.mxu0 0.0
    %4009 = vmatprep.subr.mxu0 0.0
    %4010 = vmatpush1.msra.mxu0 0.0
    %4011 = vmatprep.subr.mxu0 0.0
    %4012 = vmatpush1.msra.mxu0 0.0
    %4013 = vmatprep.subr.mxu0 0.0
    %4014 = vmatpush1.msra.mxu0 0.0
    %4015 = vmatprep.subr.mxu0 0.0
    %4016 = vmatpush1.msra.mxu0 0.0
    %4017 = vmatprep.subr.mxu0 0.0
    %4018 = vmatpush1.msra.mxu0 0.0
    %4019 = vmatprep.subr.mxu0 0.0
    %4020 = vmatpush1.msra.mxu0 0.0
    %4021 = vmatprep.subr.mxu0 0.0
    %4022 = vmatpush1.msra.mxu0 0.0
    %4023 = vmatprep.subr.mxu0 0.0
    %4024 = vmatpush1.msra.mxu0 0.0
    %4025 = vmatprep.mubr.f32.mxu0 0.0
    %4026 = vmatmul.mubr.f32.gmra.mrb[0].mxu0 %v3959
    %v4027 = vpop.f32.mrb[0].mxu0
    %v4028 = vadd.f32 0.0, %v4027
    %v4029 = vpop.f32.mrb[0].mxu0
    %4030 = vdwg.mxu0
    %4031 = vrot.lane.b32.xlu0 %v3698, 120
    %v4032 = vpop.permute.xlu0 %4031
    %4033 = vrot.lane.b32.xlu0 %v3690, 88
    %v4034 = vpop.permute.xlu0 %4033
    %v4035 = vsel %vm3703, %v4032, 0
    %v4037 = vsel %vm3703, %v4034, 0
    %4039 = vmatprep.subr.mxu0 0.0
    %4040 = vmatpush1.xpose.msra.mxu0 %v4037
    %4041 = vmatprep.subr.mxu0 0.0
    %4042 = vmatpush1.xpose.msra.mxu0 0.0
    %4043 = vmatprep.subr.mxu0 0.0
    %4044 = vmatpush1.xpose.msra.mxu0 0.0
    %4045 = vmatprep.subr.mxu0 0.0
    %4046 = vmatpush1.xpose.msra.mxu0 0.0
    %4047 = vmatprep.subr.mxu0 0.0
    %4048 = vmatpush1.xpose.msra.mxu0 0.0
    %4049 = vmatprep.subr.mxu0 0.0
    %4050 = vmatpush1.xpose.msra.mxu0 0.0
    %4051 = vmatprep.subr.mxu0 0.0
    %4052 = vmatpush1.xpose.msra.mxu0 0.0
    %4053 = vmatprep.subr.mxu0 0.0
    %4054 = vmatpush1.xpose.msra.mxu0 0.0
    %4055 = vmatprep.subr.mxu0 0.0
    %4056 = vmatpush1.xpose.msra.mxu0 0.0
    %4057 = vmatprep.subr.mxu0 0.0
    %4058 = vmatpush1.xpose.msra.mxu0 0.0
    %4059 = vmatprep.subr.mxu0 0.0
    %4060 = vmatpush1.xpose.msra.mxu0 0.0
    %4061 = vmatprep.subr.mxu0 0.0
    %4062 = vmatpush1.xpose.msra.mxu0 0.0
    %4063 = vmatprep.subr.mxu0 0.0
    %4064 = vmatpush1.xpose.msra.mxu0 0.0
    %4065 = vmatprep.subr.mxu0 0.0
    %4066 = vmatpush1.xpose.msra.mxu0 0.0
    %4067 = vmatprep.subr.mxu0 0.0
    %4068 = vmatpush1.xpose.msra.mxu0 0.0
    %4069 = vmatprep.subr.mxu0 0.0
    %4070 = vmatpush1.xpose.msra.mxu0 0.0
    %4071 = vmatprep.subr.mxu0 0.0
    %4072 = vmatpush1.xpose.msra.mxu0 0.0
    %4073 = vmatprep.subr.mxu0 0.0
    %4074 = vmatpush1.xpose.msra.mxu0 0.0
    %4075 = vmatprep.subr.mxu0 0.0
    %4076 = vmatpush1.xpose.msra.mxu0 0.0
    %4077 = vmatprep.subr.mxu0 0.0
    %4078 = vmatpush1.xpose.msra.mxu0 0.0
    %4079 = vmatprep.subr.mxu0 0.0
    %4080 = vmatpush1.xpose.msra.mxu0 0.0
    %4081 = vmatprep.subr.mxu0 0.0
    %4082 = vmatpush1.xpose.msra.mxu0 0.0
    %4083 = vmatprep.subr.mxu0 0.0
    %4084 = vmatpush1.xpose.msra.mxu0 0.0
    %4085 = vmatprep.subr.mxu0 0.0
    %4086 = vmatpush1.xpose.msra.mxu0 0.0
    %4087 = vmatprep.subr.mxu0 0.0
    %4088 = vmatpush1.xpose.msra.mxu0 0.0
    %4089 = vmatprep.subr.mxu0 0.0
    %4090 = vmatpush1.xpose.msra.mxu0 0.0
    %4091 = vmatprep.subr.mxu0 0.0
    %4092 = vmatpush1.xpose.msra.mxu0 0.0
    %4093 = vmatprep.subr.mxu0 0.0
    %4094 = vmatpush1.xpose.msra.mxu0 0.0
    %4095 = vmatprep.subr.mxu0 0.0
    %4096 = vmatpush1.xpose.msra.mxu0 0.0
    %4097 = vmatprep.subr.mxu0 0.0
    %4098 = vmatpush1.xpose.msra.mxu0 0.0
    %4099 = vmatprep.subr.mxu0 0.0
    %4100 = vmatpush1.xpose.msra.mxu0 0.0
    %4101 = vmatprep.subr.mxu0 0.0
    %4102 = vmatpush1.xpose.msra.mxu0 0.0
    %4103 = vmatprep.mubr.f32.mxu0 0.0
    %4104 = vmatmul.mubr.f32.gmra.mrb[0].mxu0 %v4035
    %v4105 = vpop.f32.mrb[0].mxu0
    %v4106 = vadd.f32 0.0, %v4105
    %v4107 = vpop.f32.mrb[0].mxu0
    %4108 = vdwg.mxu0
    %4109 = vrot.lane.b32.xlu0 %v3699, 120
    %v4110 = vpop.permute.xlu0 %4109
    %4111 = vrot.lane.b32.xlu0 %v3695, 88
    %v4112 = vpop.permute.xlu0 %4111
    %v4113 = vsel %vm3703, %v4110, 0
    %v4115 = vsel %vm3703, %v4112, 0
    %4117 = vmatprep.subr.mxu0 0.0
    %4118 = vmatpush1.xpose.msra.mxu0 %v4115
    %4119 = vmatprep.subr.mxu0 0.0
    %4120 = vmatpush1.xpose.msra.mxu0 0.0
    %4121 = vmatprep.subr.mxu0 0.0
    %4122 = vmatpush1.xpose.msra.mxu0 0.0
    %4123 = vmatprep.subr.mxu0 0.0
    %4124 = vmatpush1.xpose.msra.mxu0 0.0
    %4125 = vmatprep.subr.mxu0 0.0
    %4126 = vmatpush1.xpose.msra.mxu0 0.0
    %4127 = vmatprep.subr.mxu0 0.0
    %4128 = vmatpush1.xpose.msra.mxu0 0.0
    %4129 = vmatprep.subr.mxu0 0.0
    %4130 = vmatpush1.xpose.msra.mxu0 0.0
    %4131 = vmatprep.subr.mxu0 0.0
    %4132 = vmatpush1.xpose.msra.mxu0 0.0
    %4133 = vmatprep.subr.mxu0 0.0
    %4134 = vmatpush1.xpose.msra.mxu0 0.0
    %4135 = vmatprep.subr.mxu0 0.0
    %4136 = vmatpush1.xpose.msra.mxu0 0.0
    %4137 = vmatprep.subr.mxu0 0.0
    %4138 = vmatpush1.xpose.msra.mxu0 0.0
    %4139 = vmatprep.subr.mxu0 0.0
    %4140 = vmatpush1.xpose.msra.mxu0 0.0
    %4141 = vmatprep.subr.mxu0 0.0
    %4142 = vmatpush1.xpose.msra.mxu0 0.0
    %4143 = vmatprep.subr.mxu0 0.0
    %4144 = vmatpush1.xpose.msra.mxu0 0.0
    %4145 = vmatprep.subr.mxu0 0.0
    %4146 = vmatpush1.xpose.msra.mxu0 0.0
    %4147 = vmatprep.subr.mxu0 0.0
    %4148 = vmatpush1.xpose.msra.mxu0 0.0
    %4149 = vmatprep.subr.mxu0 0.0
    %4150 = vmatpush1.xpose.msra.mxu0 0.0
    %4151 = vmatprep.subr.mxu0 0.0
    %4152 = vmatpush1.xpose.msra.mxu0 0.0
    %4153 = vmatprep.subr.mxu0 0.0
    %4154 = vmatpush1.xpose.msra.mxu0 0.0
    %4155 = vmatprep.subr.mxu0 0.0
    %4156 = vmatpush1.xpose.msra.mxu0 0.0
    %4157 = vmatprep.subr.mxu0 0.0
    %4158 = vmatpush1.xpose.msra.mxu0 0.0
    %4159 = vmatprep.subr.mxu0 0.0
    %4160 = vmatpush1.xpose.msra.mxu0 0.0
    %4161 = vmatprep.subr.mxu0 0.0
    %4162 = vmatpush1.xpose.msra.mxu0 0.0
    %4163 = vmatprep.subr.mxu0 0.0
    %4164 = vmatpush1.xpose.msra.mxu0 0.0
    %4165 = vmatprep.subr.mxu0 0.0
    %4166 = vmatpush1.xpose.msra.mxu0 0.0
    %4167 = vmatprep.subr.mxu0 0.0
    %4168 = vmatpush1.xpose.msra.mxu0 0.0
    %4169 = vmatprep.subr.mxu0 0.0
    %4170 = vmatpush1.xpose.msra.mxu0 0.0
    %4171 = vmatprep.subr.mxu0 0.0
    %4172 = vmatpush1.xpose.msra.mxu0 0.0
    %4173 = vmatprep.subr.mxu0 0.0
    %4174 = vmatpush1.xpose.msra.mxu0 0.0
    %4175 = vmatprep.subr.mxu0 0.0
    %4176 = vmatpush1.xpose.msra.mxu0 0.0
    %4177 = vmatprep.subr.mxu0 0.0
    %4178 = vmatpush1.xpose.msra.mxu0 0.0
    %4179 = vmatprep.subr.mxu0 0.0
    %4180 = vmatpush1.xpose.msra.mxu0 0.0
    %4181 = vmatprep.mubr.f32.mxu0 0.0
    %4182 = vmatmul.mubr.f32.gmra.mrb[0].mxu0 %v4113
    %v4183 = vpop.f32.mrb[0].mxu0
    %v4184 = vadd.f32 0.0, %v4183
    %v4185 = vpop.f32.mrb[0].mxu0
    %4186 = vdwg.mxu0
    %v4187 = vsel %vm3703, %v4106, -inf
    %4188 = vmax.xlane.f32.xlu0 %v4187
    %v4189 = vpop.xlane.xlu0 %4188
    %v4190 = vsel %vm3703, %v4184, -inf
    %4191 = vmax.xlane.f32.xlu0 %v4190
    %v4192 = vpop.xlane.xlu0 %4191
    %v4193 = vsub.f32 %v4106, %v4189
    %v4194 = vsub.f32 %v4184, %v4192
    %v4195 = vmul.f32 %v4193, 1.442695
    %v4196 = vpow.pop %v4195
    %v4197 = vmul.f32 %v4194, 1.442695
    %v4198 = vpow.pop %v4197
    %v4199 = vsel %vm3703, %v4196, 0.0
    %4200 = vadd.xlane.f32.xlu0 %v4199
    %v4201 = vpop.xlane.xlu0 %4200
    %v4202 = vsel %vm3703, %v4198, 0.0
    %4203 = vadd.xlane.f32.xlu0 %v4202
    %v4204 = vpop.xlane.xlu0 %4203
    %v4205 = vrcp.pop %v4201
    %v4206 = vrcp.pop %v4204
    %v4207 = vmul.f32 %v4196, %v4205
    %v4208 = vmul.f32 %v4198, %v4206
    %4209 = vrot.lane.b32.xlu0 %v3690, 56
    %v4210 = vpop.permute.xlu0 %4209
    %v4213 = vsel %vm3703, %v4207, 0
    %4215 = vmatprep.subr.mxu0 0.0
    %4216 = vmatpush1.msra.mxu0 %v4210
    %4217 = vmatprep.subr.mxu0 0.0
    %4218 = vmatpush1.msra.mxu0 0.0
    %4219 = vmatprep.subr.mxu0 0.0
    %4220 = vmatpush1.msra.mxu0 0.0
    %4221 = vmatprep.subr.mxu0 0.0
    %4222 = vmatpush1.msra.mxu0 0.0
    %4223 = vmatprep.subr.mxu0 0.0
    %4224 = vmatpush1.msra.mxu0 0.0
    %4225 = vmatprep.subr.mxu0 0.0
    %4226 = vmatpush1.msra.mxu0 0.0
    %4227 = vmatprep.subr.mxu0 0.0
    %4228 = vmatpush1.msra.mxu0 0.0
    %4229 = vmatprep.subr.mxu0 0.0
    %4230 = vmatpush1.msra.mxu0 0.0
    %4231 = vmatprep.subr.mxu0 0.0
    %4232 = vmatpush1.msra.mxu0 0.0
    %4233 = vmatprep.subr.mxu0 0.0
    %4234 = vmatpush1.msra.mxu0 0.0
    %4235 = vmatprep.subr.mxu0 0.0
    %4236 = vmatpush1.msra.mxu0 0.0
    %4237 = vmatprep.subr.mxu0 0.0
    %4238 = vmatpush1.msra.mxu0 0.0
    %4239 = vmatprep.subr.mxu0 0.0
    %4240 = vmatpush1.msra.mxu0 0.0
    %4241 = vmatprep.subr.mxu0 0.0
    %4242 = vmatpush1.msra.mxu0 0.0
    %4243 = vmatprep.subr.mxu0 0.0
    %4244 = vmatpush1.msra.mxu0 0.0
    %4245 = vmatprep.subr.mxu0 0.0
    %4246 = vmatpush1.msra.mxu0 0.0
    %4247 = vmatprep.subr.mxu0 0.0
    %4248 = vmatpush1.msra.mxu0 0.0
    %4249 = vmatprep.subr.mxu0 0.0
    %4250 = vmatpush1.msra.mxu0 0.0
    %4251 = vmatprep.subr.mxu0 0.0
    %4252 = vmatpush1.msra.mxu0 0.0
    %4253 = vmatprep.subr.mxu0 0.0
    %4254 = vmatpush1.msra.mxu0 0.0
    %4255 = vmatprep.subr.mxu0 0.0
    %4256 = vmatpush1.msra.mxu0 0.0
    %4257 = vmatprep.subr.mxu0 0.0
    %4258 = vmatpush1.msra.mxu0 0.0
    %4259 = vmatprep.subr.mxu0 0.0
    %4260 = vmatpush1.msra.mxu0 0.0
    %4261 = vmatprep.subr.mxu0 0.0
    %4262 = vmatpush1.msra.mxu0 0.0
    %4263 = vmatprep.subr.mxu0 0.0
    %4264 = vmatpush1.msra.mxu0 0.0
    %4265 = vmatprep.subr.mxu0 0.0
    %4266 = vmatpush1.msra.mxu0 0.0
    %4267 = vmatprep.subr.mxu0 0.0
    %4268 = vmatpush1.msra.mxu0 0.0
    %4269 = vmatprep.subr.mxu0 0.0
    %4270 = vmatpush1.msra.mxu0 0.0
    %4271 = vmatprep.subr.mxu0 0.0
    %4272 = vmatpush1.msra.mxu0 0.0
    %4273 = vmatprep.subr.mxu0 0.0
    %4274 = vmatpush1.msra.mxu0 0.0
    %4275 = vmatprep.subr.mxu0 0.0
    %4276 = vmatpush1.msra.mxu0 0.0
    %4277 = vmatprep.subr.mxu0 0.0
    %4278 = vmatpush1.msra.mxu0 0.0
    %4279 = vmatprep.mubr.f32.mxu0 0.0
    %4280 = vmatmul.mubr.f32.gmra.mrb[0].mxu0 %v4213
    %v4281 = vpop.f32.mrb[0].mxu0
    %v4282 = vadd.f32 0.0, %v4281
    %v4283 = vpop.f32.mrb[0].mxu0
    %4284 = vdwg.mxu0
    %4285 = vrot.lane.b32.xlu0 %v3695, 56
    %v4286 = vpop.permute.xlu0 %4285
    %v4289 = vsel %vm3703, %v4208, 0
    %4291 = vmatprep.subr.mxu0 0.0
    %4292 = vmatpush1.msra.mxu0 %v4286
    %4293 = vmatprep.subr.mxu0 0.0
    %4294 = vmatpush1.msra.mxu0 0.0
    %4295 = vmatprep.subr.mxu0 0.0
    %4296 = vmatpush1.msra.mxu0 0.0
    %4297 = vmatprep.subr.mxu0 0.0
    %4298 = vmatpush1.msra.mxu0 0.0
    %4299 = vmatprep.subr.mxu0 0.0
    %4300 = vmatpush1.msra.mxu0 0.0
    %4301 = vmatprep.subr.mxu0 0.0
    %4302 = vmatpush1.msra.mxu0 0.0
    %4303 = vmatprep.subr.mxu0 0.0
    %4304 = vmatpush1.msra.mxu0 0.0
    %4305 = vmatprep.subr.mxu0 0.0
    %4306 = vmatpush1.msra.mxu0 0.0
    %4307 = vmatprep.subr.mxu0 0.0
    %4308 = vmatpush1.msra.mxu0 0.0
    %4309 = vmatprep.subr.mxu0 0.0
    %4310 = vmatpush1.msra.mxu0 0.0
    %4311 = vmatprep.subr.mxu0 0.0
    %4312 = vmatpush1.msra.mxu0 0.0
    %4313 = vmatprep.subr.mxu0 0.0
    %4314 = vmatpush1.msra.mxu0 0.0
    %4315 = vmatprep.subr.mxu0 0.0
    %4316 = vmatpush1.msra.mxu0 0.0
    %4317 = vmatprep.subr.mxu0 0.0
    %4318 = vmatpush1.msra.mxu0 0.0
    %4319 = vmatprep.subr.mxu0 0.0
    %4320 = vmatpush1.msra.mxu0 0.0
    %4321 = vmatprep.subr.mxu0 0.0
    %4322 = vmatpush1.msra.mxu0 0.0
    %4323 = vmatprep.subr.mxu0 0.0
    %4324 = vmatpush1.msra.mxu0 0.0
    %4325 = vmatprep.subr.mxu0 0.0
    %4326 = vmatpush1.msra.mxu0 0.0
    %4327 = vmatprep.subr.mxu0 0.0
    %4328 = vmatpush1.msra.mxu0 0.0
    %4329 = vmatprep.subr.mxu0 0.0
    %4330 = vmatpush1.msra.mxu0 0.0
    %4331 = vmatprep.subr.mxu0 0.0
    %4332 = vmatpush1.msra.mxu0 0.0
    %4333 = vmatprep.subr.mxu0 0.0
    %4334 = vmatpush1.msra.mxu0 0.0
    %4335 = vmatprep.subr.mxu0 0.0
    %4336 = vmatpush1.msra.mxu0 0.0
    %4337 = vmatprep.subr.mxu0 0.0
    %4338 = vmatpush1.msra.mxu0 0.0
    %4339 = vmatprep.subr.mxu0 0.0
    %4340 = vmatpush1.msra.mxu0 0.0
    %4341 = vmatprep.subr.mxu0 0.0
    %4342 = vmatpush1.msra.mxu0 0.0
    %4343 = vmatprep.subr.mxu0 0.0
    %4344 = vmatpush1.msra.mxu0 0.0
    %4345 = vmatprep.subr.mxu0 0.0
    %4346 = vmatpush1.msra.mxu0 0.0
    %4347 = vmatprep.subr.mxu0 0.0
    %4348 = vmatpush1.msra.mxu0 0.0
    %4349 = vmatprep.subr.mxu0 0.0
    %4350 = vmatpush1.msra.mxu0 0.0
    %4351 = vmatprep.subr.mxu0 0.0
    %4352 = vmatpush1.msra.mxu0 0.0
    %4353 = vmatprep.subr.mxu0 0.0
    %4354 = vmatpush1.msra.mxu0 0.0
    %4355 = vmatprep.mubr.f32.mxu0 0.0
    %4356 = vmatmul.mubr.f32.gmra.mrb[0].mxu0 %v4289
    %v4357 = vpop.f32.mrb[0].mxu0
    %v4358 = vadd.f32 0.0, %v4357
    %v4359 = vpop.f32.mrb[0].mxu0
    %4360 = vdwg.mxu0
    %4361 = vrot.lane.b32.xlu0 %v3698, 112
    %v4362 = vpop.permute.xlu0 %4361
    %4363 = vrot.lane.b32.xlu0 %v3690, 80
    %v4364 = vpop.permute.xlu0 %4363
    %v4365 = vsel %vm3703, %v4362, 0
    %v4367 = vsel %vm3703, %v4364, 0
    %4369 = vmatprep.subr.mxu0 0.0
    %4370 = vmatpush1.xpose.msra.mxu0 %v4367
    %4371 = vmatprep.subr.mxu0 0.0
    %4372 = vmatpush1.xpose.msra.mxu0 0.0
    %4373 = vmatprep.subr.mxu0 0.0
    %4374 = vmatpush1.xpose.msra.mxu0 0.0
    %4375 = vmatprep.subr.mxu0 0.0
    %4376 = vmatpush1.xpose.msra.mxu0 0.0
    %4377 = vmatprep.subr.mxu0 0.0
    %4378 = vmatpush1.xpose.msra.mxu0 0.0
    %4379 = vmatprep.subr.mxu0 0.0
    %4380 = vmatpush1.xpose.msra.mxu0 0.0
    %4381 = vmatprep.subr.mxu0 0.0
    %4382 = vmatpush1.xpose.msra.mxu0 0.0
    %4383 = vmatprep.subr.mxu0 0.0
    %4384 = vmatpush1.xpose.msra.mxu0 0.0
    %4385 = vmatprep.subr.mxu0 0.0
    %4386 = vmatpush1.xpose.msra.mxu0 0.0
    %4387 = vmatprep.subr.mxu0 0.0
    %4388 = vmatpush1.xpose.msra.mxu0 0.0
    %4389 = vmatprep.subr.mxu0 0.0
    %4390 = vmatpush1.xpose.msra.mxu0 0.0
    %4391 = vmatprep.subr.mxu0 0.0
    %4392 = vmatpush1.xpose.msra.mxu0 0.0
    %4393 = vmatprep.subr.mxu0 0.0
    %4394 = vmatpush1.xpose.msra.mxu0 0.0
    %4395 = vmatprep.subr.mxu0 0.0
    %4396 = vmatpush1.xpose.msra.mxu0 0.0
    %4397 = vmatprep.subr.mxu0 0.0
    %4398 = vmatpush1.xpose.msra.mxu0 0.0
    %4399 = vmatprep.subr.mxu0 0.0
    %4400 = vmatpush1.xpose.msra.mxu0 0.0
    %4401 = vmatprep.subr.mxu0 0.0
    %4402 = vmatpush1.xpose.msra.mxu0 0.0
    %4403 = vmatprep.subr.mxu0 0.0
    %4404 = vmatpush1.xpose.msra.mxu0 0.0
    %4405 = vmatprep.subr.mxu0 0.0
    %4406 = vmatpush1.xpose.msra.mxu0 0.0
    %4407 = vmatprep.subr.mxu0 0.0
    %4408 = vmatpush1.xpose.msra.mxu0 0.0
    %4409 = vmatprep.subr.mxu0 0.0
    %4410 = vmatpush1.xpose.msra.mxu0 0.0
    %4411 = vmatprep.subr.mxu0 0.0
    %4412 = vmatpush1.xpose.msra.mxu0 0.0
    %4413 = vmatprep.subr.mxu0 0.0
    %4414 = vmatpush1.xpose.msra.mxu0 0.0
    %4415 = vmatprep.subr.mxu0 0.0
    %4416 = vmatpush1.xpose.msra.mxu0 0.0
    %4417 = vmatprep.subr.mxu0 0.0
    %4418 = vmatpush1.xpose.msra.mxu0 0.0
    %4419 = vmatprep.subr.mxu0 0.0
    %4420 = vmatpush1.xpose.msra.mxu0 0.0
    %4421 = vmatprep.subr.mxu0 0.0
    %4422 = vmatpush1.xpose.msra.mxu0 0.0
    %4423 = vmatprep.subr.mxu0 0.0
    %4424 = vmatpush1.xpose.msra.mxu0 0.0
    %4425 = vmatprep.subr.mxu0 0.0
    %4426 = vmatpush1.xpose.msra.mxu0 0.0
    %4427 = vmatprep.subr.mxu0 0.0
    %4428 = vmatpush1.xpose.msra.mxu0 0.0
    %4429 = vmatprep.subr.mxu0 0.0
    %4430 = vmatpush1.xpose.msra.mxu0 0.0
    %4431 = vmatprep.subr.mxu0 0.0
    %4432 = vmatpush1.xpose.msra.mxu0 0.0
    %4433 = vmatprep.mubr.f32.mxu0 0.0
    %4434 = vmatmul.mubr.f32.gmra.mrb[0].mxu0 %v4365
    %v4435 = vpop.f32.mrb[0].mxu0
    %v4436 = vadd.f32 0.0, %v4435
    %v4437 = vpop.f32.mrb[0].mxu0
    %4438 = vdwg.mxu0
    %4439 = vrot.lane.b32.xlu0 %v3699, 112
    %v4440 = vpop.permute.xlu0 %4439
    %4441 = vrot.lane.b32.xlu0 %v3695, 80
    %v4442 = vpop.permute.xlu0 %4441
    %v4443 = vsel %vm3703, %v4440, 0
    %v4445 = vsel %vm3703, %v4442, 0
    %4447 = vmatprep.subr.mxu0 0.0
    %4448 = vmatpush1.xpose.msra.mxu0 %v4445
    %4449 = vmatprep.subr.mxu0 0.0
    %4450 = vmatpush1.xpose.msra.mxu0 0.0
    %4451 = vmatprep.subr.mxu0 0.0
    %4452 = vmatpush1.xpose.msra.mxu0 0.0
    %4453 = vmatprep.subr.mxu0 0.0
    %4454 = vmatpush1.xpose.msra.mxu0 0.0
    %4455 = vmatprep.subr.mxu0 0.0
    %4456 = vmatpush1.xpose.msra.mxu0 0.0
    %4457 = vmatprep.subr.mxu0 0.0
    %4458 = vmatpush1.xpose.msra.mxu0 0.0
    %4459 = vmatprep.subr.mxu0 0.0
    %4460 = vmatpush1.xpose.msra.mxu0 0.0
    %4461 = vmatprep.subr.mxu0 0.0
    %4462 = vmatpush1.xpose.msra.mxu0 0.0
    %4463 = vmatprep.subr.mxu0 0.0
    %4464 = vmatpush1.xpose.msra.mxu0 0.0
    %4465 = vmatprep.subr.mxu0 0.0
    %4466 = vmatpush1.xpose.msra.mxu0 0.0
    %4467 = vmatprep.subr.mxu0 0.0
    %4468 = vmatpush1.xpose.msra.mxu0 0.0
    %4469 = vmatprep.subr.mxu0 0.0
    %4470 = vmatpush1.xpose.msra.mxu0 0.0
    %4471 = vmatprep.subr.mxu0 0.0
    %4472 = vmatpush1.xpose.msra.mxu0 0.0
    %4473 = vmatprep.subr.mxu0 0.0
    %4474 = vmatpush1.xpose.msra.mxu0 0.0
    %4475 = vmatprep.subr.mxu0 0.0
    %4476 = vmatpush1.xpose.msra.mxu0 0.0
    %4477 = vmatprep.subr.mxu0 0.0
    %4478 = vmatpush1.xpose.msra.mxu0 0.0
    %4479 = vmatprep.subr.mxu0 0.0
    %4480 = vmatpush1.xpose.msra.mxu0 0.0
    %4481 = vmatprep.subr.mxu0 0.0
    %4482 = vmatpush1.xpose.msra.mxu0 0.0
    %4483 = vmatprep.subr.mxu0 0.0
    %4484 = vmatpush1.xpose.msra.mxu0 0.0
    %4485 = vmatprep.subr.mxu0 0.0
    %4486 = vmatpush1.xpose.msra.mxu0 0.0
    %4487 = vmatprep.subr.mxu0 0.0
    %4488 = vmatpush1.xpose.msra.mxu0 0.0
    %4489 = vmatprep.subr.mxu0 0.0
    %4490 = vmatpush1.xpose.msra.mxu0 0.0
    %4491 = vmatprep.subr.mxu0 0.0
    %4492 = vmatpush1.xpose.msra.mxu0 0.0
    %4493 = vmatprep.subr.mxu0 0.0
    %4494 = vmatpush1.xpose.msra.mxu0 0.0
    %4495 = vmatprep.subr.mxu0 0.0
    %4496 = vmatpush1.xpose.msra.mxu0 0.0
    %4497 = vmatprep.subr.mxu0 0.0
    %4498 = vmatpush1.xpose.msra.mxu0 0.0
    %4499 = vmatprep.subr.mxu0 0.0
    %4500 = vmatpush1.xpose.msra.mxu0 0.0
    %4501 = vmatprep.subr.mxu0 0.0
    %4502 = vmatpush1.xpose.msra.mxu0 0.0
    %4503 = vmatprep.subr.mxu0 0.0
    %4504 = vmatpush1.xpose.msra.mxu0 0.0
    %4505 = vmatprep.subr.mxu0 0.0
    %4506 = vmatpush1.xpose.msra.mxu0 0.0
    %4507 = vmatprep.subr.mxu0 0.0
    %4508 = vmatpush1.xpose.msra.mxu0 0.0
    %4509 = vmatprep.subr.mxu0 0.0
    %4510 = vmatpush1.xpose.msra.mxu0 0.0
    %4511 = vmatprep.mubr.f32.mxu0 0.0
    %4512 = vmatmul.mubr.f32.gmra.mrb[0].mxu0 %v4443
    %v4513 = vpop.f32.mrb[0].mxu0
    %v4514 = vadd.f32 0.0, %v4513
    %v4515 = vpop.f32.mrb[0].mxu0
    %4516 = vdwg.mxu0
    %v4517 = vsel %vm3703, %v4436, -inf
    %4518 = vmax.xlane.f32.xlu0 %v4517
    %v4519 = vpop.xlane.xlu0 %4518
    %v4520 = vsel %vm3703, %v4514, -inf
    %4521 = vmax.xlane.f32.xlu0 %v4520
    %v4522 = vpop.xlane.xlu0 %4521
    %v4523 = vsub.f32 %v4436, %v4519
    %v4524 = vsub.f32 %v4514, %v4522
    %v4525 = vmul.f32 %v4523, 1.442695
    %v4526 = vpow.pop %v4525
    %v4527 = vmul.f32 %v4524, 1.442695
    %v4528 = vpow.pop %v4527
    %v4529 = vsel %vm3703, %v4526, 0.0
    %4530 = vadd.xlane.f32.xlu0 %v4529
    %v4531 = vpop.xlane.xlu0 %4530
    %v4532 = vsel %vm3703, %v4528, 0.0
    %4533 = vadd.xlane.f32.xlu0 %v4532
    %v4534 = vpop.xlane.xlu0 %4533
    %v4535 = vrcp.pop %v4531
    %v4536 = vrcp.pop %v4534
    %v4537 = vmul.f32 %v4526, %v4535
    %v4538 = vmul.f32 %v4528, %v4536
    %4539 = vrot.lane.b32.xlu0 %v3690, 48
    %v4540 = vpop.permute.xlu0 %4539
    %v4543 = vsel %vm3703, %v4537, 0
    %4545 = vmatprep.subr.mxu0 0.0
    %4546 = vmatpush1.msra.mxu0 %v4540
    %4547 = vmatprep.subr.mxu0 0.0
    %4548 = vmatpush1.msra.mxu0 0.0
    %4549 = vmatprep.subr.mxu0 0.0
    %4550 = vmatpush1.msra.mxu0 0.0
    %4551 = vmatprep.subr.mxu0 0.0
    %4552 = vmatpush1.msra.mxu0 0.0
    %4553 = vmatprep.subr.mxu0 0.0
    %4554 = vmatpush1.msra.mxu0 0.0
    %4555 = vmatprep.subr.mxu0 0.0
    %4556 = vmatpush1.msra.mxu0 0.0
    %4557 = vmatprep.subr.mxu0 0.0
    %4558 = vmatpush1.msra.mxu0 0.0
    %4559 = vmatprep.subr.mxu0 0.0
    %4560 = vmatpush1.msra.mxu0 0.0
    %4561 = vmatprep.subr.mxu0 0.0
    %4562 = vmatpush1.msra.mxu0 0.0
    %4563 = vmatprep.subr.mxu0 0.0
    %4564 = vmatpush1.msra.mxu0 0.0
    %4565 = vmatprep.subr.mxu0 0.0
    %4566 = vmatpush1.msra.mxu0 0.0
    %4567 = vmatprep.subr.mxu0 0.0
    %4568 = vmatpush1.msra.mxu0 0.0
    %4569 = vmatprep.subr.mxu0 0.0
    %4570 = vmatpush1.msra.mxu0 0.0
    %4571 = vmatprep.subr.mxu0 0.0
    %4572 = vmatpush1.msra.mxu0 0.0
    %4573 = vmatprep.subr.mxu0 0.0
    %4574 = vmatpush1.msra.mxu0 0.0
    %4575 = vmatprep.subr.mxu0 0.0
    %4576 = vmatpush1.msra.mxu0 0.0
    %4577 = vmatprep.subr.mxu0 0.0
    %4578 = vmatpush1.msra.mxu0 0.0
    %4579 = vmatprep.subr.mxu0 0.0
    %4580 = vmatpush1.msra.mxu0 0.0
    %4581 = vmatprep.subr.mxu0 0.0
    %4582 = vmatpush1.msra.mxu0 0.0
    %4583 = vmatprep.subr.mxu0 0.0
    %4584 = vmatpush1.msra.mxu0 0.0
    %4585 = vmatprep.subr.mxu0 0.0
    %4586 = vmatpush1.msra.mxu0 0.0
    %4587 = vmatprep.subr.mxu0 0.0
    %4588 = vmatpush1.msra.mxu0 0.0
    %4589 = vmatprep.subr.mxu0 0.0
    %4590 = vmatpush1.msra.mxu0 0.0
    %4591 = vmatprep.subr.mxu0 0.0
    %4592 = vmatpush1.msra.mxu0 0.0
    %4593 = vmatprep.subr.mxu0 0.0
    %4594 = vmatpush1.msra.mxu0 0.0
    %4595 = vmatprep.subr.mxu0 0.0
    %4596 = vmatpush1.msra.mxu0 0.0
    %4597 = vmatprep.subr.mxu0 0.0
    %4598 = vmatpush1.msra.mxu0 0.0
    %4599 = vmatprep.subr.mxu0 0.0
    %4600 = vmatpush1.msra.mxu0 0.0
    %4601 = vmatprep.subr.mxu0 0.0
    %4602 = vmatpush1.msra.mxu0 0.0
    %4603 = vmatprep.subr.mxu0 0.0
    %4604 = vmatpush1.msra.mxu0 0.0
    %4605 = vmatprep.subr.mxu0 0.0
    %4606 = vmatpush1.msra.mxu0 0.0
    %4607 = vmatprep.subr.mxu0 0.0
    %4608 = vmatpush1.msra.mxu0 0.0
    %4609 = vmatprep.mubr.f32.mxu0 0.0
    %4610 = vmatmul.mubr.f32.gmra.mrb[0].mxu0 %v4543
    %v4611 = vpop.f32.mrb[0].mxu0
    %v4612 = vadd.f32 0.0, %v4611
    %v4613 = vpop.f32.mrb[0].mxu0
    %4614 = vdwg.mxu0
    %4615 = vrot.lane.b32.xlu0 %v3695, 48
    %v4616 = vpop.permute.xlu0 %4615
    %v4619 = vsel %vm3703, %v4538, 0
    %4621 = vmatprep.subr.mxu0 0.0
    %4622 = vmatpush1.msra.mxu0 %v4616
    %4623 = vmatprep.subr.mxu0 0.0
    %4624 = vmatpush1.msra.mxu0 0.0
    %4625 = vmatprep.subr.mxu0 0.0
    %4626 = vmatpush1.msra.mxu0 0.0
    %4627 = vmatprep.subr.mxu0 0.0
    %4628 = vmatpush1.msra.mxu0 0.0
    %4629 = vmatprep.subr.mxu0 0.0
    %4630 = vmatpush1.msra.mxu0 0.0
    %4631 = vmatprep.subr.mxu0 0.0
    %4632 = vmatpush1.msra.mxu0 0.0
    %4633 = vmatprep.subr.mxu0 0.0
    %4634 = vmatpush1.msra.mxu0 0.0
    %4635 = vmatprep.subr.mxu0 0.0
    %4636 = vmatpush1.msra.mxu0 0.0
    %4637 = vmatprep.subr.mxu0 0.0
    %4638 = vmatpush1.msra.mxu0 0.0
    %4639 = vmatprep.subr.mxu0 0.0
    %4640 = vmatpush1.msra.mxu0 0.0
    %4641 = vmatprep.subr.mxu0 0.0
    %4642 = vmatpush1.msra.mxu0 0.0
    %4643 = vmatprep.subr.mxu0 0.0
    %4644 = vmatpush1.msra.mxu0 0.0
    %4645 = vmatprep.subr.mxu0 0.0
    %4646 = vmatpush1.msra.mxu0 0.0
    %4647 = vmatprep.subr.mxu0 0.0
    %4648 = vmatpush1.msra.mxu0 0.0
    %4649 = vmatprep.subr.mxu0 0.0
    %4650 = vmatpush1.msra.mxu0 0.0
    %4651 = vmatprep.subr.mxu0 0.0
    %4652 = vmatpush1.msra.mxu0 0.0
    %4653 = vmatprep.subr.mxu0 0.0
    %4654 = vmatpush1.msra.mxu0 0.0
    %4655 = vmatprep.subr.mxu0 0.0
    %4656 = vmatpush1.msra.mxu0 0.0
    %4657 = vmatprep.subr.mxu0 0.0
    %4658 = vmatpush1.msra.mxu0 0.0
    %4659 = vmatprep.subr.mxu0 0.0
    %4660 = vmatpush1.msra.mxu0 0.0
    %4661 = vmatprep.subr.mxu0 0.0
    %4662 = vmatpush1.msra.mxu0 0.0
    %4663 = vmatprep.subr.mxu0 0.0
    %4664 = vmatpush1.msra.mxu0 0.0
    %4665 = vmatprep.subr.mxu0 0.0
    %4666 = vmatpush1.msra.mxu0 0.0
    %4667 = vmatprep.subr.mxu0 0.0
    %4668 = vmatpush1.msra.mxu0 0.0
    %4669 = vmatprep.subr.mxu0 0.0
    %4670 = vmatpush1.msra.mxu0 0.0
    %4671 = vmatprep.subr.mxu0 0.0
    %4672 = vmatpush1.msra.mxu0 0.0
    %4673 = vmatprep.subr.mxu0 0.0
    %4674 = vmatpush1.msra.mxu0 0.0
    %4675 = vmatprep.subr.mxu0 0.0
    %4676 = vmatpush1.msra.mxu0 0.0
    %4677 = vmatprep.subr.mxu0 0.0
    %4678 = vmatpush1.msra.mxu0 0.0
    %4679 = vmatprep.subr.mxu0 0.0
    %4680 = vmatpush1.msra.mxu0 0.0
    %4681 = vmatprep.subr.mxu0 0.0
    %4682 = vmatpush1.msra.mxu0 0.0
    %4683 = vmatprep.subr.mxu0 0.0
    %4684 = vmatpush1.msra.mxu0 0.0
    %4685 = vmatprep.mubr.f32.mxu0 0.0
    %4686 = vmatmul.mubr.f32.gmra.mrb[0].mxu0 %v4619
    %v4687 = vpop.f32.mrb[0].mxu0
    %v4688 = vadd.f32 0.0, %v4687
    %v4689 = vpop.f32.mrb[0].mxu0
    %4690 = vdwg.mxu0
    %4691 = vrot.lane.b32.xlu0 %v3698, 104
    %v4692 = vpop.permute.xlu0 %4691
    %4693 = vrot.lane.b32.xlu0 %v3690, 72
    %v4694 = vpop.permute.xlu0 %4693
    %v4695 = vsel %vm3703, %v4692, 0
    %v4697 = vsel %vm3703, %v4694, 0
    %4699 = vmatprep.subr.mxu0 0.0
    %4700 = vmatpush1.xpose.msra.mxu0 %v4697
    %4701 = vmatprep.subr.mxu0 0.0
    %4702 = vmatpush1.xpose.msra.mxu0 0.0
    %4703 = vmatprep.subr.mxu0 0.0
    %4704 = vmatpush1.xpose.msra.mxu0 0.0
    %4705 = vmatprep.subr.mxu0 0.0
    %4706 = vmatpush1.xpose.msra.mxu0 0.0
    %4707 = vmatprep.subr.mxu0 0.0
    %4708 = vmatpush1.xpose.msra.mxu0 0.0
    %4709 = vmatprep.subr.mxu0 0.0
    %4710 = vmatpush1.xpose.msra.mxu0 0.0
    %4711 = vmatprep.subr.mxu0 0.0
    %4712 = vmatpush1.xpose.msra.mxu0 0.0
    %4713 = vmatprep.subr.mxu0 0.0
    %4714 = vmatpush1.xpose.msra.mxu0 0.0
    %4715 = vmatprep.subr.mxu0 0.0
    %4716 = vmatpush1.xpose.msra.mxu0 0.0
    %4717 = vmatprep.subr.mxu0 0.0
    %4718 = vmatpush1.xpose.msra.mxu0 0.0
    %4719 = vmatprep.subr.mxu0 0.0
    %4720 = vmatpush1.xpose.msra.mxu0 0.0
    %4721 = vmatprep.subr.mxu0 0.0
    %4722 = vmatpush1.xpose.msra.mxu0 0.0
    %4723 = vmatprep.subr.mxu0 0.0
    %4724 = vmatpush1.xpose.msra.mxu0 0.0
    %4725 = vmatprep.subr.mxu0 0.0
    %4726 = vmatpush1.xpose.msra.mxu0 0.0
    %4727 = vmatprep.subr.mxu0 0.0
    %4728 = vmatpush1.xpose.msra.mxu0 0.0
    %4729 = vmatprep.subr.mxu0 0.0
    %4730 = vmatpush1.xpose.msra.mxu0 0.0
    %4731 = vmatprep.subr.mxu0 0.0
    %4732 = vmatpush1.xpose.msra.mxu0 0.0
    %4733 = vmatprep.subr.mxu0 0.0
    %4734 = vmatpush1.xpose.msra.mxu0 0.0
    %4735 = vmatprep.subr.mxu0 0.0
    %4736 = vmatpush1.xpose.msra.mxu0 0.0
    %4737 = vmatprep.subr.mxu0 0.0
    %4738 = vmatpush1.xpose.msra.mxu0 0.0
    %4739 = vmatprep.subr.mxu0 0.0
    %4740 = vmatpush1.xpose.msra.mxu0 0.0
    %4741 = vmatprep.subr.mxu0 0.0
    %4742 = vmatpush1.xpose.msra.mxu0 0.0
    %4743 = vmatprep.subr.mxu0 0.0
    %4744 = vmatpush1.xpose.msra.mxu0 0.0
    %4745 = vmatprep.subr.mxu0 0.0
    %4746 = vmatpush1.xpose.msra.mxu0 0.0
    %4747 = vmatprep.subr.mxu0 0.0
    %4748 = vmatpush1.xpose.msra.mxu0 0.0
    %4749 = vmatprep.subr.mxu0 0.0
    %4750 = vmatpush1.xpose.msra.mxu0 0.0
    %4751 = vmatprep.subr.mxu0 0.0
    %4752 = vmatpush1.xpose.msra.mxu0 0.0
    %4753 = vmatprep.subr.mxu0 0.0
    %4754 = vmatpush1.xpose.msra.mxu0 0.0
    %4755 = vmatprep.subr.mxu0 0.0
    %4756 = vmatpush1.xpose.msra.mxu0 0.0
    %4757 = vmatprep.subr.mxu0 0.0
    %4758 = vmatpush1.xpose.msra.mxu0 0.0
    %4759 = vmatprep.subr.mxu0 0.0
    %4760 = vmatpush1.xpose.msra.mxu0 0.0
    %4761 = vmatprep.subr.mxu0 0.0
    %4762 = vmatpush1.xpose.msra.mxu0 0.0
    %4763 = vmatprep.mubr.f32.mxu0 0.0
    %4764 = vmatmul.mubr.f32.gmra.mrb[0].mxu0 %v4695
    %v4765 = vpop.f32.mrb[0].mxu0
    %v4766 = vadd.f32 0.0, %v4765
    %v4767 = vpop.f32.mrb[0].mxu0
    %4768 = vdwg.mxu0
    %4769 = vrot.lane.b32.xlu0 %v3699, 104
    %v4770 = vpop.permute.xlu0 %4769
    %4771 = vrot.lane.b32.xlu0 %v3695, 72
    %v4772 = vpop.permute.xlu0 %4771
    %v4773 = vsel %vm3703, %v4770, 0
    %v4775 = vsel %vm3703, %v4772, 0
    %4777 = vmatprep.subr.mxu0 0.0
    %4778 = vmatpush1.xpose.msra.mxu0 %v4775
    %4779 = vmatprep.subr.mxu0 0.0
    %4780 = vmatpush1.xpose.msra.mxu0 0.0
    %4781 = vmatprep.subr.mxu0 0.0
    %4782 = vmatpush1.xpose.msra.mxu0 0.0
    %4783 = vmatprep.subr.mxu0 0.0
    %4784 = vmatpush1.xpose.msra.mxu0 0.0
    %4785 = vmatprep.subr.mxu0 0.0
    %4786 = vmatpush1.xpose.msra.mxu0 0.0
    %4787 = vmatprep.subr.mxu0 0.0
    %4788 = vmatpush1.xpose.msra.mxu0 0.0
    %4789 = vmatprep.subr.mxu0 0.0
    %4790 = vmatpush1.xpose.msra.mxu0 0.0
    %4791 = vmatprep.subr.mxu0 0.0
    %4792 = vmatpush1.xpose.msra.mxu0 0.0
    %4793 = vmatprep.subr.mxu0 0.0
    %4794 = vmatpush1.xpose.msra.mxu0 0.0
    %4795 = vmatprep.subr.mxu0 0.0
    %4796 = vmatpush1.xpose.msra.mxu0 0.0
    %4797 = vmatprep.subr.mxu0 0.0
    %4798 = vmatpush1.xpose.msra.mxu0 0.0
    %4799 = vmatprep.subr.mxu0 0.0
    %4800 = vmatpush1.xpose.msra.mxu0 0.0
    %4801 = vmatprep.subr.mxu0 0.0
    %4802 = vmatpush1.xpose.msra.mxu0 0.0
    %4803 = vmatprep.subr.mxu0 0.0
    %4804 = vmatpush1.xpose.msra.mxu0 0.0
    %4805 = vmatprep.subr.mxu0 0.0
    %4806 = vmatpush1.xpose.msra.mxu0 0.0
    %4807 = vmatprep.subr.mxu0 0.0
    %4808 = vmatpush1.xpose.msra.mxu0 0.0
    %4809 = vmatprep.subr.mxu0 0.0
    %4810 = vmatpush1.xpose.msra.mxu0 0.0
    %4811 = vmatprep.subr.mxu0 0.0
    %4812 = vmatpush1.xpose.msra.mxu0 0.0
    %4813 = vmatprep.subr.mxu0 0.0
    %4814 = vmatpush1.xpose.msra.mxu0 0.0
    %4815 = vmatprep.subr.mxu0 0.0
    %4816 = vmatpush1.xpose.msra.mxu0 0.0
    %4817 = vmatprep.subr.mxu0 0.0
    %4818 = vmatpush1.xpose.msra.mxu0 0.0
    %4819 = vmatprep.subr.mxu0 0.0
    %4820 = vmatpush1.xpose.msra.mxu0 0.0
    %4821 = vmatprep.subr.mxu0 0.0
    %4822 = vmatpush1.xpose.msra.mxu0 0.0
    %4823 = vmatprep.subr.mxu0 0.0
    %4824 = vmatpush1.xpose.msra.mxu0 0.0
    %4825 = vmatprep.subr.mxu0 0.0
    %4826 = vmatpush1.xpose.msra.mxu0 0.0
    %4827 = vmatprep.subr.mxu0 0.0
    %4828 = vmatpush1.xpose.msra.mxu0 0.0
    %4829 = vmatprep.subr.mxu0 0.0
    %4830 = vmatpush1.xpose.msra.mxu0 0.0
    %4831 = vmatprep.subr.mxu0 0.0
    %4832 = vmatpush1.xpose.msra.mxu0 0.0
    %4833 = vmatprep.subr.mxu0 0.0
    %4834 = vmatpush1.xpose.msra.mxu0 0.0
    %4835 = vmatprep.subr.mxu0 0.0
    %4836 = vmatpush1.xpose.msra.mxu0 0.0
    %4837 = vmatprep.subr.mxu0 0.0
    %4838 = vmatpush1.xpose.msra.mxu0 0.0
    %4839 = vmatprep.subr.mxu0 0.0
    %4840 = vmatpush1.xpose.msra.mxu0 0.0
    %4841 = vmatprep.mubr.f32.mxu0 0.0
    %4842 = vmatmul.mubr.f32.gmra.mrb[0].mxu0 %v4773
    %v4843 = vpop.f32.mrb[0].mxu0
    %v4844 = vadd.f32 0.0, %v4843
    %v4845 = vpop.f32.mrb[0].mxu0
    %4846 = vdwg.mxu0
    %v4847 = vsel %vm3703, %v4766, -inf
    %4848 = vmax.xlane.f32.xlu0 %v4847
    %v4849 = vpop.xlane.xlu0 %4848
    %v4850 = vsel %vm3703, %v4844, -inf
    %4851 = vmax.xlane.f32.xlu0 %v4850
    %v4852 = vpop.xlane.xlu0 %4851
    %v4853 = vsub.f32 %v4766, %v4849
    %v4854 = vsub.f32 %v4844, %v4852
    %v4855 = vmul.f32 %v4853, 1.442695
    %v4856 = vpow.pop %v4855
    %v4857 = vmul.f32 %v4854, 1.442695
    %v4858 = vpow.pop %v4857
    %v4859 = vsel %vm3703, %v4856, 0.0
    %4860 = vadd.xlane.f32.xlu0 %v4859
    %v4861 = vpop.xlane.xlu0 %4860
    %v4862 = vsel %vm3703, %v4858, 0.0
    %4863 = vadd.xlane.f32.xlu0 %v4862
    %v4864 = vpop.xlane.xlu0 %4863
    %v4865 = vrcp.pop %v4861
    %v4866 = vrcp.pop %v4864
    %v4867 = vmul.f32 %v4856, %v4865
    %v4868 = vmul.f32 %v4858, %v4866
    %4869 = vrot.lane.b32.xlu0 %v3690, 40
    %v4870 = vpop.permute.xlu0 %4869
    %v4873 = vsel %vm3703, %v4867, 0
    %4875 = vmatprep.subr.mxu0 0.0
    %4876 = vmatpush1.msra.mxu0 %v4870
    %4877 = vmatprep.subr.mxu0 0.0
    %4878 = vmatpush1.msra.mxu0 0.0
    %4879 = vmatprep.subr.mxu0 0.0
    %4880 = vmatpush1.msra.mxu0 0.0
    %4881 = vmatprep.subr.mxu0 0.0
    %4882 = vmatpush1.msra.mxu0 0.0
    %4883 = vmatprep.subr.mxu0 0.0
    %4884 = vmatpush1.msra.mxu0 0.0
    %4885 = vmatprep.subr.mxu0 0.0
    %4886 = vmatpush1.msra.mxu0 0.0
    %4887 = vmatprep.subr.mxu0 0.0
    %4888 = vmatpush1.msra.mxu0 0.0
    %4889 = vmatprep.subr.mxu0 0.0
    %4890 = vmatpush1.msra.mxu0 0.0
    %4891 = vmatprep.subr.mxu0 0.0
    %4892 = vmatpush1.msra.mxu0 0.0
    %4893 = vmatprep.subr.mxu0 0.0
    %4894 = vmatpush1.msra.mxu0 0.0
    %4895 = vmatprep.subr.mxu0 0.0
    %4896 = vmatpush1.msra.mxu0 0.0
    %4897 = vmatprep.subr.mxu0 0.0
    %4898 = vmatpush1.msra.mxu0 0.0
    %4899 = vmatprep.subr.mxu0 0.0
    %4900 = vmatpush1.msra.mxu0 0.0
    %4901 = vmatprep.subr.mxu0 0.0
    %4902 = vmatpush1.msra.mxu0 0.0
    %4903 = vmatprep.subr.mxu0 0.0
    %4904 = vmatpush1.msra.mxu0 0.0
    %4905 = vmatprep.subr.mxu0 0.0
    %4906 = vmatpush1.msra.mxu0 0.0
    %4907 = vmatprep.subr.mxu0 0.0
    %4908 = vmatpush1.msra.mxu0 0.0
    %4909 = vmatprep.subr.mxu0 0.0
    %4910 = vmatpush1.msra.mxu0 0.0
    %4911 = vmatprep.subr.mxu0 0.0
    %4912 = vmatpush1.msra.mxu0 0.0
    %4913 = vmatprep.subr.mxu0 0.0
    %4914 = vmatpush1.msra.mxu0 0.0
    %4915 = vmatprep.subr.mxu0 0.0
    %4916 = vmatpush1.msra.mxu0 0.0
    %4917 = vmatprep.subr.mxu0 0.0
    %4918 = vmatpush1.msra.mxu0 0.0
    %4919 = vmatprep.subr.mxu0 0.0
    %4920 = vmatpush1.msra.mxu0 0.0
    %4921 = vmatprep.subr.mxu0 0.0
    %4922 = vmatpush1.msra.mxu0 0.0
    %4923 = vmatprep.subr.mxu0 0.0
    %4924 = vmatpush1.msra.mxu0 0.0
    %4925 = vmatprep.subr.mxu0 0.0
    %4926 = vmatpush1.msra.mxu0 0.0
    %4927 = vmatprep.subr.mxu0 0.0
    %4928 = vmatpush1.msra.mxu0 0.0
    %4929 = vmatprep.subr.mxu0 0.0
    %4930 = vmatpush1.msra.mxu0 0.0
    %4931 = vmatprep.subr.mxu0 0.0
    %4932 = vmatpush1.msra.mxu0 0.0
    %4933 = vmatprep.subr.mxu0 0.0
    %4934 = vmatpush1.msra.mxu0 0.0
    %4935 = vmatprep.subr.mxu0 0.0
    %4936 = vmatpush1.msra.mxu0 0.0
    %4937 = vmatprep.subr.mxu0 0.0
    %4938 = vmatpush1.msra.mxu0 0.0
    %4939 = vmatprep.mubr.f32.mxu0 0.0
    %4940 = vmatmul.mubr.f32.gmra.mrb[0].mxu0 %v4873
    %v4941 = vpop.f32.mrb[0].mxu0
    %v4942 = vadd.f32 0.0, %v4941
    %v4943 = vpop.f32.mrb[0].mxu0
    %4944 = vdwg.mxu0
    %4945 = vrot.lane.b32.xlu0 %v3695, 40
    %v4946 = vpop.permute.xlu0 %4945
    %v4949 = vsel %vm3703, %v4868, 0
    %4951 = vmatprep.subr.mxu0 0.0
    %4952 = vmatpush1.msra.mxu0 %v4946
    %4953 = vmatprep.subr.mxu0 0.0
    %4954 = vmatpush1.msra.mxu0 0.0
    %4955 = vmatprep.subr.mxu0 0.0
    %4956 = vmatpush1.msra.mxu0 0.0
    %4957 = vmatprep.subr.mxu0 0.0
    %4958 = vmatpush1.msra.mxu0 0.0
    %4959 = vmatprep.subr.mxu0 0.0
    %4960 = vmatpush1.msra.mxu0 0.0
    %4961 = vmatprep.subr.mxu0 0.0
    %4962 = vmatpush1.msra.mxu0 0.0
    %4963 = vmatprep.subr.mxu0 0.0
    %4964 = vmatpush1.msra.mxu0 0.0
    %4965 = vmatprep.subr.mxu0 0.0
    %4966 = vmatpush1.msra.mxu0 0.0
    %4967 = vmatprep.subr.mxu0 0.0
    %4968 = vmatpush1.msra.mxu0 0.0
    %4969 = vmatprep.subr.mxu0 0.0
    %4970 = vmatpush1.msra.mxu0 0.0
    %4971 = vmatprep.subr.mxu0 0.0
    %4972 = vmatpush1.msra.mxu0 0.0
    %4973 = vmatprep.subr.mxu0 0.0
    %4974 = vmatpush1.msra.mxu0 0.0
    %4975 = vmatprep.subr.mxu0 0.0
    %4976 = vmatpush1.msra.mxu0 0.0
    %4977 = vmatprep.subr.mxu0 0.0
    %4978 = vmatpush1.msra.mxu0 0.0
    %4979 = vmatprep.subr.mxu0 0.0
    %4980 = vmatpush1.msra.mxu0 0.0
    %4981 = vmatprep.subr.mxu0 0.0
    %4982 = vmatpush1.msra.mxu0 0.0
    %4983 = vmatprep.subr.mxu0 0.0
    %4984 = vmatpush1.msra.mxu0 0.0
    %4985 = vmatprep.subr.mxu0 0.0
    %4986 = vmatpush1.msra.mxu0 0.0
    %4987 = vmatprep.subr.mxu0 0.0
    %4988 = vmatpush1.msra.mxu0 0.0
    %4989 = vmatprep.subr.mxu0 0.0
    %4990 = vmatpush1.msra.mxu0 0.0
    %4991 = vmatprep.subr.mxu0 0.0
    %4992 = vmatpush1.msra.mxu0 0.0
    %4993 = vmatprep.subr.mxu0 0.0
    %4994 = vmatpush1.msra.mxu0 0.0
    %4995 = vmatprep.subr.mxu0 0.0
    %4996 = vmatpush1.msra.mxu0 0.0
    %4997 = vmatprep.subr.mxu0 0.0
    %4998 = vmatpush1.msra.mxu0 0.0
    %4999 = vmatprep.subr.mxu0 0.0
    %5000 = vmatpush1.msra.mxu0 0.0
    %5001 = vmatprep.subr.mxu0 0.0
    %5002 = vmatpush1.msra.mxu0 0.0
    %5003 = vmatprep.subr.mxu0 0.0
    %5004 = vmatpush1.msra.mxu0 0.0
    %5005 = vmatprep.subr.mxu0 0.0
    %5006 = vmatpush1.msra.mxu0 0.0
    %5007 = vmatprep.subr.mxu0 0.0
    %5008 = vmatpush1.msra.mxu0 0.0
    %5009 = vmatprep.subr.mxu0 0.0
    %5010 = vmatpush1.msra.mxu0 0.0
    %5011 = vmatprep.subr.mxu0 0.0
    %5012 = vmatpush1.msra.mxu0 0.0
    %5013 = vmatprep.subr.mxu0 0.0
    %5014 = vmatpush1.msra.mxu0 0.0
    %5015 = vmatprep.mubr.f32.mxu0 0.0
    %5016 = vmatmul.mubr.f32.gmra.mrb[0].mxu0 %v4949
    %v5017 = vpop.f32.mrb[0].mxu0
    %v5018 = vadd.f32 0.0, %v5017
    %v5019 = vpop.f32.mrb[0].mxu0
    %5020 = vdwg.mxu0
    %5023 = vrot.lane.b32.xlu0 %v4282, 8
    %v5024 = vpop.permute.xlu0 %5023
    %5025 = vrot.lane.b32.xlu0 %v4358, 8
    %v5026 = vpop.permute.xlu0 %5025
    %5031 = vrot.lane.b32.xlu0 %v4612, 16
    %v5032 = vpop.permute.xlu0 %5031
    %5033 = vrot.lane.b32.xlu0 %v4688, 16
    %v5034 = vpop.permute.xlu0 %5033
    %5039 = vrot.lane.b32.xlu0 %v4942, 24
    %v5040 = vpop.permute.xlu0 %5039
    %5041 = vrot.lane.b32.xlu0 %v5018, 24
    %v5042 = vpop.permute.xlu0 %5041
    %v5045 = vsel %vm3703, %v3952, %v5024
    %v5046 = vsel %vm3703, %v4028, %v5026
    %vm5047 = vcmask 130048
    %v5048 = vsel %vm5047, %v5045, %v5032
    %v5049 = vsel %vm5047, %v5046, %v5034
    %vm5050 = vcmask 195584
    %v5051 = vsel %vm5050, %v5048, %v5040
    %v5052 = vsel %vm5050, %v5049, %v5042
    %v5053 = vld [vmem:[%s63] sm:$0xff]
    %v5054 = vld [vmem:[%s63 + $0x8] sm:$0xff]
    %v5055 = vld [vmem:[%s63 + $0x10] sm:$0xff]
    %v5056 = vld [vmem:[%s63 + $0x18] sm:$0xff]
    %v5057 = vld [vmem:[%s65] sm:$0x1]
    %v5059 = vlaneseq
    %v5060 = vshrl.u32 %v5059, 7
    %v5061 = vsub.s32 0, %v5060
    %v5062 = vrot.slane %v5057, %v5061
    %v5065 = vsel %vm256, %v5051, 0
    %v5068 = vsel %vm256, %v5052, 0
    %5070 = vmatprep.subr.mxu0 0.0
    %5071 = vmatpush1.msra.mxu0 %v5053
    %5072 = vmatprep.subr.mxu0 0.0
    %5073 = vmatpush1.msra.mxu0 %v5054
    %5074 = vmatprep.subr.mxu0 0.0
    %5075 = vmatpush1.msra.mxu0 %v5055
    %5076 = vmatprep.subr.mxu0 0.0
    %5077 = vmatpush1.msra.mxu0 %v5056
    %5078 = vmatprep.subr.mxu0 0.0
    %5079 = vmatpush1.msra.mxu0 0.0
    %5080 = vmatprep.subr.mxu0 0.0
    %5081 = vmatpush1.msra.mxu0 0.0
    %5082 = vmatprep.subr.mxu0 0.0
    %5083 = vmatpush1.msra.mxu0 0.0
    %5084 = vmatprep.subr.mxu0 0.0
    %5085 = vmatpush1.msra.mxu0 0.0
    %5086 = vmatprep.subr.mxu0 0.0
    %5087 = vmatpush1.msra.mxu0 0.0
    %5088 = vmatprep.subr.mxu0 0.0
    %5089 = vmatpush1.msra.mxu0 0.0
    %5090 = vmatprep.subr.mxu0 0.0
    %5091 = vmatpush1.msra.mxu0 0.0
    %5092 = vmatprep.subr.mxu0 0.0
    %5093 = vmatpush1.msra.mxu0 0.0
    %5094 = vmatprep.subr.mxu0 0.0
    %5095 = vmatpush1.msra.mxu0 0.0
    %5096 = vmatprep.subr.mxu0 0.0
    %5097 = vmatpush1.msra.mxu0 0.0
    %5098 = vmatprep.subr.mxu0 0.0
    %5099 = vmatpush1.msra.mxu0 0.0
    %5100 = vmatprep.subr.mxu0 0.0
    %5101 = vmatpush1.msra.mxu0 0.0
    %5102 = vmatprep.subr.mxu0 0.0
    %5103 = vmatpush1.msra.mxu0 0.0
    %5104 = vmatprep.subr.mxu0 0.0
    %5105 = vmatpush1.msra.mxu0 0.0
    %5106 = vmatprep.subr.mxu0 0.0
    %5107 = vmatpush1.msra.mxu0 0.0
    %5108 = vmatprep.subr.mxu0 0.0
    %5109 = vmatpush1.msra.mxu0 0.0
    %5110 = vmatprep.subr.mxu0 0.0
    %5111 = vmatpush1.msra.mxu0 0.0
    %5112 = vmatprep.subr.mxu0 0.0
    %5113 = vmatpush1.msra.mxu0 0.0
    %5114 = vmatprep.subr.mxu0 0.0
    %5115 = vmatpush1.msra.mxu0 0.0
    %5116 = vmatprep.subr.mxu0 0.0
    %5117 = vmatpush1.msra.mxu0 0.0
    %5118 = vmatprep.subr.mxu0 0.0
    %5119 = vmatpush1.msra.mxu0 0.0
    %5120 = vmatprep.subr.mxu0 0.0
    %5121 = vmatpush1.msra.mxu0 0.0
    %5122 = vmatprep.subr.mxu0 0.0
    %5123 = vmatpush1.msra.mxu0 0.0
    %5124 = vmatprep.subr.mxu0 0.0
    %5125 = vmatpush1.msra.mxu0 0.0
    %5126 = vmatprep.subr.mxu0 0.0
    %5127 = vmatpush1.msra.mxu0 0.0
    %5128 = vmatprep.subr.mxu0 0.0
    %5129 = vmatpush1.msra.mxu0 0.0
    %5130 = vmatprep.subr.mxu0 0.0
    %5131 = vmatpush1.msra.mxu0 0.0
    %5132 = vmatprep.subr.mxu0 0.0
    %5133 = vmatpush1.msra.mxu0 0.0
    %5134 = vmatprep.mubr.f32.mxu0 0.0
    %5135 = vmatmul.mubr.f32.gmra.mrb[0].mxu0 %v5065
    %v5136 = vpop.f32.mrb[0].mxu0
    %v5137 = vadd.f32 %v5062, %v5136
    %v5138 = vpop.f32.mrb[0].mxu0
    %5139 = vmatprep.mubr.f32.mxu0 0.0
    %5140 = vmatmul.mubr.f32.gmra.mrb[0].mxu0 %v5068
    %v5141 = vpop.f32.mrb[0].mxu0
    %v5142 = vadd.f32 %v5062, %v5141
    %v5143 = vpop.f32.mrb[0].mxu0
    %5144 = vdwg.mxu0
    %v5145 = vld [vmem:[%s67] sm:$0xff]
    %v5146 = vld [vmem:[%s67 + $0x8] sm:$0xff]
    %v5147 = vld [vmem:[%s67 + $0x10] sm:$0xff]
    %v5148 = vld [vmem:[%s67 + $0x18] sm:$0xff]
    %v5149 = vld [vmem:[%s69] sm:$0x1]
    %v5151 = vlaneseq
    %v5152 = vshrl.u32 %v5151, 7
    %v5153 = vsub.s32 0, %v5152
    %v5154 = vrot.slane %v5149, %v5153
    %v5157 = vsel %vm256, %v5137, 0
    %v5160 = vsel %vm256, %v5142, 0
    %5162 = vmatprep.subr.mxu0 0.0
    %5163 = vmatpush1.msra.mxu0 %v5145
    %5164 = vmatprep.subr.mxu0 0.0
    %5165 = vmatpush1.msra.mxu0 %v5146
    %5166 = vmatprep.subr.mxu0 0.0
    %5167 = vmatpush1.msra.mxu0 %v5147
    %5168 = vmatprep.subr.mxu0 0.0
    %5169 = vmatpush1.msra.mxu0 %v5148
    %5170 = vmatprep.subr.mxu0 0.0
    %5171 = vmatpush1.msra.mxu0 0.0
    %5172 = vmatprep.subr.mxu0 0.0
    %5173 = vmatpush1.msra.mxu0 0.0
    %5174 = vmatprep.subr.mxu0 0.0
    %5175 = vmatpush1.msra.mxu0 0.0
    %5176 = vmatprep.subr.mxu0 0.0
    %5177 = vmatpush1.msra.mxu0 0.0
    %5178 = vmatprep.subr.mxu0 0.0
    %5179 = vmatpush1.msra.mxu0 0.0
    %5180 = vmatprep.subr.mxu0 0.0
    %5181 = vmatpush1.msra.mxu0 0.0
    %5182 = vmatprep.subr.mxu0 0.0
    %5183 = vmatpush1.msra.mxu0 0.0
    %5184 = vmatprep.subr.mxu0 0.0
    %5185 = vmatpush1.msra.mxu0 0.0
    %5186 = vmatprep.subr.mxu0 0.0
    %5187 = vmatpush1.msra.mxu0 0.0
    %5188 = vmatprep.subr.mxu0 0.0
    %5189 = vmatpush1.msra.mxu0 0.0
    %5190 = vmatprep.subr.mxu0 0.0
    %5191 = vmatpush1.msra.mxu0 0.0
    %5192 = vmatprep.subr.mxu0 0.0
    %5193 = vmatpush1.msra.mxu0 0.0
    %5194 = vmatprep.subr.mxu0 0.0
    %5195 = vmatpush1.msra.mxu0 0.0
    %5196 = vmatprep.subr.mxu0 0.0
    %5197 = vmatpush1.msra.mxu0 0.0
    %5198 = vmatprep.subr.mxu0 0.0
    %5199 = vmatpush1.msra.mxu0 0.0
    %5200 = vmatprep.subr.mxu0 0.0
    %5201 = vmatpush1.msra.mxu0 0.0
    %5202 = vmatprep.subr.mxu0 0.0
    %5203 = vmatpush1.msra.mxu0 0.0
    %5204 = vmatprep.subr.mxu0 0.0
    %5205 = vmatpush1.msra.mxu0 0.0
    %5206 = vmatprep.subr.mxu0 0.0
    %5207 = vmatpush1.msra.mxu0 0.0
    %5208 = vmatprep.subr.mxu0 0.0
    %5209 = vmatpush1.msra.mxu0 0.0
    %5210 = vmatprep.subr.mxu0 0.0
    %5211 = vmatpush1.msra.mxu0 0.0
    %5212 = vmatprep.subr.mxu0 0.0
    %5213 = vmatpush1.msra.mxu0 0.0
    %5214 = vmatprep.subr.mxu0 0.0
    %5215 = vmatpush1.msra.mxu0 0.0
    %5216 = vmatprep.subr.mxu0 0.0
    %5217 = vmatpush1.msra.mxu0 0.0
    %5218 = vmatprep.subr.mxu0 0.0
    %5219 = vmatpush1.msra.mxu0 0.0
    %5220 = vmatprep.subr.mxu0 0.0
    %5221 = vmatpush1.msra.mxu0 0.0
    %5222 = vmatprep.subr.mxu0 0.0
    %5223 = vmatpush1.msra.mxu0 0.0
    %5224 = vmatprep.subr.mxu0 0.0
    %5225 = vmatpush1.msra.mxu0 0.0
    %5226 = vmatprep.mubr.f32.mxu0 0.0
    %5227 = vmatmul.mubr.f32.gmra.mrb[0].mxu0 %v5157
    %v5228 = vpop.f32.mrb[0].mxu0
    %v5229 = vadd.f32 %v5154, %v5228
    %v5230 = vpop.f32.mrb[0].mxu0
    %5231 = vmatprep.mubr.f32.mxu0 0.0
    %5232 = vmatmul.mubr.f32.gmra.mrb[0].mxu0 %v5160
    %v5233 = vpop.f32.mrb[0].mxu0
    %v5234 = vadd.f32 %v5154, %v5233
    %v5235 = vpop.f32.mrb[0].mxu0
    %5236 = vdwg.mxu0
    %v5237 = vmax.f32 %v5229, 0.0
    %v5238 = vmax.f32 %v5234, 0.0
    %v5239 = vld [vmem:[%s71] sm:$0x1]
    %v5241 = vlaneseq
    %v5242 = vshrl.u32 %v5241, 7
    %v5243 = vsub.s32 0, %v5242
    %v5244 = vrot.slane %v5239, %v5243
    %v5246 = vmul.f32 %v5237, %v5244
    %v5247 = vmul.f32 %v5238, %v5244
    %v5248 = vsel %vm5047, %v5246, 0.0
    %5249 = vadd.xlane.f32.xlu0 %v5248
    %v5250 = vpop.xlane.xlu0 %5249
    %v5251 = vsel %vm5047, %v5247, 0.0
    %5252 = vadd.xlane.f32.xlu0 %v5251
    %v5253 = vpop.xlane.xlu0 %5252
    %v5254 = vld [vmem:[#allocation2] sm:$0x1]
    %v5256 = vlaneseq
    %v5257 = vshrl.u32 %v5256, 7
    %v5258 = vsub.s32 0, %v5257
    %v5259 = vrot.slane %v5254, %v5258
    %5260 = vset.pattern.permute.xlu0 0
    %5261 = vperm.xlu0 %5260, %v5259
    %v5262 = vpop.permute.xlu0 %5261
    %v5264 = vadd.f32 %v5250, %v5262
    %v5265 = vadd.f32 %v5253, %v5262
    %v5268 = vlaneseq
    %v5269 = vshrl.u32 %v5268, 7
    %v5270 = vsub.s32 %v1150, %v5269
    %v5271 = vrot.slane %v5264, %v5270
    %v5272 = vlaneseq
    %v5273 = vshrl.u32 %v5272, 7
    %v5274 = vsub.s32 %v1150, %v5273
    %v5275 = vrot.slane %v5265, %v5274
    %vm5276 = vcmask 1041409
    %v5277 = vsel %vm5276, %v5275, %v5271
    %vm5279 = vcmask 58368
    %5280 = vst.msk [vmem:[#allocation3] sm:$0x3] %vm5279, %v5277
    // Predicated region
    $region150: #{tpu_custom_call.1} parent=1 // pred_check
      _
    $region151: #{tpu_custom_call.1} parent=1 // pred_check_branch
      %5282 = sbr.rel (0) target = $region153
    $region152: #{tpu_custom_call.1} parent=1 // pred_region
      %s5284 = ssub.s32 32, 32
      %5285 = vsyncadd [#allocation4], %s5284
      %s5287 = sshll.u32 [#allocation3], 4
      %s5288 = int_to_ptr.vmem [resolvable:$true] %s5287
      %5290 = dma.vmem_to_hbm [thread:$0]  %s5288, 32, %s75, [#allocation4]
    $region153: #{tpu_custom_call.1} parent=1 // pred_fallthru
      _
    // Predicated region
    $region154: #{tpu_custom_call.1} parent=1 // pred_check
      _
    $region155: #{tpu_custom_call.1} parent=1 // pred_check_branch
      %5292 = sbr.rel (0) target = $region157
    $region156: #{tpu_custom_call.1} parent=1 // pred_region
      %5293 = dma.done [#allocation4], 32
    $region157: #{tpu_custom_call.1} parent=1 // pred_fallthru
      _
    %5294 = vsyncpa [#allocation4], 1

</llo_original>
